<compile_context>
chip_gen: v7x
topology: tpu7x:2x2x1
jax: 0.10.0
libtpu: 0.0.40
codegen_flags: <defaults>
</compile_context>

<pallas_src>
import functools

import jax
import jax.numpy as jnp
from jax import lax
from jax.experimental import pallas as pl
from jax.experimental.pallas import tpu as pltpu


# --------------------------------------------------------------------------- #
# Kernel                                                                      #
# --------------------------------------------------------------------------- #
def _lstm_block_kernel(x_ref, gamma_ref, beta_ref, wcat_ref, whh_ref, bcat_ref,
                       h0_ref, c0_ref,
                       out_ref, hn_ref, cn_ref,
                       *scratch,
                       gating, residual, layer_norm, d_real,
                       seq_len, seq_padded, unroll, eps=1e-5):
    it = iter(scratch)
    xg_sc = next(it)                                  # [TS, Bt, 4*Dp] f32
    gate_sc = next(it) if gating else None            # [TS, Bt, Dp]   f32
    res_sc = next(it)                                 # [TS, Bt, Dp]   f32 (staging + residual)
    out_sc = next(it)                                 # [TS, Bt, Dp]   f32
    h_sc = next(it)                                   # [Bt, Dp]       f32
    c_sc = next(it)                                   # [Bt, Dp]       f32

    Bt, TS, Dp = x_ref.shape
    G = 4 * Dp

    # ---- initialize recurrent state at the start of each batch tile's sweep ----
    @pl.when(pl.program_id(1) == 0)
    def _():
        h_sc[...] = h0_ref[...].astype(jnp.float32)
        c_sc[...] = c0_ref[...].astype(jnp.float32)

    # ---- LayerNorm over the real d_model (padded lanes of x are exactly 0) ----
    x = x_ref[...].astype(jnp.float32)                # [Bt, TS, Dp]
    if layer_norm:
        inv_d = 1.0 / d_real
        mean = jnp.sum(x, axis=-1, keepdims=True) * inv_d
        xc = x - mean
        if Dp > d_real:
            # Mask padded lanes so they do not pollute the variance.
            lane = lax.broadcasted_iota(jnp.int32, (1, 1, Dp), 2)
            xc = jnp.where(lane < d_real, xc, 0.0)
        var = jnp.sum(xc * xc, axis=-1, keepdims=True) * inv_d
        res = xc * lax.rsqrt(var + eps) * gamma_ref[...][None] + beta_ref[...][None]
    else:
        res = x   # matches the PyTorch module: residual adds raw x when layer_norm=False

    # ---- Re-layout chunk (Bt, TS, Dp) -> (TS, Bt, Dp) once in VMEM ----------
    # Static per-batch-row copies (Bt is small); keeps every recurrence step a
    # dense leading-axis slice.  Off the serial critical path.
    for b in range(Bt):
        res_sc[:, b, :] = res[b]

    # ---- ONE fused MXU matmul: [TS*Bt, Dp] x [Dp, 4Dp(+Dp)] -----------------
    lhs = res_sc[...].reshape(TS * Bt, Dp).astype(wcat_ref.dtype)
    proj = jnp.dot(lhs, wcat_ref[...],
                   preferred_element_type=jnp.float32) + bcat_ref[...]
    xg_sc[...] = proj[:, :G].reshape(TS, Bt, G)
    if gating:
        lin = proj[:, G:]
        gate_sc[...] = (lin * jax.nn.sigmoid(lin)).reshape(TS, Bt, Dp)   # SiLU

    # ---- Sequential LSTM recurrence over the chunk's timesteps --------------
    base_t = pl.program_id(1) * TS

    def step(t, carry):
        h = h_sc[...]
        c = c_sc[...]
        gates = xg_sc[t] + jnp.dot(h.astype(whh_ref.dtype), whh_ref[...],
                                   preferred_element_type=jnp.float32)
        i = jax.nn.sigmoid(gates[:, 0 * Dp:1 * Dp])
        f = jax.nn.sigmoid(gates[:, 1 * Dp:2 * Dp])
        g = jnp.tanh(gates[:, 2 * Dp:3 * Dp])
        o = jax.nn.sigmoid(gates[:, 3 * Dp:4 * Dp])
        c_new = f * c + i * g
        h_new = o * jnp.tanh(c_new)
        if seq_padded:
            # Padded tail timesteps: keep the state unchanged so h_n/c_n stay exact.
            valid = (base_t + t) < seq_len
            c_new = jnp.where(valid, c_new, c)
            h_new = jnp.where(valid, h_new, h)
        c_sc[...] = c_new
        h_sc[...] = h_new

        # Fused SiLU gating + residual, written time-major to VMEM scratch.
        out_t = h_new
        if gating:
            out_t = out_t * gate_sc[t]
        if residual:
            out_t = out_t + res_sc[t]
        out_sc[t] = out_t
        return carry

    lax.fori_loop(0, TS, step, 0, unroll=unroll)

    # ---- Write the chunk back batch-first (lane-dense HBM stores) -----------
    for b in range(Bt):
        out_ref[b] = out_sc[:, b, :].astype(out_ref.dtype)

    hn_ref[...] = h_sc[...].astype(hn_ref.dtype)
    cn_ref[...] = c_sc[...].astype(cn_ref.dtype)


# --------------------------------------------------------------------------- #
# Sizing helpers                                                              #
# --------------------------------------------------------------------------- #
def _vmem_cap_bytes():
    """Physical VMEM minus compiler headroom (128 MiB on v5e/v6e, 64 MiB on v7x)."""
    try:
        cap = int(pltpu.get_tpu_info().vmem_capacity_bytes)
    except Exception:
        cap = 64 << 20
    return max(int(cap * 0.85), 32 << 20)


def _vmem_estimate(Bt, TS, Dp, NG, x_bytes, w_bytes, whh_bytes, gating):
    """Resident VMEM bytes: 2x buffers for EVERY pipelined operand + scratch."""
    blk = Bt * TS * Dp
    pipelined = 2 * (blk * x_bytes                  # x chunk
                     + blk * x_bytes                # out chunk
                     + Dp * NG * w_bytes            # fused projection weight
                     + Dp * 4 * Dp * whh_bytes      # recurrent weight
                     + (2 * Dp + NG) * 4            # gamma, beta, fused bias
                     + 4 * Bt * Dp * 4)             # h0, c0, h_n, c_n
    n_btd = 2 + (1 if gating else 0)                # res, out (+ gate) scratch
    scratch = (TS * Bt * 4 * Dp + n_btd * TS * Bt * Dp + 2 * Bt * Dp) * 4
    return pipelined + scratch


def _pick_time_chunk(S, target=64):
    """Sequence chunk: multiple of 8 (f32 sublane tile) <= target with <=~12%
    padding of S, or a single chunk covering the whole sequence."""
    if S <= target:
        return S, S
    budget = max(8, S // 8)
    for ts in range(min(target, S) // 8 * 8, 7, -8):
        pad = -(-S // ts) * ts - S
        if pad <= budget:
            return ts, S + pad
    return 8, -(-S // 8) * 8


# --------------------------------------------------------------------------- #
# Wrapper                                                                     #
# --------------------------------------------------------------------------- #
def lstm_block_forward(x, params, state=None, *,
                       gating=True, residual=True, layer_norm=True,
                       matmul_dtype=jnp.bfloat16, whh_dtype=None,
                       time_chunk=None, batch_tiles=None):
    """x: [batch, seq, d_model]. Returns (out, (h_n, c_n)) like the PyTorch module."""
    B, S, D = x.shape
    whh_dtype = matmul_dtype if whh_dtype is None else whh_dtype

    if state is None:
        h0 = jnp.zeros((B, D), jnp.float32)
        c0 = jnp.zeros((B, D), jnp.float32)
    else:
        # Keep initial state in f32 (no silent precision drop for bf16 inputs).
        h0 = state[0].reshape(B, D).astype(jnp.float32)
        c0 = state[1].reshape(B, D).astype(jnp.float32)

    # ---- pad d_model to a lane multiple (dense vregs, unmasked gate slices) ----
    Dp = ((D + 127) // 128) * 128
    pad_d = Dp - D

    # ---- batch tiling / sublane padding ----
    if batch_tiles is None:
        batch_tiles = 2 if B >= 16 else 1     # feeds v7x's 2 TCs; harmless on v5e/v6e
    bmult = 8 * batch_tiles
    B_pad = ((B + bmult - 1) // bmult) * bmult
    pad_b = B_pad - B
    Bt = B_pad // batch_tiles

    # ---- sequence chunking (pad S + mask states when divisors are poor) ----
    if time_chunk is None:
        TS, S_pad = _pick_time_chunk(S)
    else:
        TS = int(time_chunk)
        S_pad = -(-S // TS) * TS

    NG = (5 if gating else 4) * Dp
    x_bytes = jnp.dtype(x.dtype).itemsize
    w_bytes = jnp.dtype(matmul_dtype).itemsize
    whh_bytes = jnp.dtype(whh_dtype).itemsize
    cap = _vmem_cap_bytes()
    if time_chunk is None:
        while TS > 8 and _vmem_estimate(Bt, TS, Dp, NG, x_bytes, w_bytes,
                                        whh_bytes, gating) > int(0.8 * cap):
            TS = max(8, (TS // 2) // 8 * 8)
            S_pad = -(-S // TS) * TS
    num_chunks = S_pad // TS
    assert TS % 8 == 0 or num_chunks == 1, (
        "time_chunk must be a multiple of 8 or cover the whole sequence")
    seq_padded = S_pad != S
    pad_s = S_pad - S

    # ---- pad activations / initial state (all pads are exact zeros) ----
    if pad_b or pad_s or pad_d:
        x_p = jnp.pad(x, ((0, pad_b), (0, pad_s), (0, pad_d)))
    else:
        x_p = x
    h0_p = jnp.pad(h0, ((0, pad_b), (0, pad_d))) if (pad_b or pad_d) else h0
    c0_p = jnp.pad(c0, ((0, pad_b), (0, pad_d))) if (pad_b or pad_d) else c0

    # ---- parameters, padded per-gate so gate slices stay at Dp boundaries ----
    def _pad_gate_w(w_t):                                    # [D, 4D] -> [Dp, 4Dp]
        w = w_t.reshape(D, 4, D)
        w = jnp.pad(w, ((0, pad_d), (0, 0), (0, pad_d)))
        return w.reshape(Dp, 4 * Dp)

    def _pad_gate_b(b):                                      # [4D] -> [4Dp]
        return jnp.pad(b.reshape(4, D), ((0, 0), (0, pad_d))).reshape(4 * Dp)

    gamma2 = jnp.pad(params["gamma"].astype(jnp.float32), (0, pad_d))[None, :]
    beta2 = jnp.pad(params["beta"].astype(jnp.float32), (0, pad_d))[None, :]

    w_ih_t = _pad_gate_w(params["w_ih"].T)                   # [Dp, 4Dp]
    b_lstm = _pad_gate_b(params["b_ih"] + params["b_hh"])    # [4Dp]
    whh_t = _pad_gate_w(params["w_hh"].T).astype(whh_dtype)  # [Dp, 4Dp]

    if gating:
        w_lin_t = jnp.pad(params["w_lin"].T, ((0, pad_d), (0, pad_d)))   # [Dp, Dp]
        b_lin = jnp.pad(params["b_lin"], (0, pad_d))
        w_cat = jnp.concatenate([w_ih_t, w_lin_t], axis=1)               # [Dp, 5Dp]
        b_cat = jnp.concatenate([b_lstm, b_lin])[None, :]
    else:
        w_cat = w_ih_t
        b_cat = b_lstm[None, :]
    w_cat = w_cat.astype(matmul_dtype)
    b_cat = b_cat.astype(jnp.float32)

    # ---- recurrence unroll bounded by the 64 x 4 KiB vreg file ----
    gate_bytes = Bt * 4 * Dp * 4
    unroll = int(min(TS, max(1, min(8, (64 * 4096) // gate_bytes))))

    kernel = functools.partial(
        _lstm_block_kernel, gating=gating, residual=residual,
        layer_norm=layer_norm, d_real=D, seq_len=S, seq_padded=seq_padded,
        unroll=unroll)

    grid_spec = pltpu.PrefetchScalarGridSpec(
        num_scalar_prefetch=0,
        grid=(batch_tiles, num_chunks),
        in_specs=[
            pl.BlockSpec((Bt, TS, Dp), lambda b, s: (b, s, 0)),   # x (batch-first)
            pl.BlockSpec((1, Dp), lambda b, s: (0, 0)),           # gamma
            pl.BlockSpec((1, Dp), lambda b, s: (0, 0)),           # beta
            pl.BlockSpec((Dp, NG), lambda b, s: (0, 0)),          # fused weights
            pl.BlockSpec((Dp, 4 * Dp), lambda b, s: (0, 0)),      # w_hh^T
            pl.BlockSpec((1, NG), lambda b, s: (0, 0)),           # fused bias
            pl.BlockSpec((Bt, Dp), lambda b, s: (b, 0)),          # h0
            pl.BlockSpec((Bt, Dp), lambda b, s: (b, 0)),          # c0
        ],
        out_specs=(
            pl.BlockSpec((Bt, TS, Dp), lambda b, s: (b, s, 0)),   # out (batch-first)
            pl.BlockSpec((Bt, Dp), lambda b, s: (b, 0)),          # h_n
            pl.BlockSpec((Bt, Dp), lambda b, s: (b, 0)),          # c_n
        ),
        scratch_shapes=(
            [pltpu.VMEM((TS, Bt, 4 * Dp), jnp.float32)]            # x->gate contributions
            + ([pltpu.VMEM((TS, Bt, Dp), jnp.float32)] if gating else [])   # SiLU gate
            + [pltpu.VMEM((TS, Bt, Dp), jnp.float32),              # LN residual / staging
               pltpu.VMEM((TS, Bt, Dp), jnp.float32),              # out (time-major)
               pltpu.VMEM((Bt, Dp), jnp.float32),                  # h state
               pltpu.VMEM((Bt, Dp), jnp.float32)]                  # c state
        ),
    )

    est = _vmem_estimate(Bt, TS, Dp, NG, x_bytes, w_bytes, whh_bytes, gating)
    vmem_limit = int(min(cap, max(32 << 20, int(est * 1.15) + (2 << 20))))

    out_full, h_n, c_n = pl.pallas_call(
        kernel,
        out_shape=(jax.ShapeDtypeStruct((B_pad, S_pad, Dp), x.dtype),
                   jax.ShapeDtypeStruct((B_pad, Dp), jnp.float32),
                   jax.ShapeDtypeStruct((B_pad, Dp), jnp.float32)),
        grid_spec=grid_spec,
        compiler_params=pltpu.CompilerParams(
            dimension_semantics=("parallel", "arbitrary"),
            vmem_limit_bytes=vmem_limit,
        ),
    )(x_p, gamma2, beta2, w_cat, whh_t, b_cat, h0_p, c0_p)

    out = out_full[:B, :S, :D]
    h_n = h_n[:B, :D].astype(x.dtype)[None]
    c_n = c_n[:B, :D].astype(x.dtype)[None]
    return out, (h_n, c_n)


# --------------------------------------------------------------------------- #
# Synthetic params + pure-JAX reference                                       #
# --------------------------------------------------------------------------- #
def init_params(key, d_model):
    """Deterministic synthetic params with the same shapes as the PyTorch module."""
    k = 1.0 / jnp.sqrt(jnp.float32(d_model))
    ks = jax.random.split(key, 6)
    return dict(
        gamma=jnp.ones((d_model,), jnp.float32),
        beta=jnp.zeros((d_model,), jnp.float32),
        w_ih=jax.random.uniform(ks[0], (4 * d_model, d_model), jnp.float32, -k, k),
        w_hh=jax.random.uniform(ks[1], (4 * d_model, d_model), jnp.float32, -k, k),
        b_ih=jax.random.uniform(ks[2], (4 * d_model,), jnp.float32, -k, k),
        b_hh=jax.random.uniform(ks[3], (4 * d_model,), jnp.float32, -k, k),
        w_lin=jax.random.uniform(ks[4], (d_model, d_model), jnp.float32, -k, k),
        b_lin=jax.random.uniform(ks[5], (d_model,), jnp.float32, -k, k),
    )


def ref_forward(x, p, state=None):
    """Pure-JAX reference matching torch semantics (for validation)."""
    B, S, D = x.shape
    mean = jnp.mean(x, -1, keepdims=True)
    var = jnp.mean((x - mean) ** 2, -1, keepdims=True)
    res = (x - mean) / jnp.sqrt(var + 1e-5) * p["gamma"] + p["beta"]

    if state is None:
        h = jnp.zeros((B, D), jnp.float32)
        c = jnp.zeros((B, D), jnp.float32)
    else:
        h, c = state[0].reshape(B, D), state[1].reshape(B, D)

    def step(carry, xt):
        h, c = carry
        gates = xt @ p["w_ih"].T + p["b_ih"] + h @ p["w_hh"].T + p["b_hh"]
        i, f, g, o = jnp.split(gates, 4, axis=-1)
        i, f, o = jax.nn.sigmoid(i), jax.nn.sigmoid(f), jax.nn.sigmoid(o)
        g = jnp.tanh(g)
        c = f * c + i * g
        h = o * jnp.tanh(c)
        return (h, c), h

    (h, c), hs = lax.scan(step, (h, c), jnp.transpose(res, (1, 0, 2)))
    out = jnp.transpose(hs, (1, 0, 2))
    lin = res @ p["w_lin"].T + p["b_lin"]
    out = out * (lin * jax.nn.sigmoid(lin))
    out = out + res
    return out, (h[None], c[None])


if __name__ == "__main__":
    key = jax.random.PRNGKey(0)
    kx, kp, ks = jax.random.split(key, 3)
    B, S, D = 2, 8, 32
    x = jax.random.normal(kx, (B, S, D), jnp.float32)
    params = init_params(kp, D)

    ref_out, (ref_h, ref_c) = ref_forward(x, params)

    # f32-MXU path: tight check of semantics against the pure-JAX reference.
    out32, (h32, c32) = lstm_block_forward(x, params, matmul_dtype=jnp.float32)
    jax.block_until_ready((out32, h32, c32))
    assert out32.shape == (B, S, D) and h32.shape == (1, B, D) and c32.shape == (1, B, D)
    assert jnp.allclose(out32, ref_out, atol=1e-3, rtol=1e-3)
    assert jnp.allclose(h32, ref_h, atol=1e-3, rtol=1e-3)
    assert jnp.allclose(c32, ref_c, atol=1e-3, rtol=1e-3)

    # Default (bf16 MXU operands, f32 accumulation) path: looser tolerance.
    out, (h_n, c_n) = lstm_block_forward(x, params)
    jax.block_until_ready((out, h_n, c_n))
    assert out.shape == (B, S, D) and h_n.shape == (1, B, D) and c_n.shape == (1, B, D)
    assert jnp.allclose(out, ref_out, atol=5e-2, rtol=5e-2)
    assert jnp.allclose(h_n, ref_h, atol=5e-2, rtol=5e-2)
    assert jnp.allclose(c_n, ref_c, atol=5e-2, rtol=5e-2)

    # Awkward sequence length: exercises the padded-S + masked-state path.
    S2 = 10
    x2 = jax.random.normal(ks, (B, S2, D), jnp.float32)
    ref_out2, (ref_h2, ref_c2) = ref_forward(x2, params)
    out2, (h2, c2) = lstm_block_forward(x2, params, matmul_dtype=jnp.float32,
                                        time_chunk=8)
    jax.block_until_ready((out2, h2, c2))
    assert out2.shape == (B, S2, D)
    assert jnp.allclose(out2, ref_out2, atol=1e-3, rtol=1e-3)
    assert jnp.allclose(h2, ref_h2, atol=1e-3, rtol=1e-3)
    assert jnp.allclose(c2, ref_c2, atol=1e-3, rtol=1e-3)

    print("KERNEL_OK")
</pallas_src>

<mosaic_0001>
module attributes {stable_mosaic.version = 11 : i64} {
  func.func @_lstm_block_kernel(%arg0: i32, %arg1: i32, %arg2: memref<8x8x128xf32, #tpu.memory_space<vmem>>, %arg3: memref<1x128xf32, #tpu.memory_space<vmem>>, %arg4: memref<1x128xf32, #tpu.memory_space<vmem>>, %arg5: memref<128x640xf32, #tpu.memory_space<vmem>>, %arg6: memref<128x512xf32, #tpu.memory_space<vmem>>, %arg7: memref<1x640xf32, #tpu.memory_space<vmem>>, %arg8: memref<8x128xf32, #tpu.memory_space<vmem>>, %arg9: memref<8x128xf32, #tpu.memory_space<vmem>>, %arg10: memref<8x8x128xf32, #tpu.memory_space<vmem>>, %arg11: memref<8x128xf32, #tpu.memory_space<vmem>>, %arg12: memref<8x128xf32, #tpu.memory_space<vmem>>, %arg13: memref<8x8x512xf32, #tpu.memory_space<vmem>>, %arg14: memref<8x8x128xf32, #tpu.memory_space<vmem>>, %arg15: memref<8x8x128xf32, #tpu.memory_space<vmem>>, %arg16: memref<8x8x128xf32, #tpu.memory_space<vmem>>, %arg17: memref<8x128xf32, #tpu.memory_space<vmem>>, %arg18: memref<8x128xf32, #tpu.memory_space<vmem>>) attributes {dimension_semantics = [#tpu.dimension_semantics<parallel>, #tpu.dimension_semantics<arbitrary>], iteration_bounds = array<i64: 1, 1>, scalar_prefetch = 0 : i64, scratch_operands = 6 : i64, tpu.core_type = #tpu.core_type<tc>, window_params = [{transform_indices = @transform_0, window_bounds = array<i64: 8, 8, 128>}, {pipeline_mode = #tpu.pipeline_mode<synchronous>, transform_indices = @transform_1, window_bounds = array<i64: 1, 128>}, {pipeline_mode = #tpu.pipeline_mode<synchronous>, transform_indices = @transform_2, window_bounds = array<i64: 1, 128>}, {pipeline_mode = #tpu.pipeline_mode<synchronous>, transform_indices = @transform_3, window_bounds = array<i64: 128, 640>}, {pipeline_mode = #tpu.pipeline_mode<synchronous>, transform_indices = @transform_4, window_bounds = array<i64: 128, 512>}, {pipeline_mode = #tpu.pipeline_mode<synchronous>, transform_indices = @transform_5, window_bounds = array<i64: 1, 640>}, {transform_indices = @transform_6, window_bounds = array<i64: 8, 128>}, {transform_indices = @transform_7, window_bounds = array<i64: 8, 128>}, {transform_indices = @transform_8, window_bounds = array<i64: 8, 8, 128>}, {transform_indices = @transform_9, window_bounds = array<i64: 8, 128>}, {transform_indices = @transform_10, window_bounds = array<i64: 8, 128>}]} {
    %c0_i32 = arith.constant 0 : i32
    %0 = arith.cmpi eq, %arg1, %c0_i32 : i32
    %1 = arith.extui %0 : i1 to i32
    %c0_i32_0 = arith.constant 0 : i32
    %2 = arith.cmpi ne, %1, %c0_i32_0 : i32
    scf.if %2 {
      %c0_277 = arith.constant 0 : index
      %c0_278 = arith.constant 0 : index
      %514 = vector.load %arg8[%c0_277, %c0_278] : memref<8x128xf32, #tpu.memory_space<vmem>>, vector<8x128xf32>
      %c0_279 = arith.constant 0 : index
      %c0_280 = arith.constant 0 : index
      %515 = vector.load %arg17[%c0_279, %c0_280] : memref<8x128xf32, #tpu.memory_space<vmem>>, vector<8x128xf32>
      tpu.vector_store %arg17[%c0_279, %c0_280], %514 {strides = array<i32>} : memref<8x128xf32, #tpu.memory_space<vmem>>, vector<8x128xf32>,
      %c0_281 = arith.constant 0 : index
      %c0_282 = arith.constant 0 : index
      %516 = vector.load %arg9[%c0_281, %c0_282] : memref<8x128xf32, #tpu.memory_space<vmem>>, vector<8x128xf32>
      %c0_283 = arith.constant 0 : index
      %c0_284 = arith.constant 0 : index
      %517 = vector.load %arg18[%c0_283, %c0_284] : memref<8x128xf32, #tpu.memory_space<vmem>>, vector<8x128xf32>
      tpu.vector_store %arg18[%c0_283, %c0_284], %516 {strides = array<i32>} : memref<8x128xf32, #tpu.memory_space<vmem>>, vector<8x128xf32>,
    } else {
    }
    %c0 = arith.constant 0 : index
    %c0_1 = arith.constant 0 : index
    %c0_2 = arith.constant 0 : index
    %3 = vector.load %arg2[%c0, %c0_1, %c0_2] : memref<8x8x128xf32, #tpu.memory_space<vmem>>, vector<8x8x128xf32>
    %cst = arith.constant dense<0.000000e+00> : vector<8x8xf32>
    %4 = vector.multi_reduction <add>, %3, %cst [2] : vector<8x8x128xf32> to vector<8x8xf32>
    %5 = vector.shape_cast %4 : vector<8x8xf32> to vector<8x8x1xf32>
    %cst_3 = arith.constant 3.125000e-02 : f32
    %6 = vector.broadcast %cst_3 : f32 to vector<8x8x1xf32>
    %7 = arith.mulf %5, %6 : vector<8x8x1xf32>
    %8 = vector.broadcast %7 : vector<8x8x1xf32> to vector<8x8x128xf32>
    %9 = arith.subf %3, %8 : vector<8x8x128xf32>
    %10 = tpu.iota {dimensions = array<i32: 2>} : vector<1x1x128xi32>
    %c32_i32 = arith.constant 32 : i32
    %11 = vector.broadcast %c32_i32 : i32 to vector<1x1x128xi32>
    %12 = arith.cmpi slt, %10, %11 : vector<1x1x128xi32>
    %cst_4 = arith.constant 0.000000e+00 : f32
    %13 = vector.shape_cast %12 : vector<1x1x128xi1> to vector<1x1x128xi1>
    %14 = vector.broadcast %13 : vector<1x1x128xi1> to vector<8x8x128xi1>
    %15 = vector.broadcast %cst_4 : f32 to vector<8x8x128xf32>
    %16 = arith.select %14, %9, %15 : vector<8x8x128xi1>, vector<8x8x128xf32>
    %17 = arith.mulf %16, %16 : vector<8x8x128xf32>
    %cst_5 = arith.constant dense<0.000000e+00> : vector<8x8xf32>
    %18 = vector.multi_reduction <add>, %17, %cst_5 [2] : vector<8x8x128xf32> to vector<8x8xf32>
    %19 = vector.shape_cast %18 : vector<8x8xf32> to vector<8x8x1xf32>
    %cst_6 = arith.constant 3.125000e-02 : f32
    %20 = vector.broadcast %cst_6 : f32 to vector<8x8x1xf32>
    %21 = arith.mulf %19, %20 : vector<8x8x1xf32>
    %cst_7 = arith.constant 9.99999974E-6 : f32
    %22 = vector.broadcast %cst_7 : f32 to vector<8x8x1xf32>
    %23 = arith.addf %21, %22 : vector<8x8x1xf32>
    %24 = math.rsqrt %23 : vector<8x8x1xf32>
    %25 = vector.broadcast %24 : vector<8x8x1xf32> to vector<8x8x128xf32>
    %26 = arith.mulf %16, %25 : vector<8x8x128xf32>
    %c0_8 = arith.constant 0 : index
    %c0_9 = arith.constant 0 : index
    %27 = vector.load %arg3[%c0_8, %c0_9] : memref<1x128xf32, #tpu.memory_space<vmem>>, vector<1x128xf32>
    %28 = vector.shape_cast %27 : vector<1x128xf32> to vector<1x1x128xf32>
    %29 = vector.broadcast %28 : vector<1x1x128xf32> to vector<8x8x128xf32>
    %30 = arith.mulf %26, %29 : vector<8x8x128xf32>
    %c0_10 = arith.constant 0 : index
    %c0_11 = arith.constant 0 : index
    %31 = vector.load %arg4[%c0_10, %c0_11] : memref<1x128xf32, #tpu.memory_space<vmem>>, vector<1x128xf32>
    %32 = vector.shape_cast %31 : vector<1x128xf32> to vector<1x1x128xf32>
    %33 = vector.broadcast %32 : vector<1x1x128xf32> to vector<8x8x128xf32>
    %34 = arith.addf %30, %33 : vector<8x8x128xf32>
    %35 = vector.extract_strided_slice %34 {offsets = [0, 0, 0], sizes = [1, 8, 128], strides = [1, 1, 1]} : vector<8x8x128xf32> to vector<1x8x128xf32>
    %36 = vector.shape_cast %35 : vector<1x8x128xf32> to vector<8x128xf32>
    %c0_12 = arith.constant 0 : index
    %c0_13 = arith.constant 0 : index
    %c0_14 = arith.constant 0 : index
    %37 = vector.load %arg15[%c0_12, %c0_13, %c0_14] : memref<8x8x128xf32, #tpu.memory_space<vmem>>, vector<8x1x128xf32>
    %38 = vector.shape_cast %37 : vector<8x1x128xf32> to vector<8x128xf32>
    %39 = vector.shape_cast %36 : vector<8x128xf32> to vector<8x1x128xf32>
    tpu.vector_store %arg15[%c0_12, %c0_13, %c0_14], %39 {strides = array<i32>} : memref<8x8x128xf32, #tpu.memory_space<vmem>>, vector<8x1x128xf32>,
    %40 = vector.extract_strided_slice %34 {offsets = [1, 0, 0], sizes = [1, 8, 128], strides = [1, 1, 1]} : vector<8x8x128xf32> to vector<1x8x128xf32>
    %41 = vector.shape_cast %40 : vector<1x8x128xf32> to vector<8x128xf32>
    %c0_15 = arith.constant 0 : index
    %c1 = arith.constant 1 : index
    %c0_16 = arith.constant 0 : index
    %42 = vector.load %arg15[%c0_15, %c1, %c0_16] : memref<8x8x128xf32, #tpu.memory_space<vmem>>, vector<8x1x128xf32>
    %43 = vector.shape_cast %42 : vector<8x1x128xf32> to vector<8x128xf32>
    %44 = vector.shape_cast %41 : vector<8x128xf32> to vector<8x1x128xf32>
    tpu.vector_store %arg15[%c0_15, %c1, %c0_16], %44 {strides = array<i32>} : memref<8x8x128xf32, #tpu.memory_space<vmem>>, vector<8x1x128xf32>,
    %45 = vector.extract_strided_slice %34 {offsets = [2, 0, 0], sizes = [1, 8, 128], strides = [1, 1, 1]} : vector<8x8x128xf32> to vector<1x8x128xf32>
    %46 = vector.shape_cast %45 : vector<1x8x128xf32> to vector<8x128xf32>
    %c0_17 = arith.constant 0 : index
    %c2 = arith.constant 2 : index
    %c0_18 = arith.constant 0 : index
    %47 = vector.load %arg15[%c0_17, %c2, %c0_18] : memref<8x8x128xf32, #tpu.memory_space<vmem>>, vector<8x1x128xf32>
    %48 = vector.shape_cast %47 : vector<8x1x128xf32> to vector<8x128xf32>
    %49 = vector.shape_cast %46 : vector<8x128xf32> to vector<8x1x128xf32>
    tpu.vector_store %arg15[%c0_17, %c2, %c0_18], %49 {strides = array<i32>} : memref<8x8x128xf32, #tpu.memory_space<vmem>>, vector<8x1x128xf32>,
    %50 = vector.extract_strided_slice %34 {offsets = [3, 0, 0], sizes = [1, 8, 128], strides = [1, 1, 1]} : vector<8x8x128xf32> to vector<1x8x128xf32>
    %51 = vector.shape_cast %50 : vector<1x8x128xf32> to vector<8x128xf32>
    %c0_19 = arith.constant 0 : index
    %c3 = arith.constant 3 : index
    %c0_20 = arith.constant 0 : index
    %52 = vector.load %arg15[%c0_19, %c3, %c0_20] : memref<8x8x128xf32, #tpu.memory_space<vmem>>, vector<8x1x128xf32>
    %53 = vector.shape_cast %52 : vector<8x1x128xf32> to vector<8x128xf32>
    %54 = vector.shape_cast %51 : vector<8x128xf32> to vector<8x1x128xf32>
    tpu.vector_store %arg15[%c0_19, %c3, %c0_20], %54 {strides = array<i32>} : memref<8x8x128xf32, #tpu.memory_space<vmem>>, vector<8x1x128xf32>,
    %55 = vector.extract_strided_slice %34 {offsets = [4, 0, 0], sizes = [1, 8, 128], strides = [1, 1, 1]} : vector<8x8x128xf32> to vector<1x8x128xf32>
    %56 = vector.shape_cast %55 : vector<1x8x128xf32> to vector<8x128xf32>
    %c0_21 = arith.constant 0 : index
    %c4 = arith.constant 4 : index
    %c0_22 = arith.constant 0 : index
    %57 = vector.load %arg15[%c0_21, %c4, %c0_22] : memref<8x8x128xf32, #tpu.memory_space<vmem>>, vector<8x1x128xf32>
    %58 = vector.shape_cast %57 : vector<8x1x128xf32> to vector<8x128xf32>
    %59 = vector.shape_cast %56 : vector<8x128xf32> to vector<8x1x128xf32>
    tpu.vector_store %arg15[%c0_21, %c4, %c0_22], %59 {strides = array<i32>} : memref<8x8x128xf32, #tpu.memory_space<vmem>>, vector<8x1x128xf32>,
    %60 = vector.extract_strided_slice %34 {offsets = [5, 0, 0], sizes = [1, 8, 128], strides = [1, 1, 1]} : vector<8x8x128xf32> to vector<1x8x128xf32>
    %61 = vector.shape_cast %60 : vector<1x8x128xf32> to vector<8x128xf32>
    %c0_23 = arith.constant 0 : index
    %c5 = arith.constant 5 : index
    %c0_24 = arith.constant 0 : index
    %62 = vector.load %arg15[%c0_23, %c5, %c0_24] : memref<8x8x128xf32, #tpu.memory_space<vmem>>, vector<8x1x128xf32>
    %63 = vector.shape_cast %62 : vector<8x1x128xf32> to vector<8x128xf32>
    %64 = vector.shape_cast %61 : vector<8x128xf32> to vector<8x1x128xf32>
    tpu.vector_store %arg15[%c0_23, %c5, %c0_24], %64 {strides = array<i32>} : memref<8x8x128xf32, #tpu.memory_space<vmem>>, vector<8x1x128xf32>,
    %65 = vector.extract_strided_slice %34 {offsets = [6, 0, 0], sizes = [1, 8, 128], strides = [1, 1, 1]} : vector<8x8x128xf32> to vector<1x8x128xf32>
    %66 = vector.shape_cast %65 : vector<1x8x128xf32> to vector<8x128xf32>
    %c0_25 = arith.constant 0 : index
    %c6 = arith.constant 6 : index
    %c0_26 = arith.constant 0 : index
    %67 = vector.load %arg15[%c0_25, %c6, %c0_26] : memref<8x8x128xf32, #tpu.memory_space<vmem>>, vector<8x1x128xf32>
    %68 = vector.shape_cast %67 : vector<8x1x128xf32> to vector<8x128xf32>
    %69 = vector.shape_cast %66 : vector<8x128xf32> to vector<8x1x128xf32>
    tpu.vector_store %arg15[%c0_25, %c6, %c0_26], %69 {strides = array<i32>} : memref<8x8x128xf32, #tpu.memory_space<vmem>>, vector<8x1x128xf32>,
    %70 = vector.extract_strided_slice %34 {offsets = [7, 0, 0], sizes = [1, 8, 128], strides = [1, 1, 1]} : vector<8x8x128xf32> to vector<1x8x128xf32>
    %71 = vector.shape_cast %70 : vector<1x8x128xf32> to vector<8x128xf32>
    %c0_27 = arith.constant 0 : index
    %c7 = arith.constant 7 : index
    %c0_28 = arith.constant 0 : index
    %72 = vector.load %arg15[%c0_27, %c7, %c0_28] : memref<8x8x128xf32, #tpu.memory_space<vmem>>, vector<8x1x128xf32>
    %73 = vector.shape_cast %72 : vector<8x1x128xf32> to vector<8x128xf32>
    %74 = vector.shape_cast %71 : vector<8x128xf32> to vector<8x1x128xf32>
    tpu.vector_store %arg15[%c0_27, %c7, %c0_28], %74 {strides = array<i32>} : memref<8x8x128xf32, #tpu.memory_space<vmem>>, vector<8x1x128xf32>,
    %c0_29 = arith.constant 0 : index
    %c0_30 = arith.constant 0 : index
    %c0_31 = arith.constant 0 : index
    %75 = vector.load %arg15[%c0_29, %c0_30, %c0_31] : memref<8x8x128xf32, #tpu.memory_space<vmem>>, vector<8x8x128xf32>
    %76 = vector.shape_cast %75 : vector<8x8x128xf32> to vector<64x128xf32>
    %c0_32 = arith.constant 0 : index
    %c0_33 = arith.constant 0 : index
    %77 = vector.load %arg5[%c0_32, %c0_33] : memref<128x640xf32, #tpu.memory_space<vmem>>, vector<128x640xf32>
    %cst_34 = arith.constant dense<0.000000e+00> : vector<64x640xf32>
    %78 = tpu.matmul %76, %77, %cst_34 {dimension_numbers = #tpu.dot_dimension_numbers<[1], [0], [0], [1], [0, 0, 1, 1], [], []>} : vector<64x128xf32>, vector<128x640xf32>, vector<64x640xf32> -> vector<64x640xf32>
    %c0_35 = arith.constant 0 : index
    %c0_36 = arith.constant 0 : index
    %79 = vector.load %arg7[%c0_35, %c0_36] : memref<1x640xf32, #tpu.memory_space<vmem>>, vector<1x640xf32>
    %80 = vector.broadcast %79 : vector<1x640xf32> to vector<64x640xf32>
    %81 = arith.addf %78, %80 : vector<64x640xf32>
    %82 = vector.extract_strided_slice %81 {offsets = [0, 0], sizes = [64, 512], strides = [1, 1]} : vector<64x640xf32> to vector<64x512xf32>
    %83 = vector.shape_cast %82 : vector<64x512xf32> to vector<8x8x512xf32>
    %c0_37 = arith.constant 0 : index
    %c0_38 = arith.constant 0 : index
    %c0_39 = arith.constant 0 : index
    %84 = vector.load %arg13[%c0_37, %c0_38, %c0_39] : memref<8x8x512xf32, #tpu.memory_space<vmem>>, vector<8x8x512xf32>
    tpu.vector_store %arg13[%c0_37, %c0_38, %c0_39], %83 {strides = array<i32>} : memref<8x8x512xf32, #tpu.memory_space<vmem>>, vector<8x8x512xf32>,
    %85 = vector.extract_strided_slice %81 {offsets = [0, 512], sizes = [64, 128], strides = [1, 1]} : vector<64x640xf32> to vector<64x128xf32>
    %86 = arith.negf %85 : vector<64x128xf32>
    %87 = math.exp %86 : vector<64x128xf32>
    %cst_40 = arith.constant 1.000000e+00 : f32
    %88 = vector.broadcast %cst_40 : f32 to vector<64x128xf32>
    %89 = arith.addf %88, %87 : vector<64x128xf32>
    %90 = arith.divf %88, %89 : vector<64x128xf32>
    %91 = arith.mulf %85, %90 : vector<64x128xf32>
    %92 = vector.shape_cast %91 : vector<64x128xf32> to vector<8x8x128xf32>
    %c0_41 = arith.constant 0 : index
    %c0_42 = arith.constant 0 : index
    %c0_43 = arith.constant 0 : index
    %93 = vector.load %arg14[%c0_41, %c0_42, %c0_43] : memref<8x8x128xf32, #tpu.memory_space<vmem>>, vector<8x8x128xf32>
    tpu.vector_store %arg14[%c0_41, %c0_42, %c0_43], %92 {strides = array<i32>} : memref<8x8x128xf32, #tpu.memory_space<vmem>>, vector<8x8x128xf32>,
    %c0_i32_44 = arith.constant 0 : i32
    %c0_45 = arith.constant 0 : index
    %c0_46 = arith.constant 0 : index
    %94 = vector.load %arg17[%c0_45, %c0_46] : memref<8x128xf32, #tpu.memory_space<vmem>>, vector<8x128xf32>
    %c0_47 = arith.constant 0 : index
    %c0_48 = arith.constant 0 : index
    %95 = vector.load %arg18[%c0_47, %c0_48] : memref<8x128xf32, #tpu.memory_space<vmem>>, vector<8x128xf32>
    %96 = arith.index_cast %c0_i32_44 : i32 to index
    %c0_49 = arith.constant 0 : index
    %c0_50 = arith.constant 0 : index
    %97 = vector.load %arg13[%96, %c0_49, %c0_50] : memref<8x8x512xf32, #tpu.memory_space<vmem>>, vector<1x8x512xf32>
    %98 = vector.shape_cast %97 : vector<1x8x512xf32> to vector<8x512xf32>
    %c0_51 = arith.constant 0 : index
    %c0_52 = arith.constant 0 : index
    %99 = vector.load %arg6[%c0_51, %c0_52] : memref<128x512xf32, #tpu.memory_space<vmem>>, vector<128x512xf32>
    %cst_53 = arith.constant dense<0.000000e+00> : vector<8x512xf32>
    %100 = tpu.matmul %94, %99, %cst_53 {dimension_numbers = #tpu.dot_dimension_numbers<[1], [0], [0], [1], [0, 0, 1, 1], [], []>} : vector<8x128xf32>, vector<128x512xf32>, vector<8x512xf32> -> vector<8x512xf32>
    %101 = arith.addf %98, %100 : vector<8x512xf32>
    %102 = vector.extract_strided_slice %101 {offsets = [0, 0], sizes = [8, 128], strides = [1, 1]} : vector<8x512xf32> to vector<8x128xf32>
    %103 = arith.negf %102 : vector<8x128xf32>
    %104 = math.exp %103 : vector<8x128xf32>
    %cst_54 = arith.constant 1.000000e+00 : f32
    %105 = vector.broadcast %cst_54 : f32 to vector<8x128xf32>
    %106 = arith.addf %105, %104 : vector<8x128xf32>
    %107 = arith.divf %105, %106 : vector<8x128xf32>
    %108 = vector.extract_strided_slice %101 {offsets = [0, 128], sizes = [8, 128], strides = [1, 1]} : vector<8x512xf32> to vector<8x128xf32>
    %109 = arith.negf %108 : vector<8x128xf32>
    %110 = math.exp %109 : vector<8x128xf32>
    %cst_55 = arith.constant 1.000000e+00 : f32
    %111 = vector.broadcast %cst_55 : f32 to vector<8x128xf32>
    %112 = arith.addf %111, %110 : vector<8x128xf32>
    %113 = arith.divf %111, %112 : vector<8x128xf32>
    %114 = vector.extract_strided_slice %101 {offsets = [0, 256], sizes = [8, 128], strides = [1, 1]} : vector<8x512xf32> to vector<8x128xf32>
    %115 = math.tanh %114 : vector<8x128xf32>
    %116 = vector.extract_strided_slice %101 {offsets = [0, 384], sizes = [8, 128], strides = [1, 1]} : vector<8x512xf32> to vector<8x128xf32>
    %117 = arith.negf %116 : vector<8x128xf32>
    %118 = math.exp %117 : vector<8x128xf32>
    %cst_56 = arith.constant 1.000000e+00 : f32
    %119 = vector.broadcast %cst_56 : f32 to vector<8x128xf32>
    %120 = arith.addf %119, %118 : vector<8x128xf32>
    %121 = arith.divf %119, %120 : vector<8x128xf32>
    %122 = arith.mulf %113, %95 : vector<8x128xf32>
    %123 = arith.mulf %107, %115 : vector<8x128xf32>
    %124 = arith.addf %122, %123 : vector<8x128xf32>
    %125 = math.tanh %124 : vector<8x128xf32>
    %126 = arith.mulf %121, %125 : vector<8x128xf32>
    %c0_57 = arith.constant 0 : index
    %c0_58 = arith.constant 0 : index
    %127 = vector.load %arg18[%c0_57, %c0_58] : memref<8x128xf32, #tpu.memory_space<vmem>>, vector<8x128xf32>
    tpu.vector_store %arg18[%c0_57, %c0_58], %124 {strides = array<i32>} : memref<8x128xf32, #tpu.memory_space<vmem>>, vector<8x128xf32>,
    %c0_59 = arith.constant 0 : index
    %c0_60 = arith.constant 0 : index
    %128 = vector.load %arg17[%c0_59, %c0_60] : memref<8x128xf32, #tpu.memory_space<vmem>>, vector<8x128xf32>
    tpu.vector_store %arg17[%c0_59, %c0_60], %126 {strides = array<i32>} : memref<8x128xf32, #tpu.memory_space<vmem>>, vector<8x128xf32>,
    %129 = arith.index_cast %c0_i32_44 : i32 to index
    %c0_61 = arith.constant 0 : index
    %c0_62 = arith.constant 0 : index
    %130 = vector.load %arg14[%129, %c0_61, %c0_62] : memref<8x8x128xf32, #tpu.memory_space<vmem>>, vector<1x8x128xf32>
    %131 = vector.shape_cast %130 : vector<1x8x128xf32> to vector<8x128xf32>
    %132 = arith.mulf %126, %131 : vector<8x128xf32>
    %133 = arith.index_cast %c0_i32_44 : i32 to index
    %c0_63 = arith.constant 0 : index
    %c0_64 = arith.constant 0 : index
    %134 = vector.load %arg15[%133, %c0_63, %c0_64] : memref<8x8x128xf32, #tpu.memory_space<vmem>>, vector<1x8x128xf32>
    %135 = vector.shape_cast %134 : vector<1x8x128xf32> to vector<8x128xf32>
    %136 = arith.addf %132, %135 : vector<8x128xf32>
    %137 = arith.index_cast %c0_i32_44 : i32 to index
    %c0_65 = arith.constant 0 : index
    %c0_66 = arith.constant 0 : index
    %138 = vector.load %arg16[%137, %c0_65, %c0_66] : memref<8x8x128xf32, #tpu.memory_space<vmem>>, vector<1x8x128xf32>
    %139 = vector.shape_cast %138 : vector<1x8x128xf32> to vector<8x128xf32>
    %140 = vector.shape_cast %136 : vector<8x128xf32> to vector<1x8x128xf32>
    tpu.vector_store %arg16[%137, %c0_65, %c0_66], %140 {strides = array<i32>} : memref<8x8x128xf32, #tpu.memory_space<vmem>>, vector<1x8x128xf32>,
    %c1_i32 = arith.constant 1 : i32
    %c0_67 = arith.constant 0 : index
    %c0_68 = arith.constant 0 : index
    %141 = vector.load %arg17[%c0_67, %c0_68] : memref<8x128xf32, #tpu.memory_space<vmem>>, vector<8x128xf32>
    %c0_69 = arith.constant 0 : index
    %c0_70 = arith.constant 0 : index
    %142 = vector.load %arg18[%c0_69, %c0_70] : memref<8x128xf32, #tpu.memory_space<vmem>>, vector<8x128xf32>
    %143 = arith.index_cast %c1_i32 : i32 to index
    %c0_71 = arith.constant 0 : index
    %c0_72 = arith.constant 0 : index
    %144 = vector.load %arg13[%143, %c0_71, %c0_72] : memref<8x8x512xf32, #tpu.memory_space<vmem>>, vector<1x8x512xf32>
    %145 = vector.shape_cast %144 : vector<1x8x512xf32> to vector<8x512xf32>
    %c0_73 = arith.constant 0 : index
    %c0_74 = arith.constant 0 : index
    %146 = vector.load %arg6[%c0_73, %c0_74] : memref<128x512xf32, #tpu.memory_space<vmem>>, vector<128x512xf32>
    %cst_75 = arith.constant dense<0.000000e+00> : vector<8x512xf32>
    %147 = tpu.matmul %141, %146, %cst_75 {dimension_numbers = #tpu.dot_dimension_numbers<[1], [0], [0], [1], [0, 0, 1, 1], [], []>} : vector<8x128xf32>, vector<128x512xf32>, vector<8x512xf32> -> vector<8x512xf32>
    %148 = arith.addf %145, %147 : vector<8x512xf32>
    %149 = vector.extract_strided_slice %148 {offsets = [0, 0], sizes = [8, 128], strides = [1, 1]} : vector<8x512xf32> to vector<8x128xf32>
    %150 = arith.negf %149 : vector<8x128xf32>
    %151 = math.exp %150 : vector<8x128xf32>
    %cst_76 = arith.constant 1.000000e+00 : f32
    %152 = vector.broadcast %cst_76 : f32 to vector<8x128xf32>
    %153 = arith.addf %152, %151 : vector<8x128xf32>
    %154 = arith.divf %152, %153 : vector<8x128xf32>
    %155 = vector.extract_strided_slice %148 {offsets = [0, 128], sizes = [8, 128], strides = [1, 1]} : vector<8x512xf32> to vector<8x128xf32>
    %156 = arith.negf %155 : vector<8x128xf32>
    %157 = math.exp %156 : vector<8x128xf32>
    %cst_77 = arith.constant 1.000000e+00 : f32
    %158 = vector.broadcast %cst_77 : f32 to vector<8x128xf32>
    %159 = arith.addf %158, %157 : vector<8x128xf32>
    %160 = arith.divf %158, %159 : vector<8x128xf32>
    %161 = vector.extract_strided_slice %148 {offsets = [0, 256], sizes = [8, 128], strides = [1, 1]} : vector<8x512xf32> to vector<8x128xf32>
    %162 = math.tanh %161 : vector<8x128xf32>
    %163 = vector.extract_strided_slice %148 {offsets = [0, 384], sizes = [8, 128], strides = [1, 1]} : vector<8x512xf32> to vector<8x128xf32>
    %164 = arith.negf %163 : vector<8x128xf32>
    %165 = math.exp %164 : vector<8x128xf32>
    %cst_78 = arith.constant 1.000000e+00 : f32
    %166 = vector.broadcast %cst_78 : f32 to vector<8x128xf32>
    %167 = arith.addf %166, %165 : vector<8x128xf32>
    %168 = arith.divf %166, %167 : vector<8x128xf32>
    %169 = arith.mulf %160, %142 : vector<8x128xf32>
    %170 = arith.mulf %154, %162 : vector<8x128xf32>
    %171 = arith.addf %169, %170 : vector<8x128xf32>
    %172 = math.tanh %171 : vector<8x128xf32>
    %173 = arith.mulf %168, %172 : vector<8x128xf32>
    %c0_79 = arith.constant 0 : index
    %c0_80 = arith.constant 0 : index
    %174 = vector.load %arg18[%c0_79, %c0_80] : memref<8x128xf32, #tpu.memory_space<vmem>>, vector<8x128xf32>
    tpu.vector_store %arg18[%c0_79, %c0_80], %171 {strides = array<i32>} : memref<8x128xf32, #tpu.memory_space<vmem>>, vector<8x128xf32>,
    %c0_81 = arith.constant 0 : index
    %c0_82 = arith.constant 0 : index
    %175 = vector.load %arg17[%c0_81, %c0_82] : memref<8x128xf32, #tpu.memory_space<vmem>>, vector<8x128xf32>
    tpu.vector_store %arg17[%c0_81, %c0_82], %173 {strides = array<i32>} : memref<8x128xf32, #tpu.memory_space<vmem>>, vector<8x128xf32>,
    %176 = arith.index_cast %c1_i32 : i32 to index
    %c0_83 = arith.constant 0 : index
    %c0_84 = arith.constant 0 : index
    %177 = vector.load %arg14[%176, %c0_83, %c0_84] : memref<8x8x128xf32, #tpu.memory_space<vmem>>, vector<1x8x128xf32>
    %178 = vector.shape_cast %177 : vector<1x8x128xf32> to vector<8x128xf32>
    %179 = arith.mulf %173, %178 : vector<8x128xf32>
    %180 = arith.index_cast %c1_i32 : i32 to index
    %c0_85 = arith.constant 0 : index
    %c0_86 = arith.constant 0 : index
    %181 = vector.load %arg15[%180, %c0_85, %c0_86] : memref<8x8x128xf32, #tpu.memory_space<vmem>>, vector<1x8x128xf32>
    %182 = vector.shape_cast %181 : vector<1x8x128xf32> to vector<8x128xf32>
    %183 = arith.addf %179, %182 : vector<8x128xf32>
    %184 = arith.index_cast %c1_i32 : i32 to index
    %c0_87 = arith.constant 0 : index
    %c0_88 = arith.constant 0 : index
    %185 = vector.load %arg16[%184, %c0_87, %c0_88] : memref<8x8x128xf32, #tpu.memory_space<vmem>>, vector<1x8x128xf32>
    %186 = vector.shape_cast %185 : vector<1x8x128xf32> to vector<8x128xf32>
    %187 = vector.shape_cast %183 : vector<8x128xf32> to vector<1x8x128xf32>
    tpu.vector_store %arg16[%184, %c0_87, %c0_88], %187 {strides = array<i32>} : memref<8x8x128xf32, #tpu.memory_space<vmem>>, vector<1x8x128xf32>,
    %c2_i32 = arith.constant 2 : i32
    %c0_89 = arith.constant 0 : index
    %c0_90 = arith.constant 0 : index
    %188 = vector.load %arg17[%c0_89, %c0_90] : memref<8x128xf32, #tpu.memory_space<vmem>>, vector<8x128xf32>
    %c0_91 = arith.constant 0 : index
    %c0_92 = arith.constant 0 : index
    %189 = vector.load %arg18[%c0_91, %c0_92] : memref<8x128xf32, #tpu.memory_space<vmem>>, vector<8x128xf32>
    %190 = arith.index_cast %c2_i32 : i32 to index
    %c0_93 = arith.constant 0 : index
    %c0_94 = arith.constant 0 : index
    %191 = vector.load %arg13[%190, %c0_93, %c0_94] : memref<8x8x512xf32, #tpu.memory_space<vmem>>, vector<1x8x512xf32>
    %192 = vector.shape_cast %191 : vector<1x8x512xf32> to vector<8x512xf32>
    %c0_95 = arith.constant 0 : index
    %c0_96 = arith.constant 0 : index
    %193 = vector.load %arg6[%c0_95, %c0_96] : memref<128x512xf32, #tpu.memory_space<vmem>>, vector<128x512xf32>
    %cst_97 = arith.constant dense<0.000000e+00> : vector<8x512xf32>
    %194 = tpu.matmul %188, %193, %cst_97 {dimension_numbers = #tpu.dot_dimension_numbers<[1], [0], [0], [1], [0, 0, 1, 1], [], []>} : vector<8x128xf32>, vector<128x512xf32>, vector<8x512xf32> -> vector<8x512xf32>
    %195 = arith.addf %192, %194 : vector<8x512xf32>
    %196 = vector.extract_strided_slice %195 {offsets = [0, 0], sizes = [8, 128], strides = [1, 1]} : vector<8x512xf32> to vector<8x128xf32>
    %197 = arith.negf %196 : vector<8x128xf32>
    %198 = math.exp %197 : vector<8x128xf32>
    %cst_98 = arith.constant 1.000000e+00 : f32
    %199 = vector.broadcast %cst_98 : f32 to vector<8x128xf32>
    %200 = arith.addf %199, %198 : vector<8x128xf32>
    %201 = arith.divf %199, %200 : vector<8x128xf32>
    %202 = vector.extract_strided_slice %195 {offsets = [0, 128], sizes = [8, 128], strides = [1, 1]} : vector<8x512xf32> to vector<8x128xf32>
    %203 = arith.negf %202 : vector<8x128xf32>
    %204 = math.exp %203 : vector<8x128xf32>
    %cst_99 = arith.constant 1.000000e+00 : f32
    %205 = vector.broadcast %cst_99 : f32 to vector<8x128xf32>
    %206 = arith.addf %205, %204 : vector<8x128xf32>
    %207 = arith.divf %205, %206 : vector<8x128xf32>
    %208 = vector.extract_strided_slice %195 {offsets = [0, 256], sizes = [8, 128], strides = [1, 1]} : vector<8x512xf32> to vector<8x128xf32>
    %209 = math.tanh %208 : vector<8x128xf32>
    %210 = vector.extract_strided_slice %195 {offsets = [0, 384], sizes = [8, 128], strides = [1, 1]} : vector<8x512xf32> to vector<8x128xf32>
    %211 = arith.negf %210 : vector<8x128xf32>
    %212 = math.exp %211 : vector<8x128xf32>
    %cst_100 = arith.constant 1.000000e+00 : f32
    %213 = vector.broadcast %cst_100 : f32 to vector<8x128xf32>
    %214 = arith.addf %213, %212 : vector<8x128xf32>
    %215 = arith.divf %213, %214 : vector<8x128xf32>
    %216 = arith.mulf %207, %189 : vector<8x128xf32>
    %217 = arith.mulf %201, %209 : vector<8x128xf32>
    %218 = arith.addf %216, %217 : vector<8x128xf32>
    %219 = math.tanh %218 : vector<8x128xf32>
    %220 = arith.mulf %215, %219 : vector<8x128xf32>
    %c0_101 = arith.constant 0 : index
    %c0_102 = arith.constant 0 : index
    %221 = vector.load %arg18[%c0_101, %c0_102] : memref<8x128xf32, #tpu.memory_space<vmem>>, vector<8x128xf32>
    tpu.vector_store %arg18[%c0_101, %c0_102], %218 {strides = array<i32>} : memref<8x128xf32, #tpu.memory_space<vmem>>, vector<8x128xf32>,
    %c0_103 = arith.constant 0 : index
    %c0_104 = arith.constant 0 : index
    %222 = vector.load %arg17[%c0_103, %c0_104] : memref<8x128xf32, #tpu.memory_space<vmem>>, vector<8x128xf32>
    tpu.vector_store %arg17[%c0_103, %c0_104], %220 {strides = array<i32>} : memref<8x128xf32, #tpu.memory_space<vmem>>, vector<8x128xf32>,
    %223 = arith.index_cast %c2_i32 : i32 to index
    %c0_105 = arith.constant 0 : index
    %c0_106 = arith.constant 0 : index
    %224 = vector.load %arg14[%223, %c0_105, %c0_106] : memref<8x8x128xf32, #tpu.memory_space<vmem>>, vector<1x8x128xf32>
    %225 = vector.shape_cast %224 : vector<1x8x128xf32> to vector<8x128xf32>
    %226 = arith.mulf %220, %225 : vector<8x128xf32>
    %227 = arith.index_cast %c2_i32 : i32 to index
    %c0_107 = arith.constant 0 : index
    %c0_108 = arith.constant 0 : index
    %228 = vector.load %arg15[%227, %c0_107, %c0_108] : memref<8x8x128xf32, #tpu.memory_space<vmem>>, vector<1x8x128xf32>
    %229 = vector.shape_cast %228 : vector<1x8x128xf32> to vector<8x128xf32>
    %230 = arith.addf %226, %229 : vector<8x128xf32>
    %231 = arith.index_cast %c2_i32 : i32 to index
    %c0_109 = arith.constant 0 : index
    %c0_110 = arith.constant 0 : index
    %232 = vector.load %arg16[%231, %c0_109, %c0_110] : memref<8x8x128xf32, #tpu.memory_space<vmem>>, vector<1x8x128xf32>
    %233 = vector.shape_cast %232 : vector<1x8x128xf32> to vector<8x128xf32>
    %234 = vector.shape_cast %230 : vector<8x128xf32> to vector<1x8x128xf32>
    tpu.vector_store %arg16[%231, %c0_109, %c0_110], %234 {strides = array<i32>} : memref<8x8x128xf32, #tpu.memory_space<vmem>>, vector<1x8x128xf32>,
    %c3_i32 = arith.constant 3 : i32
    %c0_111 = arith.constant 0 : index
    %c0_112 = arith.constant 0 : index
    %235 = vector.load %arg17[%c0_111, %c0_112] : memref<8x128xf32, #tpu.memory_space<vmem>>, vector<8x128xf32>
    %c0_113 = arith.constant 0 : index
    %c0_114 = arith.constant 0 : index
    %236 = vector.load %arg18[%c0_113, %c0_114] : memref<8x128xf32, #tpu.memory_space<vmem>>, vector<8x128xf32>
    %237 = arith.index_cast %c3_i32 : i32 to index
    %c0_115 = arith.constant 0 : index
    %c0_116 = arith.constant 0 : index
    %238 = vector.load %arg13[%237, %c0_115, %c0_116] : memref<8x8x512xf32, #tpu.memory_space<vmem>>, vector<1x8x512xf32>
    %239 = vector.shape_cast %238 : vector<1x8x512xf32> to vector<8x512xf32>
    %c0_117 = arith.constant 0 : index
    %c0_118 = arith.constant 0 : index
    %240 = vector.load %arg6[%c0_117, %c0_118] : memref<128x512xf32, #tpu.memory_space<vmem>>, vector<128x512xf32>
    %cst_119 = arith.constant dense<0.000000e+00> : vector<8x512xf32>
    %241 = tpu.matmul %235, %240, %cst_119 {dimension_numbers = #tpu.dot_dimension_numbers<[1], [0], [0], [1], [0, 0, 1, 1], [], []>} : vector<8x128xf32>, vector<128x512xf32>, vector<8x512xf32> -> vector<8x512xf32>
    %242 = arith.addf %239, %241 : vector<8x512xf32>
    %243 = vector.extract_strided_slice %242 {offsets = [0, 0], sizes = [8, 128], strides = [1, 1]} : vector<8x512xf32> to vector<8x128xf32>
    %244 = arith.negf %243 : vector<8x128xf32>
    %245 = math.exp %244 : vector<8x128xf32>
    %cst_120 = arith.constant 1.000000e+00 : f32
    %246 = vector.broadcast %cst_120 : f32 to vector<8x128xf32>
    %247 = arith.addf %246, %245 : vector<8x128xf32>
    %248 = arith.divf %246, %247 : vector<8x128xf32>
    %249 = vector.extract_strided_slice %242 {offsets = [0, 128], sizes = [8, 128], strides = [1, 1]} : vector<8x512xf32> to vector<8x128xf32>
    %250 = arith.negf %249 : vector<8x128xf32>
    %251 = math.exp %250 : vector<8x128xf32>
    %cst_121 = arith.constant 1.000000e+00 : f32
    %252 = vector.broadcast %cst_121 : f32 to vector<8x128xf32>
    %253 = arith.addf %252, %251 : vector<8x128xf32>
    %254 = arith.divf %252, %253 : vector<8x128xf32>
    %255 = vector.extract_strided_slice %242 {offsets = [0, 256], sizes = [8, 128], strides = [1, 1]} : vector<8x512xf32> to vector<8x128xf32>
    %256 = math.tanh %255 : vector<8x128xf32>
    %257 = vector.extract_strided_slice %242 {offsets = [0, 384], sizes = [8, 128], strides = [1, 1]} : vector<8x512xf32> to vector<8x128xf32>
    %258 = arith.negf %257 : vector<8x128xf32>
    %259 = math.exp %258 : vector<8x128xf32>
    %cst_122 = arith.constant 1.000000e+00 : f32
    %260 = vector.broadcast %cst_122 : f32 to vector<8x128xf32>
    %261 = arith.addf %260, %259 : vector<8x128xf32>
    %262 = arith.divf %260, %261 : vector<8x128xf32>
    %263 = arith.mulf %254, %236 : vector<8x128xf32>
    %264 = arith.mulf %248, %256 : vector<8x128xf32>
    %265 = arith.addf %263, %264 : vector<8x128xf32>
    %266 = math.tanh %265 : vector<8x128xf32>
    %267 = arith.mulf %262, %266 : vector<8x128xf32>
    %c0_123 = arith.constant 0 : index
    %c0_124 = arith.constant 0 : index
    %268 = vector.load %arg18[%c0_123, %c0_124] : memref<8x128xf32, #tpu.memory_space<vmem>>, vector<8x128xf32>
    tpu.vector_store %arg18[%c0_123, %c0_124], %265 {strides = array<i32>} : memref<8x128xf32, #tpu.memory_space<vmem>>, vector<8x128xf32>,
    %c0_125 = arith.constant 0 : index
    %c0_126 = arith.constant 0 : index
    %269 = vector.load %arg17[%c0_125, %c0_126] : memref<8x128xf32, #tpu.memory_space<vmem>>, vector<8x128xf32>
    tpu.vector_store %arg17[%c0_125, %c0_126], %267 {strides = array<i32>} : memref<8x128xf32, #tpu.memory_space<vmem>>, vector<8x128xf32>,
    %270 = arith.index_cast %c3_i32 : i32 to index
    %c0_127 = arith.constant 0 : index
    %c0_128 = arith.constant 0 : index
    %271 = vector.load %arg14[%270, %c0_127, %c0_128] : memref<8x8x128xf32, #tpu.memory_space<vmem>>, vector<1x8x128xf32>
    %272 = vector.shape_cast %271 : vector<1x8x128xf32> to vector<8x128xf32>
    %273 = arith.mulf %267, %272 : vector<8x128xf32>
    %274 = arith.index_cast %c3_i32 : i32 to index
    %c0_129 = arith.constant 0 : index
    %c0_130 = arith.constant 0 : index
    %275 = vector.load %arg15[%274, %c0_129, %c0_130] : memref<8x8x128xf32, #tpu.memory_space<vmem>>, vector<1x8x128xf32>
    %276 = vector.shape_cast %275 : vector<1x8x128xf32> to vector<8x128xf32>
    %277 = arith.addf %273, %276 : vector<8x128xf32>
    %278 = arith.index_cast %c3_i32 : i32 to index
    %c0_131 = arith.constant 0 : index
    %c0_132 = arith.constant 0 : index
    %279 = vector.load %arg16[%278, %c0_131, %c0_132] : memref<8x8x128xf32, #tpu.memory_space<vmem>>, vector<1x8x128xf32>
    %280 = vector.shape_cast %279 : vector<1x8x128xf32> to vector<8x128xf32>
    %281 = vector.shape_cast %277 : vector<8x128xf32> to vector<1x8x128xf32>
    tpu.vector_store %arg16[%278, %c0_131, %c0_132], %281 {strides = array<i32>} : memref<8x8x128xf32, #tpu.memory_space<vmem>>, vector<1x8x128xf32>,
    %c4_i32 = arith.constant 4 : i32
    %c0_133 = arith.constant 0 : index
    %c0_134 = arith.constant 0 : index
    %282 = vector.load %arg17[%c0_133, %c0_134] : memref<8x128xf32, #tpu.memory_space<vmem>>, vector<8x128xf32>
    %c0_135 = arith.constant 0 : index
    %c0_136 = arith.constant 0 : index
    %283 = vector.load %arg18[%c0_135, %c0_136] : memref<8x128xf32, #tpu.memory_space<vmem>>, vector<8x128xf32>
    %284 = arith.index_cast %c4_i32 : i32 to index
    %c0_137 = arith.constant 0 : index
    %c0_138 = arith.constant 0 : index
    %285 = vector.load %arg13[%284, %c0_137, %c0_138] : memref<8x8x512xf32, #tpu.memory_space<vmem>>, vector<1x8x512xf32>
    %286 = vector.shape_cast %285 : vector<1x8x512xf32> to vector<8x512xf32>
    %c0_139 = arith.constant 0 : index
    %c0_140 = arith.constant 0 : index
    %287 = vector.load %arg6[%c0_139, %c0_140] : memref<128x512xf32, #tpu.memory_space<vmem>>, vector<128x512xf32>
    %cst_141 = arith.constant dense<0.000000e+00> : vector<8x512xf32>
    %288 = tpu.matmul %282, %287, %cst_141 {dimension_numbers = #tpu.dot_dimension_numbers<[1], [0], [0], [1], [0, 0, 1, 1], [], []>} : vector<8x128xf32>, vector<128x512xf32>, vector<8x512xf32> -> vector<8x512xf32>
    %289 = arith.addf %286, %288 : vector<8x512xf32>
    %290 = vector.extract_strided_slice %289 {offsets = [0, 0], sizes = [8, 128], strides = [1, 1]} : vector<8x512xf32> to vector<8x128xf32>
    %291 = arith.negf %290 : vector<8x128xf32>
    %292 = math.exp %291 : vector<8x128xf32>
    %cst_142 = arith.constant 1.000000e+00 : f32
    %293 = vector.broadcast %cst_142 : f32 to vector<8x128xf32>
    %294 = arith.addf %293, %292 : vector<8x128xf32>
    %295 = arith.divf %293, %294 : vector<8x128xf32>
    %296 = vector.extract_strided_slice %289 {offsets = [0, 128], sizes = [8, 128], strides = [1, 1]} : vector<8x512xf32> to vector<8x128xf32>
    %297 = arith.negf %296 : vector<8x128xf32>
    %298 = math.exp %297 : vector<8x128xf32>
    %cst_143 = arith.constant 1.000000e+00 : f32
    %299 = vector.broadcast %cst_143 : f32 to vector<8x128xf32>
    %300 = arith.addf %299, %298 : vector<8x128xf32>
    %301 = arith.divf %299, %300 : vector<8x128xf32>
    %302 = vector.extract_strided_slice %289 {offsets = [0, 256], sizes = [8, 128], strides = [1, 1]} : vector<8x512xf32> to vector<8x128xf32>
    %303 = math.tanh %302 : vector<8x128xf32>
    %304 = vector.extract_strided_slice %289 {offsets = [0, 384], sizes = [8, 128], strides = [1, 1]} : vector<8x512xf32> to vector<8x128xf32>
    %305 = arith.negf %304 : vector<8x128xf32>
    %306 = math.exp %305 : vector<8x128xf32>
    %cst_144 = arith.constant 1.000000e+00 : f32
    %307 = vector.broadcast %cst_144 : f32 to vector<8x128xf32>
    %308 = arith.addf %307, %306 : vector<8x128xf32>
    %309 = arith.divf %307, %308 : vector<8x128xf32>
    %310 = arith.mulf %301, %283 : vector<8x128xf32>
    %311 = arith.mulf %295, %303 : vector<8x128xf32>
    %312 = arith.addf %310, %311 : vector<8x128xf32>
    %313 = math.tanh %312 : vector<8x128xf32>
    %314 = arith.mulf %309, %313 : vector<8x128xf32>
    %c0_145 = arith.constant 0 : index
    %c0_146 = arith.constant 0 : index
    %315 = vector.load %arg18[%c0_145, %c0_146] : memref<8x128xf32, #tpu.memory_space<vmem>>, vector<8x128xf32>
    tpu.vector_store %arg18[%c0_145, %c0_146], %312 {strides = array<i32>} : memref<8x128xf32, #tpu.memory_space<vmem>>, vector<8x128xf32>,
    %c0_147 = arith.constant 0 : index
    %c0_148 = arith.constant 0 : index
    %316 = vector.load %arg17[%c0_147, %c0_148] : memref<8x128xf32, #tpu.memory_space<vmem>>, vector<8x128xf32>
    tpu.vector_store %arg17[%c0_147, %c0_148], %314 {strides = array<i32>} : memref<8x128xf32, #tpu.memory_space<vmem>>, vector<8x128xf32>,
    %317 = arith.index_cast %c4_i32 : i32 to index
    %c0_149 = arith.constant 0 : index
    %c0_150 = arith.constant 0 : index
    %318 = vector.load %arg14[%317, %c0_149, %c0_150] : memref<8x8x128xf32, #tpu.memory_space<vmem>>, vector<1x8x128xf32>
    %319 = vector.shape_cast %318 : vector<1x8x128xf32> to vector<8x128xf32>
    %320 = arith.mulf %314, %319 : vector<8x128xf32>
    %321 = arith.index_cast %c4_i32 : i32 to index
    %c0_151 = arith.constant 0 : index
    %c0_152 = arith.constant 0 : index
    %322 = vector.load %arg15[%321, %c0_151, %c0_152] : memref<8x8x128xf32, #tpu.memory_space<vmem>>, vector<1x8x128xf32>
    %323 = vector.shape_cast %322 : vector<1x8x128xf32> to vector<8x128xf32>
    %324 = arith.addf %320, %323 : vector<8x128xf32>
    %325 = arith.index_cast %c4_i32 : i32 to index
    %c0_153 = arith.constant 0 : index
    %c0_154 = arith.constant 0 : index
    %326 = vector.load %arg16[%325, %c0_153, %c0_154] : memref<8x8x128xf32, #tpu.memory_space<vmem>>, vector<1x8x128xf32>
    %327 = vector.shape_cast %326 : vector<1x8x128xf32> to vector<8x128xf32>
    %328 = vector.shape_cast %324 : vector<8x128xf32> to vector<1x8x128xf32>
    tpu.vector_store %arg16[%325, %c0_153, %c0_154], %328 {strides = array<i32>} : memref<8x8x128xf32, #tpu.memory_space<vmem>>, vector<1x8x128xf32>,
    %c5_i32 = arith.constant 5 : i32
    %c0_155 = arith.constant 0 : index
    %c0_156 = arith.constant 0 : index
    %329 = vector.load %arg17[%c0_155, %c0_156] : memref<8x128xf32, #tpu.memory_space<vmem>>, vector<8x128xf32>
    %c0_157 = arith.constant 0 : index
    %c0_158 = arith.constant 0 : index
    %330 = vector.load %arg18[%c0_157, %c0_158] : memref<8x128xf32, #tpu.memory_space<vmem>>, vector<8x128xf32>
    %331 = arith.index_cast %c5_i32 : i32 to index
    %c0_159 = arith.constant 0 : index
    %c0_160 = arith.constant 0 : index
    %332 = vector.load %arg13[%331, %c0_159, %c0_160] : memref<8x8x512xf32, #tpu.memory_space<vmem>>, vector<1x8x512xf32>
    %333 = vector.shape_cast %332 : vector<1x8x512xf32> to vector<8x512xf32>
    %c0_161 = arith.constant 0 : index
    %c0_162 = arith.constant 0 : index
    %334 = vector.load %arg6[%c0_161, %c0_162] : memref<128x512xf32, #tpu.memory_space<vmem>>, vector<128x512xf32>
    %cst_163 = arith.constant dense<0.000000e+00> : vector<8x512xf32>
    %335 = tpu.matmul %329, %334, %cst_163 {dimension_numbers = #tpu.dot_dimension_numbers<[1], [0], [0], [1], [0, 0, 1, 1], [], []>} : vector<8x128xf32>, vector<128x512xf32>, vector<8x512xf32> -> vector<8x512xf32>
    %336 = arith.addf %333, %335 : vector<8x512xf32>
    %337 = vector.extract_strided_slice %336 {offsets = [0, 0], sizes = [8, 128], strides = [1, 1]} : vector<8x512xf32> to vector<8x128xf32>
    %338 = arith.negf %337 : vector<8x128xf32>
    %339 = math.exp %338 : vector<8x128xf32>
    %cst_164 = arith.constant 1.000000e+00 : f32
    %340 = vector.broadcast %cst_164 : f32 to vector<8x128xf32>
    %341 = arith.addf %340, %339 : vector<8x128xf32>
    %342 = arith.divf %340, %341 : vector<8x128xf32>
    %343 = vector.extract_strided_slice %336 {offsets = [0, 128], sizes = [8, 128], strides = [1, 1]} : vector<8x512xf32> to vector<8x128xf32>
    %344 = arith.negf %343 : vector<8x128xf32>
    %345 = math.exp %344 : vector<8x128xf32>
    %cst_165 = arith.constant 1.000000e+00 : f32
    %346 = vector.broadcast %cst_165 : f32 to vector<8x128xf32>
    %347 = arith.addf %346, %345 : vector<8x128xf32>
    %348 = arith.divf %346, %347 : vector<8x128xf32>
    %349 = vector.extract_strided_slice %336 {offsets = [0, 256], sizes = [8, 128], strides = [1, 1]} : vector<8x512xf32> to vector<8x128xf32>
    %350 = math.tanh %349 : vector<8x128xf32>
    %351 = vector.extract_strided_slice %336 {offsets = [0, 384], sizes = [8, 128], strides = [1, 1]} : vector<8x512xf32> to vector<8x128xf32>
    %352 = arith.negf %351 : vector<8x128xf32>
    %353 = math.exp %352 : vector<8x128xf32>
    %cst_166 = arith.constant 1.000000e+00 : f32
    %354 = vector.broadcast %cst_166 : f32 to vector<8x128xf32>
    %355 = arith.addf %354, %353 : vector<8x128xf32>
    %356 = arith.divf %354, %355 : vector<8x128xf32>
    %357 = arith.mulf %348, %330 : vector<8x128xf32>
    %358 = arith.mulf %342, %350 : vector<8x128xf32>
    %359 = arith.addf %357, %358 : vector<8x128xf32>
    %360 = math.tanh %359 : vector<8x128xf32>
    %361 = arith.mulf %356, %360 : vector<8x128xf32>
    %c0_167 = arith.constant 0 : index
    %c0_168 = arith.constant 0 : index
    %362 = vector.load %arg18[%c0_167, %c0_168] : memref<8x128xf32, #tpu.memory_space<vmem>>, vector<8x128xf32>
    tpu.vector_store %arg18[%c0_167, %c0_168], %359 {strides = array<i32>} : memref<8x128xf32, #tpu.memory_space<vmem>>, vector<8x128xf32>,
    %c0_169 = arith.constant 0 : index
    %c0_170 = arith.constant 0 : index
    %363 = vector.load %arg17[%c0_169, %c0_170] : memref<8x128xf32, #tpu.memory_space<vmem>>, vector<8x128xf32>
    tpu.vector_store %arg17[%c0_169, %c0_170], %361 {strides = array<i32>} : memref<8x128xf32, #tpu.memory_space<vmem>>, vector<8x128xf32>,
    %364 = arith.index_cast %c5_i32 : i32 to index
    %c0_171 = arith.constant 0 : index
    %c0_172 = arith.constant 0 : index
    %365 = vector.load %arg14[%364, %c0_171, %c0_172] : memref<8x8x128xf32, #tpu.memory_space<vmem>>, vector<1x8x128xf32>
    %366 = vector.shape_cast %365 : vector<1x8x128xf32> to vector<8x128xf32>
    %367 = arith.mulf %361, %366 : vector<8x128xf32>
    %368 = arith.index_cast %c5_i32 : i32 to index
    %c0_173 = arith.constant 0 : index
    %c0_174 = arith.constant 0 : index
    %369 = vector.load %arg15[%368, %c0_173, %c0_174] : memref<8x8x128xf32, #tpu.memory_space<vmem>>, vector<1x8x128xf32>
    %370 = vector.shape_cast %369 : vector<1x8x128xf32> to vector<8x128xf32>
    %371 = arith.addf %367, %370 : vector<8x128xf32>
    %372 = arith.index_cast %c5_i32 : i32 to index
    %c0_175 = arith.constant 0 : index
    %c0_176 = arith.constant 0 : index
    %373 = vector.load %arg16[%372, %c0_175, %c0_176] : memref<8x8x128xf32, #tpu.memory_space<vmem>>, vector<1x8x128xf32>
    %374 = vector.shape_cast %373 : vector<1x8x128xf32> to vector<8x128xf32>
    %375 = vector.shape_cast %371 : vector<8x128xf32> to vector<1x8x128xf32>
    tpu.vector_store %arg16[%372, %c0_175, %c0_176], %375 {strides = array<i32>} : memref<8x8x128xf32, #tpu.memory_space<vmem>>, vector<1x8x128xf32>,
    %c6_i32 = arith.constant 6 : i32
    %c0_177 = arith.constant 0 : index
    %c0_178 = arith.constant 0 : index
    %376 = vector.load %arg17[%c0_177, %c0_178] : memref<8x128xf32, #tpu.memory_space<vmem>>, vector<8x128xf32>
    %c0_179 = arith.constant 0 : index
    %c0_180 = arith.constant 0 : index
    %377 = vector.load %arg18[%c0_179, %c0_180] : memref<8x128xf32, #tpu.memory_space<vmem>>, vector<8x128xf32>
    %378 = arith.index_cast %c6_i32 : i32 to index
    %c0_181 = arith.constant 0 : index
    %c0_182 = arith.constant 0 : index
    %379 = vector.load %arg13[%378, %c0_181, %c0_182] : memref<8x8x512xf32, #tpu.memory_space<vmem>>, vector<1x8x512xf32>
    %380 = vector.shape_cast %379 : vector<1x8x512xf32> to vector<8x512xf32>
    %c0_183 = arith.constant 0 : index
    %c0_184 = arith.constant 0 : index
    %381 = vector.load %arg6[%c0_183, %c0_184] : memref<128x512xf32, #tpu.memory_space<vmem>>, vector<128x512xf32>
    %cst_185 = arith.constant dense<0.000000e+00> : vector<8x512xf32>
    %382 = tpu.matmul %376, %381, %cst_185 {dimension_numbers = #tpu.dot_dimension_numbers<[1], [0], [0], [1], [0, 0, 1, 1], [], []>} : vector<8x128xf32>, vector<128x512xf32>, vector<8x512xf32> -> vector<8x512xf32>
    %383 = arith.addf %380, %382 : vector<8x512xf32>
    %384 = vector.extract_strided_slice %383 {offsets = [0, 0], sizes = [8, 128], strides = [1, 1]} : vector<8x512xf32> to vector<8x128xf32>
    %385 = arith.negf %384 : vector<8x128xf32>
    %386 = math.exp %385 : vector<8x128xf32>
    %cst_186 = arith.constant 1.000000e+00 : f32
    %387 = vector.broadcast %cst_186 : f32 to vector<8x128xf32>
    %388 = arith.addf %387, %386 : vector<8x128xf32>
    %389 = arith.divf %387, %388 : vector<8x128xf32>
    %390 = vector.extract_strided_slice %383 {offsets = [0, 128], sizes = [8, 128], strides = [1, 1]} : vector<8x512xf32> to vector<8x128xf32>
    %391 = arith.negf %390 : vector<8x128xf32>
    %392 = math.exp %391 : vector<8x128xf32>
    %cst_187 = arith.constant 1.000000e+00 : f32
    %393 = vector.broadcast %cst_187 : f32 to vector<8x128xf32>
    %394 = arith.addf %393, %392 : vector<8x128xf32>
    %395 = arith.divf %393, %394 : vector<8x128xf32>
    %396 = vector.extract_strided_slice %383 {offsets = [0, 256], sizes = [8, 128], strides = [1, 1]} : vector<8x512xf32> to vector<8x128xf32>
    %397 = math.tanh %396 : vector<8x128xf32>
    %398 = vector.extract_strided_slice %383 {offsets = [0, 384], sizes = [8, 128], strides = [1, 1]} : vector<8x512xf32> to vector<8x128xf32>
    %399 = arith.negf %398 : vector<8x128xf32>
    %400 = math.exp %399 : vector<8x128xf32>
    %cst_188 = arith.constant 1.000000e+00 : f32
    %401 = vector.broadcast %cst_188 : f32 to vector<8x128xf32>
    %402 = arith.addf %401, %400 : vector<8x128xf32>
    %403 = arith.divf %401, %402 : vector<8x128xf32>
    %404 = arith.mulf %395, %377 : vector<8x128xf32>
    %405 = arith.mulf %389, %397 : vector<8x128xf32>
    %406 = arith.addf %404, %405 : vector<8x128xf32>
    %407 = math.tanh %406 : vector<8x128xf32>
    %408 = arith.mulf %403, %407 : vector<8x128xf32>
    %c0_189 = arith.constant 0 : index
    %c0_190 = arith.constant 0 : index
    %409 = vector.load %arg18[%c0_189, %c0_190] : memref<8x128xf32, #tpu.memory_space<vmem>>, vector<8x128xf32>
    tpu.vector_store %arg18[%c0_189, %c0_190], %406 {strides = array<i32>} : memref<8x128xf32, #tpu.memory_space<vmem>>, vector<8x128xf32>,
    %c0_191 = arith.constant 0 : index
    %c0_192 = arith.constant 0 : index
    %410 = vector.load %arg17[%c0_191, %c0_192] : memref<8x128xf32, #tpu.memory_space<vmem>>, vector<8x128xf32>
    tpu.vector_store %arg17[%c0_191, %c0_192], %408 {strides = array<i32>} : memref<8x128xf32, #tpu.memory_space<vmem>>, vector<8x128xf32>,
    %411 = arith.index_cast %c6_i32 : i32 to index
    %c0_193 = arith.constant 0 : index
    %c0_194 = arith.constant 0 : index
    %412 = vector.load %arg14[%411, %c0_193, %c0_194] : memref<8x8x128xf32, #tpu.memory_space<vmem>>, vector<1x8x128xf32>
    %413 = vector.shape_cast %412 : vector<1x8x128xf32> to vector<8x128xf32>
    %414 = arith.mulf %408, %413 : vector<8x128xf32>
    %415 = arith.index_cast %c6_i32 : i32 to index
    %c0_195 = arith.constant 0 : index
    %c0_196 = arith.constant 0 : index
    %416 = vector.load %arg15[%415, %c0_195, %c0_196] : memref<8x8x128xf32, #tpu.memory_space<vmem>>, vector<1x8x128xf32>
    %417 = vector.shape_cast %416 : vector<1x8x128xf32> to vector<8x128xf32>
    %418 = arith.addf %414, %417 : vector<8x128xf32>
    %419 = arith.index_cast %c6_i32 : i32 to index
    %c0_197 = arith.constant 0 : index
    %c0_198 = arith.constant 0 : index
    %420 = vector.load %arg16[%419, %c0_197, %c0_198] : memref<8x8x128xf32, #tpu.memory_space<vmem>>, vector<1x8x128xf32>
    %421 = vector.shape_cast %420 : vector<1x8x128xf32> to vector<8x128xf32>
    %422 = vector.shape_cast %418 : vector<8x128xf32> to vector<1x8x128xf32>
    tpu.vector_store %arg16[%419, %c0_197, %c0_198], %422 {strides = array<i32>} : memref<8x8x128xf32, #tpu.memory_space<vmem>>, vector<1x8x128xf32>,
    %c7_i32 = arith.constant 7 : i32
    %c0_199 = arith.constant 0 : index
    %c0_200 = arith.constant 0 : index
    %423 = vector.load %arg17[%c0_199, %c0_200] : memref<8x128xf32, #tpu.memory_space<vmem>>, vector<8x128xf32>
    %c0_201 = arith.constant 0 : index
    %c0_202 = arith.constant 0 : index
    %424 = vector.load %arg18[%c0_201, %c0_202] : memref<8x128xf32, #tpu.memory_space<vmem>>, vector<8x128xf32>
    %425 = arith.index_cast %c7_i32 : i32 to index
    %c0_203 = arith.constant 0 : index
    %c0_204 = arith.constant 0 : index
    %426 = vector.load %arg13[%425, %c0_203, %c0_204] : memref<8x8x512xf32, #tpu.memory_space<vmem>>, vector<1x8x512xf32>
    %427 = vector.shape_cast %426 : vector<1x8x512xf32> to vector<8x512xf32>
    %c0_205 = arith.constant 0 : index
    %c0_206 = arith.constant 0 : index
    %428 = vector.load %arg6[%c0_205, %c0_206] : memref<128x512xf32, #tpu.memory_space<vmem>>, vector<128x512xf32>
    %cst_207 = arith.constant dense<0.000000e+00> : vector<8x512xf32>
    %429 = tpu.matmul %423, %428, %cst_207 {dimension_numbers = #tpu.dot_dimension_numbers<[1], [0], [0], [1], [0, 0, 1, 1], [], []>} : vector<8x128xf32>, vector<128x512xf32>, vector<8x512xf32> -> vector<8x512xf32>
    %430 = arith.addf %427, %429 : vector<8x512xf32>
    %431 = vector.extract_strided_slice %430 {offsets = [0, 0], sizes = [8, 128], strides = [1, 1]} : vector<8x512xf32> to vector<8x128xf32>
    %432 = arith.negf %431 : vector<8x128xf32>
    %433 = math.exp %432 : vector<8x128xf32>
    %cst_208 = arith.constant 1.000000e+00 : f32
    %434 = vector.broadcast %cst_208 : f32 to vector<8x128xf32>
    %435 = arith.addf %434, %433 : vector<8x128xf32>
    %436 = arith.divf %434, %435 : vector<8x128xf32>
    %437 = vector.extract_strided_slice %430 {offsets = [0, 128], sizes = [8, 128], strides = [1, 1]} : vector<8x512xf32> to vector<8x128xf32>
    %438 = arith.negf %437 : vector<8x128xf32>
    %439 = math.exp %438 : vector<8x128xf32>
    %cst_209 = arith.constant 1.000000e+00 : f32
    %440 = vector.broadcast %cst_209 : f32 to vector<8x128xf32>
    %441 = arith.addf %440, %439 : vector<8x128xf32>
    %442 = arith.divf %440, %441 : vector<8x128xf32>
    %443 = vector.extract_strided_slice %430 {offsets = [0, 256], sizes = [8, 128], strides = [1, 1]} : vector<8x512xf32> to vector<8x128xf32>
    %444 = math.tanh %443 : vector<8x128xf32>
    %445 = vector.extract_strided_slice %430 {offsets = [0, 384], sizes = [8, 128], strides = [1, 1]} : vector<8x512xf32> to vector<8x128xf32>
    %446 = arith.negf %445 : vector<8x128xf32>
    %447 = math.exp %446 : vector<8x128xf32>
    %cst_210 = arith.constant 1.000000e+00 : f32
    %448 = vector.broadcast %cst_210 : f32 to vector<8x128xf32>
    %449 = arith.addf %448, %447 : vector<8x128xf32>
    %450 = arith.divf %448, %449 : vector<8x128xf32>
    %451 = arith.mulf %442, %424 : vector<8x128xf32>
    %452 = arith.mulf %436, %444 : vector<8x128xf32>
    %453 = arith.addf %451, %452 : vector<8x128xf32>
    %454 = math.tanh %453 : vector<8x128xf32>
    %455 = arith.mulf %450, %454 : vector<8x128xf32>
    %c0_211 = arith.constant 0 : index
    %c0_212 = arith.constant 0 : index
    %456 = vector.load %arg18[%c0_211, %c0_212] : memref<8x128xf32, #tpu.memory_space<vmem>>, vector<8x128xf32>
    tpu.vector_store %arg18[%c0_211, %c0_212], %453 {strides = array<i32>} : memref<8x128xf32, #tpu.memory_space<vmem>>, vector<8x128xf32>,
    %c0_213 = arith.constant 0 : index
    %c0_214 = arith.constant 0 : index
    %457 = vector.load %arg17[%c0_213, %c0_214] : memref<8x128xf32, #tpu.memory_space<vmem>>, vector<8x128xf32>
    tpu.vector_store %arg17[%c0_213, %c0_214], %455 {strides = array<i32>} : memref<8x128xf32, #tpu.memory_space<vmem>>, vector<8x128xf32>,
    %458 = arith.index_cast %c7_i32 : i32 to index
    %c0_215 = arith.constant 0 : index
    %c0_216 = arith.constant 0 : index
    %459 = vector.load %arg14[%458, %c0_215, %c0_216] : memref<8x8x128xf32, #tpu.memory_space<vmem>>, vector<1x8x128xf32>
    %460 = vector.shape_cast %459 : vector<1x8x128xf32> to vector<8x128xf32>
    %461 = arith.mulf %455, %460 : vector<8x128xf32>
    %462 = arith.index_cast %c7_i32 : i32 to index
    %c0_217 = arith.constant 0 : index
    %c0_218 = arith.constant 0 : index
    %463 = vector.load %arg15[%462, %c0_217, %c0_218] : memref<8x8x128xf32, #tpu.memory_space<vmem>>, vector<1x8x128xf32>
    %464 = vector.shape_cast %463 : vector<1x8x128xf32> to vector<8x128xf32>
    %465 = arith.addf %461, %464 : vector<8x128xf32>
    %466 = arith.index_cast %c7_i32 : i32 to index
    %c0_219 = arith.constant 0 : index
    %c0_220 = arith.constant 0 : index
    %467 = vector.load %arg16[%466, %c0_219, %c0_220] : memref<8x8x128xf32, #tpu.memory_space<vmem>>, vector<1x8x128xf32>
    %468 = vector.shape_cast %467 : vector<1x8x128xf32> to vector<8x128xf32>
    %469 = vector.shape_cast %465 : vector<8x128xf32> to vector<1x8x128xf32>
    tpu.vector_store %arg16[%466, %c0_219, %c0_220], %469 {strides = array<i32>} : memref<8x8x128xf32, #tpu.memory_space<vmem>>, vector<1x8x128xf32>,
    %c8_i32 = arith.constant 8 : i32
    %c0_221 = arith.constant 0 : index
    %c0_222 = arith.constant 0 : index
    %c0_223 = arith.constant 0 : index
    %470 = vector.load %arg16[%c0_221, %c0_222, %c0_223] : memref<8x8x128xf32, #tpu.memory_space<vmem>>, vector<8x1x128xf32>
    %471 = vector.shape_cast %470 : vector<8x1x128xf32> to vector<8x128xf32>
    %c0_224 = arith.constant 0 : index
    %c0_225 = arith.constant 0 : index
    %c0_226 = arith.constant 0 : index
    %472 = vector.load %arg10[%c0_224, %c0_225, %c0_226] : memref<8x8x128xf32, #tpu.memory_space<vmem>>, vector<1x8x128xf32>
    %473 = vector.shape_cast %472 : vector<1x8x128xf32> to vector<8x128xf32>
    %474 = vector.shape_cast %471 : vector<8x128xf32> to vector<1x8x128xf32>
    tpu.vector_store %arg10[%c0_224, %c0_225, %c0_226], %474 {strides = array<i32>} : memref<8x8x128xf32, #tpu.memory_space<vmem>>, vector<1x8x128xf32>,
    %c0_227 = arith.constant 0 : index
    %c1_228 = arith.constant 1 : index
    %c0_229 = arith.constant 0 : index
    %475 = vector.load %arg16[%c0_227, %c1_228, %c0_229] : memref<8x8x128xf32, #tpu.memory_space<vmem>>, vector<8x1x128xf32>
    %476 = vector.shape_cast %475 : vector<8x1x128xf32> to vector<8x128xf32>
    %c1_230 = arith.constant 1 : index
    %c0_231 = arith.constant 0 : index
    %c0_232 = arith.constant 0 : index
    %477 = vector.load %arg10[%c1_230, %c0_231, %c0_232] : memref<8x8x128xf32, #tpu.memory_space<vmem>>, vector<1x8x128xf32>
    %478 = vector.shape_cast %477 : vector<1x8x128xf32> to vector<8x128xf32>
    %479 = vector.shape_cast %476 : vector<8x128xf32> to vector<1x8x128xf32>
    tpu.vector_store %arg10[%c1_230, %c0_231, %c0_232], %479 {strides = array<i32>} : memref<8x8x128xf32, #tpu.memory_space<vmem>>, vector<1x8x128xf32>,
    %c0_233 = arith.constant 0 : index
    %c2_234 = arith.constant 2 : index
    %c0_235 = arith.constant 0 : index
    %480 = vector.load %arg16[%c0_233, %c2_234, %c0_235] : memref<8x8x128xf32, #tpu.memory_space<vmem>>, vector<8x1x128xf32>
    %481 = vector.shape_cast %480 : vector<8x1x128xf32> to vector<8x128xf32>
    %c2_236 = arith.constant 2 : index
    %c0_237 = arith.constant 0 : index
    %c0_238 = arith.constant 0 : index
    %482 = vector.load %arg10[%c2_236, %c0_237, %c0_238] : memref<8x8x128xf32, #tpu.memory_space<vmem>>, vector<1x8x128xf32>
    %483 = vector.shape_cast %482 : vector<1x8x128xf32> to vector<8x128xf32>
    %484 = vector.shape_cast %481 : vector<8x128xf32> to vector<1x8x128xf32>
    tpu.vector_store %arg10[%c2_236, %c0_237, %c0_238], %484 {strides = array<i32>} : memref<8x8x128xf32, #tpu.memory_space<vmem>>, vector<1x8x128xf32>,
    %c0_239 = arith.constant 0 : index
    %c3_240 = arith.constant 3 : index
    %c0_241 = arith.constant 0 : index
    %485 = vector.load %arg16[%c0_239, %c3_240, %c0_241] : memref<8x8x128xf32, #tpu.memory_space<vmem>>, vector<8x1x128xf32>
    %486 = vector.shape_cast %485 : vector<8x1x128xf32> to vector<8x128xf32>
    %c3_242 = arith.constant 3 : index
    %c0_243 = arith.constant 0 : index
    %c0_244 = arith.constant 0 : index
    %487 = vector.load %arg10[%c3_242, %c0_243, %c0_244] : memref<8x8x128xf32, #tpu.memory_space<vmem>>, vector<1x8x128xf32>
    %488 = vector.shape_cast %487 : vector<1x8x128xf32> to vector<8x128xf32>
    %489 = vector.shape_cast %486 : vector<8x128xf32> to vector<1x8x128xf32>
    tpu.vector_store %arg10[%c3_242, %c0_243, %c0_244], %489 {strides = array<i32>} : memref<8x8x128xf32, #tpu.memory_space<vmem>>, vector<1x8x128xf32>,
    %c0_245 = arith.constant 0 : index
    %c4_246 = arith.constant 4 : index
    %c0_247 = arith.constant 0 : index
    %490 = vector.load %arg16[%c0_245, %c4_246, %c0_247] : memref<8x8x128xf32, #tpu.memory_space<vmem>>, vector<8x1x128xf32>
    %491 = vector.shape_cast %490 : vector<8x1x128xf32> to vector<8x128xf32>
    %c4_248 = arith.constant 4 : index
    %c0_249 = arith.constant 0 : index
    %c0_250 = arith.constant 0 : index
    %492 = vector.load %arg10[%c4_248, %c0_249, %c0_250] : memref<8x8x128xf32, #tpu.memory_space<vmem>>, vector<1x8x128xf32>
    %493 = vector.shape_cast %492 : vector<1x8x128xf32> to vector<8x128xf32>
    %494 = vector.shape_cast %491 : vector<8x128xf32> to vector<1x8x128xf32>
    tpu.vector_store %arg10[%c4_248, %c0_249, %c0_250], %494 {strides = array<i32>} : memref<8x8x128xf32, #tpu.memory_space<vmem>>, vector<1x8x128xf32>,
    %c0_251 = arith.constant 0 : index
    %c5_252 = arith.constant 5 : index
    %c0_253 = arith.constant 0 : index
    %495 = vector.load %arg16[%c0_251, %c5_252, %c0_253] : memref<8x8x128xf32, #tpu.memory_space<vmem>>, vector<8x1x128xf32>
    %496 = vector.shape_cast %495 : vector<8x1x128xf32> to vector<8x128xf32>
    %c5_254 = arith.constant 5 : index
    %c0_255 = arith.constant 0 : index
    %c0_256 = arith.constant 0 : index
    %497 = vector.load %arg10[%c5_254, %c0_255, %c0_256] : memref<8x8x128xf32, #tpu.memory_space<vmem>>, vector<1x8x128xf32>
    %498 = vector.shape_cast %497 : vector<1x8x128xf32> to vector<8x128xf32>
    %499 = vector.shape_cast %496 : vector<8x128xf32> to vector<1x8x128xf32>
    tpu.vector_store %arg10[%c5_254, %c0_255, %c0_256], %499 {strides = array<i32>} : memref<8x8x128xf32, #tpu.memory_space<vmem>>, vector<1x8x128xf32>,
    %c0_257 = arith.constant 0 : index
    %c6_258 = arith.constant 6 : index
    %c0_259 = arith.constant 0 : index
    %500 = vector.load %arg16[%c0_257, %c6_258, %c0_259] : memref<8x8x128xf32, #tpu.memory_space<vmem>>, vector<8x1x128xf32>
    %501 = vector.shape_cast %500 : vector<8x1x128xf32> to vector<8x128xf32>
    %c6_260 = arith.constant 6 : index
    %c0_261 = arith.constant 0 : index
    %c0_262 = arith.constant 0 : index
    %502 = vector.load %arg10[%c6_260, %c0_261, %c0_262] : memref<8x8x128xf32, #tpu.memory_space<vmem>>, vector<1x8x128xf32>
    %503 = vector.shape_cast %502 : vector<1x8x128xf32> to vector<8x128xf32>
    %504 = vector.shape_cast %501 : vector<8x128xf32> to vector<1x8x128xf32>
    tpu.vector_store %arg10[%c6_260, %c0_261, %c0_262], %504 {strides = array<i32>} : memref<8x8x128xf32, #tpu.memory_space<vmem>>, vector<1x8x128xf32>,
    %c0_263 = arith.constant 0 : index
    %c7_264 = arith.constant 7 : index
    %c0_265 = arith.constant 0 : index
    %505 = vector.load %arg16[%c0_263, %c7_264, %c0_265] : memref<8x8x128xf32, #tpu.memory_space<vmem>>, vector<8x1x128xf32>
    %506 = vector.shape_cast %505 : vector<8x1x128xf32> to vector<8x128xf32>
    %c7_266 = arith.constant 7 : index
    %c0_267 = arith.constant 0 : index
    %c0_268 = arith.constant 0 : index
    %507 = vector.load %arg10[%c7_266, %c0_267, %c0_268] : memref<8x8x128xf32, #tpu.memory_space<vmem>>, vector<1x8x128xf32>
    %508 = vector.shape_cast %507 : vector<1x8x128xf32> to vector<8x128xf32>
    %509 = vector.shape_cast %506 : vector<8x128xf32> to vector<1x8x128xf32>
    tpu.vector_store %arg10[%c7_266, %c0_267, %c0_268], %509 {strides = array<i32>} : memref<8x8x128xf32, #tpu.memory_space<vmem>>, vector<1x8x128xf32>,
    %c0_269 = arith.constant 0 : index
    %c0_270 = arith.constant 0 : index
    %510 = vector.load %arg17[%c0_269, %c0_270] : memref<8x128xf32, #tpu.memory_space<vmem>>, vector<8x128xf32>
    %c0_271 = arith.constant 0 : index
    %c0_272 = arith.constant 0 : index
    %511 = vector.load %arg11[%c0_271, %c0_272] : memref<8x128xf32, #tpu.memory_space<vmem>>, vector<8x128xf32>
    tpu.vector_store %arg11[%c0_271, %c0_272], %510 {strides = array<i32>} : memref<8x128xf32, #tpu.memory_space<vmem>>, vector<8x128xf32>,
    %c0_273 = arith.constant 0 : index
    %c0_274 = arith.constant 0 : index
    %512 = vector.load %arg18[%c0_273, %c0_274] : memref<8x128xf32, #tpu.memory_space<vmem>>, vector<8x128xf32>
    %c0_275 = arith.constant 0 : index
    %c0_276 = arith.constant 0 : index
    %513 = vector.load %arg12[%c0_275, %c0_276] : memref<8x128xf32, #tpu.memory_space<vmem>>, vector<8x128xf32>
    tpu.vector_store %arg12[%c0_275, %c0_276], %512 {strides = array<i32>} : memref<8x128xf32, #tpu.memory_space<vmem>>, vector<8x128xf32>,
    return
  }
  func.func @transform_0(%arg0: i32, %arg1: i32) -> (i32, i32, i32) {
    %c0_i32 = arith.constant 0 : i32
    %c0_i32_0 = arith.constant 0 : i32
    return %arg0, %arg1, %c0_i32 : i32, i32, i32
  }
  func.func @transform_1(%arg0: i32, %arg1: i32) -> (i32, i32) {
    %c0_i32 = arith.constant 0 : i32
    %c0_i32_0 = arith.constant 0 : i32
    %c0_i32_1 = arith.constant 0 : i32
    return %c0_i32, %c0_i32_0 : i32, i32
  }
  func.func @transform_2(%arg0: i32, %arg1: i32) -> (i32, i32) {
    %c0_i32 = arith.constant 0 : i32
    %c0_i32_0 = arith.constant 0 : i32
    %c0_i32_1 = arith.constant 0 : i32
    return %c0_i32, %c0_i32_0 : i32, i32
  }
  func.func @transform_3(%arg0: i32, %arg1: i32) -> (i32, i32) {
    %c0_i32 = arith.constant 0 : i32
    %c0_i32_0 = arith.constant 0 : i32
    %c0_i32_1 = arith.constant 0 : i32
    return %c0_i32, %c0_i32_0 : i32, i32
  }
  func.func @transform_4(%arg0: i32, %arg1: i32) -> (i32, i32) {
    %c0_i32 = arith.constant 0 : i32
    %c0_i32_0 = arith.constant 0 : i32
    %c0_i32_1 = arith.constant 0 : i32
    return %c0_i32, %c0_i32_0 : i32, i32
  }
  func.func @transform_5(%arg0: i32, %arg1: i32) -> (i32, i32) {
    %c0_i32 = arith.constant 0 : i32
    %c0_i32_0 = arith.constant 0 : i32
    %c0_i32_1 = arith.constant 0 : i32
    return %c0_i32, %c0_i32_0 : i32, i32
  }
  func.func @transform_6(%arg0: i32, %arg1: i32) -> (i32, i32) {
    %c0_i32 = arith.constant 0 : i32
    %c0_i32_0 = arith.constant 0 : i32
    return %arg0, %c0_i32 : i32, i32
  }
  func.func @transform_7(%arg0: i32, %arg1: i32) -> (i32, i32) {
    %c0_i32 = arith.constant 0 : i32
    %c0_i32_0 = arith.constant 0 : i32
    return %arg0, %c0_i32 : i32, i32
  }
  func.func @transform_8(%arg0: i32, %arg1: i32) -> (i32, i32, i32) {
    %c0_i32 = arith.constant 0 : i32
    %c0_i32_0 = arith.constant 0 : i32
    return %arg0, %arg1, %c0_i32 : i32, i32, i32
  }
  func.func @transform_9(%arg0: i32, %arg1: i32) -> (i32, i32) {
    %c0_i32 = arith.constant 0 : i32
    %c0_i32_0 = arith.constant 0 : i32
    return %arg0, %c0_i32 : i32, i32
  }
  func.func @transform_10(%arg0: i32, %arg1: i32) -> (i32, i32) {
    %c0_i32 = arith.constant 0 : i32
    %c0_i32_0 = arith.constant 0 : i32
    return %arg0, %c0_i32 : i32, i32
  }
}

</mosaic_0001>

<llo_original>
// kernel: tpu_custom_call.1
$region0: #{tpu_custom_call.1}
  #allocation0 [shape = 'u32[]', space=smem, size = 0x4, offset = 0x4, fixed_abs, tag = 'smem constant byte address 0x4 - core index']
  #allocation1 [shape = 'u32[144,128]{1,0:T(1,128)}', space=vmem, size = 0x12000, scoped, tag = 'internal scratch']
  #allocation2 [shape = 'f32[8,8,512]{2,1,0:T(8,128)}', space=vmem, size = 0x20000, scoped, tag = 'scratch operand']
  #allocation3 [shape = 'f32[8,8,128]{2,1,0:T(8,128)}', space=vmem, size = 0x8000, scoped, tag = 'scratch operand']
  #allocation4 [shape = 'f32[8,8,128]{2,1,0:T(8,128)}', space=vmem, size = 0x8000, scoped, tag = 'scratch operand']
  #allocation5 [shape = 'f32[8,8,128]{2,1,0:T(8,128)}', space=vmem, size = 0x8000, scoped, tag = 'scratch operand']
  #allocation6 [shape = 'f32[8,128]{1,0:T(8,128)}', space=vmem, size = 0x1000, scoped, tag = 'scratch operand']
  #allocation7 [shape = 'f32[8,128]{1,0:T(8,128)}', space=vmem, size = 0x1000, scoped, tag = 'scratch operand']
  %s0 = inlined_call_operand.hbm [shape: f32[8,8,128], index: 0, kind: input, shape index: {}]
  %s1 = inlined_call_operand.vmem [shape: f32[1,128], index: 1, kind: input, shape index: {}]
  %s2 = inlined_call_operand.vmem [shape: f32[1,128], index: 2, kind: input, shape index: {}]
  %s3 = inlined_call_operand.hbm [shape: f32[128,640], index: 3, kind: input, shape index: {}]
  %s4 = inlined_call_operand.hbm [shape: f32[128,512], index: 4, kind: input, shape index: {}]
  %s5 = inlined_call_operand.hbm [shape: f32[1,640], index: 5, kind: input, shape index: {}]
  %s6 = inlined_call_operand.vmem [shape: f32[8,128], index: 6, kind: input, shape index: {}]
  %s7 = inlined_call_operand.vmem [shape: f32[8,128], index: 7, kind: input, shape index: {}]
  %s8 = inlined_call_operand.hbm [shape: f32[8,8,128], index: 8, kind: output, shape index: {0}]
  %s9 = inlined_call_operand.hbm [shape: f32[8,128], index: 9, kind: output, shape index: {1}]
  %s10 = inlined_call_operand.hbm [shape: f32[8,128], index: 10, kind: output, shape index: {2}]
  %11 = xla_tuple %s8, %s9, %s10
  %s12 = sld [smem:[#allocation0]]
  $region78: #{tpu_custom_call.1} parent=0
    _
  %s14 = ssub.s32 1, %s12
  %s15 = scalar_select 0, %s14, %s12
  $region1: #{tpu_custom_call.1} parent=0
    #allocation8 [shape = 'u8[32768]{0}', space=vmem, size = 0x8000, scoped, tag = 'input window, operand 0, single buffered']
    #allocation9 [shape = 's32[1]{0}', space=sflag, size = 0x4, scoped, tag = 'scoped memory for tpu_custom_call.1']
    #allocation10 [shape = 's32[1]{0}', space=sflag, size = 0x4, scoped, tag = 'scoped memory for tpu_custom_call.1']
    #allocation11 [shape = 'u8[327680]{0}', space=vmem, size = 0x50000, scoped, tag = 'input window, operand 3, single buffered']
    #allocation12 [shape = 's32[1]{0}', space=sflag, size = 0x4, scoped, tag = 'scoped memory for tpu_custom_call.1']
    #allocation13 [shape = 'u8[262144]{0}', space=vmem, size = 0x40000, scoped, tag = 'input window, operand 4, single buffered']
    #allocation14 [shape = 'u8[2560]{0}', space=vmem, size = 0xc00, scoped, tag = 'input window, operand 5, single buffered']
    #allocation15 [shape = 's32[1]{0}', space=sflag, size = 0x4, scoped, tag = 'scoped memory for tpu_custom_call.1']
    #allocation16 [shape = 'u8[32768]{0}', space=vmem, size = 0x8000, scoped, tag = 'output window, operand 0, single buffered']
    #allocation17 [shape = 'u8[4096]{0}', space=vmem, size = 0x1000, scoped, tag = 'output window, operand 1, single buffered']
    #allocation18 [shape = 's32[1]{0}', space=sflag, size = 0x4, scoped, tag = 'scoped memory for tpu_custom_call.1']
    #allocation19 [shape = 'u8[4096]{0}', space=vmem, size = 0x1000, scoped, tag = 'output window, operand 2, single buffered']
    %16 = vsyncpa [#allocation9], 0
    %17 = vsyncpa [#allocation12], 0
    %18 = vsyncpa [#allocation15], 0
    %19 = vsyncpa [#allocation10], 0
    %20 = vsyncpa [#allocation18], 0
    // Predicated region
    $region2: #{tpu_custom_call.1} parent=1 // pred_check
      _
    $region3: #{tpu_custom_call.1} parent=1 // pred_check_branch
      %22 = sbr.rel (0) target = $region5
    $region4: #{tpu_custom_call.1} parent=1 // pred_region
      %s24 = ssub.s32 1024, 1024
      %25 = vsyncadd [#allocation9], %s24
      %s26 = sshll.u32 [#allocation8], 4
      %s27 = int_to_ptr.vmem [resolvable:$true] %s26
      %32 = dma.hbm_to_vmem [thread:$0]  %s0, 1024, %s27, [#allocation9], 128, 128, 8
    $region5: #{tpu_custom_call.1} parent=1 // pred_fallthru
      _
    // Predicated region
    $region6: #{tpu_custom_call.1} parent=1 // pred_check
      _
    $region7: #{tpu_custom_call.1} parent=1 // pred_check_branch
      %34 = sbr.rel (0) target = $region9
    $region8: #{tpu_custom_call.1} parent=1 // pred_region
      _
    $region9: #{tpu_custom_call.1} parent=1 // pred_fallthru
      _
    // Predicated region
    $region10: #{tpu_custom_call.1} parent=1 // pred_check
      _
    $region11: #{tpu_custom_call.1} parent=1 // pred_check_branch
      %36 = sbr.rel (0) target = $region13
    $region12: #{tpu_custom_call.1} parent=1 // pred_region
      _
    $region13: #{tpu_custom_call.1} parent=1 // pred_fallthru
      _
    // Predicated region
    $region14: #{tpu_custom_call.1} parent=1 // pred_check
      _
    $region15: #{tpu_custom_call.1} parent=1 // pred_check_branch
      %38 = sbr.rel (0) target = $region17
    $region16: #{tpu_custom_call.1} parent=1 // pred_region
      %s40 = ssub.s32 10240, 10240
      %41 = vsyncadd [#allocation12], %s40
      %s42 = sshll.u32 [#allocation11], 4
      %s43 = int_to_ptr.vmem [resolvable:$true] %s42
      %48 = dma.hbm_to_vmem [thread:$0]  %s3, 10240, %s43, [#allocation12], 640, 640, 40
    $region17: #{tpu_custom_call.1} parent=1 // pred_fallthru
      _
    // Predicated region
    $region18: #{tpu_custom_call.1} parent=1 // pred_check
      _
    $region19: #{tpu_custom_call.1} parent=1 // pred_check_branch
      %50 = sbr.rel (0) target = $region21
    $region20: #{tpu_custom_call.1} parent=1 // pred_region
      %s52 = ssub.s32 8192, 8192
      %53 = vsyncadd [#allocation12], %s52
      %s54 = sshll.u32 [#allocation13], 4
      %s55 = int_to_ptr.vmem [resolvable:$true] %s54
      %60 = dma.hbm_to_vmem [thread:$0]  %s4, 8192, %s55, [#allocation12], 512, 512, 32
    $region21: #{tpu_custom_call.1} parent=1 // pred_fallthru
      _
    // Predicated region
    $region22: #{tpu_custom_call.1} parent=1 // pred_check
      _
    $region23: #{tpu_custom_call.1} parent=1 // pred_check_branch
      %62 = sbr.rel (0) target = $region25
    $region24: #{tpu_custom_call.1} parent=1 // pred_region
      %s64 = ssub.s32 80, 80
      %65 = vsyncadd [#allocation15], %s64
      %s67 = sshll.u32 [#allocation14], 4
      %s68 = int_to_ptr.vmem [resolvable:$true] %s67
      %70 = dma.hbm_to_vmem [thread:$0]  %s5, 80, %s68, [#allocation15]
    $region25: #{tpu_custom_call.1} parent=1 // pred_fallthru
      _
    // Predicated region
    $region26: #{tpu_custom_call.1} parent=1 // pred_check
      _
    $region27: #{tpu_custom_call.1} parent=1 // pred_check_branch
      %72 = sbr.rel (0) target = $region29
    $region28: #{tpu_custom_call.1} parent=1 // pred_region
      _
    $region29: #{tpu_custom_call.1} parent=1 // pred_fallthru
      _
    // Predicated region
    $region30: #{tpu_custom_call.1} parent=1 // pred_check
      _
    $region31: #{tpu_custom_call.1} parent=1 // pred_check_branch
      %74 = sbr.rel (0) target = $region33
    $region32: #{tpu_custom_call.1} parent=1 // pred_region
      _
    $region33: #{tpu_custom_call.1} parent=1 // pred_fallthru
      _
    // Predicated region
    $region34: #{tpu_custom_call.1} parent=1 // pred_check
      _
    $region35: #{tpu_custom_call.1} parent=1 // pred_check_branch
      %76 = sbr.rel (0) target = $region37
    $region36: #{tpu_custom_call.1} parent=1 // pred_region
      %77 = dma.done [#allocation9], 1024
    $region37: #{tpu_custom_call.1} parent=1 // pred_fallthru
      _
    // Predicated region
    $region38: #{tpu_custom_call.1} parent=1 // pred_check
      _
    $region39: #{tpu_custom_call.1} parent=1 // pred_check_branch
      %79 = sbr.rel (0) target = $region41
    $region40: #{tpu_custom_call.1} parent=1 // pred_region
      %80 = dma.done [#allocation12], 10240
    $region41: #{tpu_custom_call.1} parent=1 // pred_fallthru
      _
    // Predicated region
    $region42: #{tpu_custom_call.1} parent=1 // pred_check
      _
    $region43: #{tpu_custom_call.1} parent=1 // pred_check_branch
      %82 = sbr.rel (0) target = $region45
    $region44: #{tpu_custom_call.1} parent=1 // pred_region
      %83 = dma.done [#allocation12], 8192
    $region45: #{tpu_custom_call.1} parent=1 // pred_fallthru
      _
    // Predicated region
    $region46: #{tpu_custom_call.1} parent=1 // pred_check
      _
    $region47: #{tpu_custom_call.1} parent=1 // pred_check_branch
      %85 = sbr.rel (0) target = $region49
    $region48: #{tpu_custom_call.1} parent=1 // pred_region
      %86 = dma.done [#allocation15], 80
    $region49: #{tpu_custom_call.1} parent=1 // pred_fallthru
      _
    %p87 = scmp.eq.s32.totalorder 0, 0
    // Predicated region
    $region50: #{tpu_custom_call.1} parent=1 // pred_check
      %p88 = pneg %p87
    $region51: #{tpu_custom_call.1} parent=1 // pred_check_branch
      %90 = sbr.rel (%p88) target = $region53
    $region52: #{tpu_custom_call.1} parent=1 // pred_region
      %v91 = vld [vmem:[%s6] sm:$0xff]
      %92 = vst [vmem:[#allocation6] sm:$0xff] %v91
      %v93 = vld [vmem:[%s7] sm:$0xff]
      %94 = vst [vmem:[#allocation7] sm:$0xff] %v93
    $region53: #{tpu_custom_call.1} parent=1 // pred_fallthru
      _
    %v95 = vld [vmem:[#allocation8] sm:$0xff]
    %v96 = vld [vmem:[#allocation8 + $0x8] sm:$0xff]
    %v97 = vld [vmem:[#allocation8 + $0x10] sm:$0xff]
    %v98 = vld [vmem:[#allocation8 + $0x18] sm:$0xff]
    %v99 = vld [vmem:[#allocation8 + $0x20] sm:$0xff]
    %v100 = vld [vmem:[#allocation8 + $0x28] sm:$0xff]
    %v101 = vld [vmem:[#allocation8 + $0x30] sm:$0xff]
    %v102 = vld [vmem:[#allocation8 + $0x38] sm:$0xff]
    %103 = vadd.xlane.f32.xlu0 %v95
    %v104 = vpop.xlane.xlu0 %103
    %105 = vadd.xlane.f32.xlu0 %v96
    %v106 = vpop.xlane.xlu0 %105
    %107 = vadd.xlane.f32.xlu0 %v97
    %v108 = vpop.xlane.xlu0 %107
    %109 = vadd.xlane.f32.xlu0 %v98
    %v110 = vpop.xlane.xlu0 %109
    %111 = vadd.xlane.f32.xlu0 %v99
    %v112 = vpop.xlane.xlu0 %111
    %113 = vadd.xlane.f32.xlu0 %v100
    %v114 = vpop.xlane.xlu0 %113
    %115 = vadd.xlane.f32.xlu0 %v101
    %v116 = vpop.xlane.xlu0 %115
    %117 = vadd.xlane.f32.xlu0 %v102
    %v118 = vpop.xlane.xlu0 %117
    %v119 = vmul.f32 %v104, 0.03125
    %v120 = vmul.f32 %v106, 0.03125
    %v121 = vmul.f32 %v108, 0.03125
    %v122 = vmul.f32 %v110, 0.03125
    %v123 = vmul.f32 %v112, 0.03125
    %v124 = vmul.f32 %v114, 0.03125
    %v125 = vmul.f32 %v116, 0.03125
    %v126 = vmul.f32 %v118, 0.03125
    %v127 = vsub.f32 %v95, %v119
    %v128 = vsub.f32 %v96, %v120
    %v129 = vsub.f32 %v97, %v121
    %v130 = vsub.f32 %v98, %v122
    %v131 = vsub.f32 %v99, %v123
    %v132 = vsub.f32 %v100, %v124
    %v133 = vsub.f32 %v101, %v125
    %v134 = vsub.f32 %v102, %v126
    %v135 = vlaneseq
    %v136 = vand.u32 %v135, 127
    %vm137 = vcmp.lt.s32.totalorder %v136, 32
    %v138 = vsel %vm137, 1, 0
    %vm139 = vcmp.eq.s32.totalorder %v138, 1
    %v140 = vsel %vm139, %v127, 0.0
    %v141 = vsel %vm139, %v128, 0.0
    %v142 = vsel %vm139, %v129, 0.0
    %v143 = vsel %vm139, %v130, 0.0
    %v144 = vsel %vm139, %v131, 0.0
    %v145 = vsel %vm139, %v132, 0.0
    %v146 = vsel %vm139, %v133, 0.0
    %v147 = vsel %vm139, %v134, 0.0
    %v148 = vmul.f32 %v140, %v140
    %v149 = vmul.f32 %v141, %v141
    %v150 = vmul.f32 %v142, %v142
    %v151 = vmul.f32 %v143, %v143
    %v152 = vmul.f32 %v144, %v144
    %v153 = vmul.f32 %v145, %v145
    %v154 = vmul.f32 %v146, %v146
    %v155 = vmul.f32 %v147, %v147
    %156 = vadd.xlane.f32.xlu0 %v148
    %v157 = vpop.xlane.xlu0 %156
    %158 = vadd.xlane.f32.xlu0 %v149
    %v159 = vpop.xlane.xlu0 %158
    %160 = vadd.xlane.f32.xlu0 %v150
    %v161 = vpop.xlane.xlu0 %160
    %162 = vadd.xlane.f32.xlu0 %v151
    %v163 = vpop.xlane.xlu0 %162
    %164 = vadd.xlane.f32.xlu0 %v152
    %v165 = vpop.xlane.xlu0 %164
    %166 = vadd.xlane.f32.xlu0 %v153
    %v167 = vpop.xlane.xlu0 %166
    %168 = vadd.xlane.f32.xlu0 %v154
    %v169 = vpop.xlane.xlu0 %168
    %170 = vadd.xlane.f32.xlu0 %v155
    %v171 = vpop.xlane.xlu0 %170
    %v172 = vmul.f32 %v157, 0.03125
    %v173 = vmul.f32 %v159, 0.03125
    %v174 = vmul.f32 %v161, 0.03125
    %v175 = vmul.f32 %v163, 0.03125
    %v176 = vmul.f32 %v165, 0.03125
    %v177 = vmul.f32 %v167, 0.03125
    %v178 = vmul.f32 %v169, 0.03125
    %v179 = vmul.f32 %v171, 0.03125
    %v180 = vadd.f32 %v172, 1e-05
    %v181 = vadd.f32 %v173, 1e-05
    %v182 = vadd.f32 %v174, 1e-05
    %v183 = vadd.f32 %v175, 1e-05
    %v184 = vadd.f32 %v176, 1e-05
    %v185 = vadd.f32 %v177, 1e-05
    %v186 = vadd.f32 %v178, 1e-05
    %v187 = vadd.f32 %v179, 1e-05
    %v188 = vrsqrt.pop %v180
    %v189 = vrsqrt.pop %v181
    %v190 = vrsqrt.pop %v182
    %v191 = vrsqrt.pop %v183
    %v192 = vrsqrt.pop %v184
    %v193 = vrsqrt.pop %v185
    %v194 = vrsqrt.pop %v186
    %v195 = vrsqrt.pop %v187
    %v196 = vmul.f32 %v140, %v188
    %v197 = vmul.f32 %v141, %v189
    %v198 = vmul.f32 %v142, %v190
    %v199 = vmul.f32 %v143, %v191
    %v200 = vmul.f32 %v144, %v192
    %v201 = vmul.f32 %v145, %v193
    %v202 = vmul.f32 %v146, %v194
    %v203 = vmul.f32 %v147, %v195
    %v204 = vld [vmem:[%s1] sm:$0x1]
    %v206 = vlaneseq
    %v207 = vshrl.u32 %v206, 7
    %v208 = vsub.s32 0, %v207
    %v209 = vrot.slane %v204, %v208
    %v211 = vmul.f32 %v196, %v209
    %v212 = vmul.f32 %v197, %v209
    %v213 = vmul.f32 %v198, %v209
    %v214 = vmul.f32 %v199, %v209
    %v215 = vmul.f32 %v200, %v209
    %v216 = vmul.f32 %v201, %v209
    %v217 = vmul.f32 %v202, %v209
    %v218 = vmul.f32 %v203, %v209
    %v219 = vld [vmem:[%s2] sm:$0x1]
    %v221 = vlaneseq
    %v222 = vshrl.u32 %v221, 7
    %v223 = vsub.s32 0, %v222
    %v224 = vrot.slane %v219, %v223
    %v226 = vadd.f32 %v211, %v224
    %v227 = vadd.f32 %v212, %v224
    %v228 = vadd.f32 %v213, %v224
    %v229 = vadd.f32 %v214, %v224
    %v230 = vadd.f32 %v215, %v224
    %v231 = vadd.f32 %v216, %v224
    %v232 = vadd.f32 %v217, %v224
    %v233 = vadd.f32 %v218, %v224
    %v235 = vcombine.high %v226, %v226
    %v237 = vunpack.c.l.s4 1966171168
    %v238 = vunpack.c.0.s8 %v237
    %v239 = vlaneseq
    %v240 = vshrl.u32 %v239, 7
    %v241 = vsub.s32 %v238, %v240
    %v242 = vrot.slane %v226, %v241
    %v244 = vunpack.c.l.s4 1966171168
    %v245 = vunpack.c.0.s8 %v244
    %v246 = vlaneseq
    %v247 = vshrl.u32 %v246, 7
    %v248 = vsub.s32 %v245, %v247
    %v249 = vrot.slane %v235, %v248
    %v250 = vcombine.high %v242, %v242
    %v251 = vcombine.high %v249, %v249
    %v253 = vunpack.c.l.s4 1966171168
    %v254 = vunpack.c.0.s8 %v253
    %v255 = vlaneseq
    %v256 = vshrl.u32 %v255, 7
    %v257 = vsub.s32 %v254, %v256
    %v258 = vrot.slane %v242, %v257
    %v260 = vunpack.c.l.s4 1966171168
    %v261 = vunpack.c.0.s8 %v260
    %v262 = vlaneseq
    %v263 = vshrl.u32 %v262, 7
    %v264 = vsub.s32 %v261, %v263
    %v265 = vrot.slane %v249, %v264
    %v267 = vunpack.c.l.s4 1966171168
    %v268 = vunpack.c.0.s8 %v267
    %v269 = vlaneseq
    %v270 = vshrl.u32 %v269, 7
    %v271 = vsub.s32 %v268, %v270
    %v272 = vrot.slane %v250, %v271
    %v274 = vunpack.c.l.s4 1966171168
    %v275 = vunpack.c.0.s8 %v274
    %v276 = vlaneseq
    %v277 = vshrl.u32 %v276, 7
    %v278 = vsub.s32 %v275, %v277
    %v279 = vrot.slane %v251, %v278
    %v280 = vcombine.high %v258, %v258
    %v281 = vcombine.high %v265, %v265
    %v282 = vcombine.high %v272, %v272
    %v283 = vcombine.high %v279, %v279
    %292 = vst [vmem:[#allocation4] sm:$0x1] %v258
    %293 = vst [vmem:[#allocation4 + $0x8] sm:$0x1] %v272
    %294 = vst [vmem:[#allocation4 + $0x10] sm:$0x1] %v280
    %295 = vst [vmem:[#allocation4 + $0x18] sm:$0x1] %v282
    %296 = vst [vmem:[#allocation4 + $0x20] sm:$0x1] %v265
    %297 = vst [vmem:[#allocation4 + $0x28] sm:$0x1] %v279
    %298 = vst [vmem:[#allocation4 + $0x30] sm:$0x1] %v281
    %299 = vst [vmem:[#allocation4 + $0x38] sm:$0x1] %v283
    %v301 = vcombine.high %v227, %v227
    %v303 = vunpack.c.l.s4 1966171168
    %v304 = vunpack.c.0.s8 %v303
    %v305 = vlaneseq
    %v306 = vshrl.u32 %v305, 7
    %v307 = vsub.s32 %v304, %v306
    %v308 = vrot.slane %v227, %v307
    %v310 = vunpack.c.l.s4 1966171168
    %v311 = vunpack.c.0.s8 %v310
    %v312 = vlaneseq
    %v313 = vshrl.u32 %v312, 7
    %v314 = vsub.s32 %v311, %v313
    %v315 = vrot.slane %v301, %v314
    %v316 = vcombine.high %v308, %v308
    %v317 = vcombine.high %v315, %v315
    %v319 = vunpack.c.l.s4 1966171168
    %v320 = vunpack.c.0.s8 %v319
    %v321 = vlaneseq
    %v322 = vshrl.u32 %v321, 7
    %v323 = vsub.s32 %v320, %v322
    %v324 = vrot.slane %v308, %v323
    %v326 = vunpack.c.l.s4 1966171168
    %v327 = vunpack.c.0.s8 %v326
    %v328 = vlaneseq
    %v329 = vshrl.u32 %v328, 7
    %v330 = vsub.s32 %v327, %v329
    %v331 = vrot.slane %v315, %v330
    %v333 = vunpack.c.l.s4 1966171168
    %v334 = vunpack.c.0.s8 %v333
    %v335 = vlaneseq
    %v336 = vshrl.u32 %v335, 7
    %v337 = vsub.s32 %v334, %v336
    %v338 = vrot.slane %v316, %v337
    %v340 = vunpack.c.l.s4 1966171168
    %v341 = vunpack.c.0.s8 %v340
    %v342 = vlaneseq
    %v343 = vshrl.u32 %v342, 7
    %v344 = vsub.s32 %v341, %v343
    %v345 = vrot.slane %v317, %v344
    %v346 = vcombine.high %v324, %v324
    %v347 = vcombine.high %v331, %v331
    %v348 = vcombine.high %v338, %v338
    %v349 = vcombine.high %v345, %v345
    %358 = vst [vmem:[#allocation4 + $0x1] sm:$0x1] %v324
    %359 = vst [vmem:[#allocation4 + $0x9] sm:$0x1] %v338
    %360 = vst [vmem:[#allocation4 + $0x11] sm:$0x1] %v346
    %361 = vst [vmem:[#allocation4 + $0x19] sm:$0x1] %v348
    %362 = vst [vmem:[#allocation4 + $0x21] sm:$0x1] %v331
    %363 = vst [vmem:[#allocation4 + $0x29] sm:$0x1] %v345
    %364 = vst [vmem:[#allocation4 + $0x31] sm:$0x1] %v347
    %365 = vst [vmem:[#allocation4 + $0x39] sm:$0x1] %v349
    %v367 = vcombine.high %v228, %v228
    %v369 = vunpack.c.l.s4 1966171168
    %v370 = vunpack.c.0.s8 %v369
    %v371 = vlaneseq
    %v372 = vshrl.u32 %v371, 7
    %v373 = vsub.s32 %v370, %v372
    %v374 = vrot.slane %v228, %v373
    %v376 = vunpack.c.l.s4 1966171168
    %v377 = vunpack.c.0.s8 %v376
    %v378 = vlaneseq
    %v379 = vshrl.u32 %v378, 7
    %v380 = vsub.s32 %v377, %v379
    %v381 = vrot.slane %v367, %v380
    %v382 = vcombine.high %v374, %v374
    %v383 = vcombine.high %v381, %v381
    %v385 = vunpack.c.l.s4 1966171168
    %v386 = vunpack.c.0.s8 %v385
    %v387 = vlaneseq
    %v388 = vshrl.u32 %v387, 7
    %v389 = vsub.s32 %v386, %v388
    %v390 = vrot.slane %v374, %v389
    %v392 = vunpack.c.l.s4 1966171168
    %v393 = vunpack.c.0.s8 %v392
    %v394 = vlaneseq
    %v395 = vshrl.u32 %v394, 7
    %v396 = vsub.s32 %v393, %v395
    %v397 = vrot.slane %v381, %v396
    %v399 = vunpack.c.l.s4 1966171168
    %v400 = vunpack.c.0.s8 %v399
    %v401 = vlaneseq
    %v402 = vshrl.u32 %v401, 7
    %v403 = vsub.s32 %v400, %v402
    %v404 = vrot.slane %v382, %v403
    %v406 = vunpack.c.l.s4 1966171168
    %v407 = vunpack.c.0.s8 %v406
    %v408 = vlaneseq
    %v409 = vshrl.u32 %v408, 7
    %v410 = vsub.s32 %v407, %v409
    %v411 = vrot.slane %v383, %v410
    %v412 = vcombine.high %v390, %v390
    %v413 = vcombine.high %v397, %v397
    %v414 = vcombine.high %v404, %v404
    %v415 = vcombine.high %v411, %v411
    %424 = vst [vmem:[#allocation4 + $0x2] sm:$0x1] %v390
    %425 = vst [vmem:[#allocation4 + $0xa] sm:$0x1] %v404
    %426 = vst [vmem:[#allocation4 + $0x12] sm:$0x1] %v412
    %427 = vst [vmem:[#allocation4 + $0x1a] sm:$0x1] %v414
    %428 = vst [vmem:[#allocation4 + $0x22] sm:$0x1] %v397
    %429 = vst [vmem:[#allocation4 + $0x2a] sm:$0x1] %v411
    %430 = vst [vmem:[#allocation4 + $0x32] sm:$0x1] %v413
    %431 = vst [vmem:[#allocation4 + $0x3a] sm:$0x1] %v415
    %v433 = vcombine.high %v229, %v229
    %v435 = vunpack.c.l.s4 1966171168
    %v436 = vunpack.c.0.s8 %v435
    %v437 = vlaneseq
    %v438 = vshrl.u32 %v437, 7
    %v439 = vsub.s32 %v436, %v438
    %v440 = vrot.slane %v229, %v439
    %v442 = vunpack.c.l.s4 1966171168
    %v443 = vunpack.c.0.s8 %v442
    %v444 = vlaneseq
    %v445 = vshrl.u32 %v444, 7
    %v446 = vsub.s32 %v443, %v445
    %v447 = vrot.slane %v433, %v446
    %v448 = vcombine.high %v440, %v440
    %v449 = vcombine.high %v447, %v447
    %v451 = vunpack.c.l.s4 1966171168
    %v452 = vunpack.c.0.s8 %v451
    %v453 = vlaneseq
    %v454 = vshrl.u32 %v453, 7
    %v455 = vsub.s32 %v452, %v454
    %v456 = vrot.slane %v440, %v455
    %v458 = vunpack.c.l.s4 1966171168
    %v459 = vunpack.c.0.s8 %v458
    %v460 = vlaneseq
    %v461 = vshrl.u32 %v460, 7
    %v462 = vsub.s32 %v459, %v461
    %v463 = vrot.slane %v447, %v462
    %v465 = vunpack.c.l.s4 1966171168
    %v466 = vunpack.c.0.s8 %v465
    %v467 = vlaneseq
    %v468 = vshrl.u32 %v467, 7
    %v469 = vsub.s32 %v466, %v468
    %v470 = vrot.slane %v448, %v469
    %v472 = vunpack.c.l.s4 1966171168
    %v473 = vunpack.c.0.s8 %v472
    %v474 = vlaneseq
    %v475 = vshrl.u32 %v474, 7
    %v476 = vsub.s32 %v473, %v475
    %v477 = vrot.slane %v449, %v476
    %v478 = vcombine.high %v456, %v456
    %v479 = vcombine.high %v463, %v463
    %v480 = vcombine.high %v470, %v470
    %v481 = vcombine.high %v477, %v477
    %490 = vst [vmem:[#allocation4 + $0x3] sm:$0x1] %v456
    %491 = vst [vmem:[#allocation4 + $0xb] sm:$0x1] %v470
    %492 = vst [vmem:[#allocation4 + $0x13] sm:$0x1] %v478
    %493 = vst [vmem:[#allocation4 + $0x1b] sm:$0x1] %v480
    %494 = vst [vmem:[#allocation4 + $0x23] sm:$0x1] %v463
    %495 = vst [vmem:[#allocation4 + $0x2b] sm:$0x1] %v477
    %496 = vst [vmem:[#allocation4 + $0x33] sm:$0x1] %v479
    %497 = vst [vmem:[#allocation4 + $0x3b] sm:$0x1] %v481
    %v499 = vcombine.high %v230, %v230
    %v501 = vunpack.c.l.s4 1966171168
    %v502 = vunpack.c.0.s8 %v501
    %v503 = vlaneseq
    %v504 = vshrl.u32 %v503, 7
    %v505 = vsub.s32 %v502, %v504
    %v506 = vrot.slane %v230, %v505
    %v508 = vunpack.c.l.s4 1966171168
    %v509 = vunpack.c.0.s8 %v508
    %v510 = vlaneseq
    %v511 = vshrl.u32 %v510, 7
    %v512 = vsub.s32 %v509, %v511
    %v513 = vrot.slane %v499, %v512
    %v514 = vcombine.high %v506, %v506
    %v515 = vcombine.high %v513, %v513
    %v517 = vunpack.c.l.s4 1966171168
    %v518 = vunpack.c.0.s8 %v517
    %v519 = vlaneseq
    %v520 = vshrl.u32 %v519, 7
    %v521 = vsub.s32 %v518, %v520
    %v522 = vrot.slane %v506, %v521
    %v524 = vunpack.c.l.s4 1966171168
    %v525 = vunpack.c.0.s8 %v524
    %v526 = vlaneseq
    %v527 = vshrl.u32 %v526, 7
    %v528 = vsub.s32 %v525, %v527
    %v529 = vrot.slane %v513, %v528
    %v531 = vunpack.c.l.s4 1966171168
    %v532 = vunpack.c.0.s8 %v531
    %v533 = vlaneseq
    %v534 = vshrl.u32 %v533, 7
    %v535 = vsub.s32 %v532, %v534
    %v536 = vrot.slane %v514, %v535
    %v538 = vunpack.c.l.s4 1966171168
    %v539 = vunpack.c.0.s8 %v538
    %v540 = vlaneseq
    %v541 = vshrl.u32 %v540, 7
    %v542 = vsub.s32 %v539, %v541
    %v543 = vrot.slane %v515, %v542
    %v544 = vcombine.high %v522, %v522
    %v545 = vcombine.high %v529, %v529
    %v546 = vcombine.high %v536, %v536
    %v547 = vcombine.high %v543, %v543
    %556 = vst [vmem:[#allocation4 + $0x4] sm:$0x1] %v522
    %557 = vst [vmem:[#allocation4 + $0xc] sm:$0x1] %v536
    %558 = vst [vmem:[#allocation4 + $0x14] sm:$0x1] %v544
    %559 = vst [vmem:[#allocation4 + $0x1c] sm:$0x1] %v546
    %560 = vst [vmem:[#allocation4 + $0x24] sm:$0x1] %v529
    %561 = vst [vmem:[#allocation4 + $0x2c] sm:$0x1] %v543
    %562 = vst [vmem:[#allocation4 + $0x34] sm:$0x1] %v545
    %563 = vst [vmem:[#allocation4 + $0x3c] sm:$0x1] %v547
    %v565 = vcombine.high %v231, %v231
    %v567 = vunpack.c.l.s4 1966171168
    %v568 = vunpack.c.0.s8 %v567
    %v569 = vlaneseq
    %v570 = vshrl.u32 %v569, 7
    %v571 = vsub.s32 %v568, %v570
    %v572 = vrot.slane %v231, %v571
    %v574 = vunpack.c.l.s4 1966171168
    %v575 = vunpack.c.0.s8 %v574
    %v576 = vlaneseq
    %v577 = vshrl.u32 %v576, 7
    %v578 = vsub.s32 %v575, %v577
    %v579 = vrot.slane %v565, %v578
    %v580 = vcombine.high %v572, %v572
    %v581 = vcombine.high %v579, %v579
    %v583 = vunpack.c.l.s4 1966171168
    %v584 = vunpack.c.0.s8 %v583
    %v585 = vlaneseq
    %v586 = vshrl.u32 %v585, 7
    %v587 = vsub.s32 %v584, %v586
    %v588 = vrot.slane %v572, %v587
    %v590 = vunpack.c.l.s4 1966171168
    %v591 = vunpack.c.0.s8 %v590
    %v592 = vlaneseq
    %v593 = vshrl.u32 %v592, 7
    %v594 = vsub.s32 %v591, %v593
    %v595 = vrot.slane %v579, %v594
    %v597 = vunpack.c.l.s4 1966171168
    %v598 = vunpack.c.0.s8 %v597
    %v599 = vlaneseq
    %v600 = vshrl.u32 %v599, 7
    %v601 = vsub.s32 %v598, %v600
    %v602 = vrot.slane %v580, %v601
    %v604 = vunpack.c.l.s4 1966171168
    %v605 = vunpack.c.0.s8 %v604
    %v606 = vlaneseq
    %v607 = vshrl.u32 %v606, 7
    %v608 = vsub.s32 %v605, %v607
    %v609 = vrot.slane %v581, %v608
    %v610 = vcombine.high %v588, %v588
    %v611 = vcombine.high %v595, %v595
    %v612 = vcombine.high %v602, %v602
    %v613 = vcombine.high %v609, %v609
    %622 = vst [vmem:[#allocation4 + $0x5] sm:$0x1] %v588
    %623 = vst [vmem:[#allocation4 + $0xd] sm:$0x1] %v602
    %624 = vst [vmem:[#allocation4 + $0x15] sm:$0x1] %v610
    %625 = vst [vmem:[#allocation4 + $0x1d] sm:$0x1] %v612
    %626 = vst [vmem:[#allocation4 + $0x25] sm:$0x1] %v595
    %627 = vst [vmem:[#allocation4 + $0x2d] sm:$0x1] %v609
    %628 = vst [vmem:[#allocation4 + $0x35] sm:$0x1] %v611
    %629 = vst [vmem:[#allocation4 + $0x3d] sm:$0x1] %v613
    %v631 = vcombine.high %v232, %v232
    %v633 = vunpack.c.l.s4 1966171168
    %v634 = vunpack.c.0.s8 %v633
    %v635 = vlaneseq
    %v636 = vshrl.u32 %v635, 7
    %v637 = vsub.s32 %v634, %v636
    %v638 = vrot.slane %v232, %v637
    %v640 = vunpack.c.l.s4 1966171168
    %v641 = vunpack.c.0.s8 %v640
    %v642 = vlaneseq
    %v643 = vshrl.u32 %v642, 7
    %v644 = vsub.s32 %v641, %v643
    %v645 = vrot.slane %v631, %v644
    %v646 = vcombine.high %v638, %v638
    %v647 = vcombine.high %v645, %v645
    %v649 = vunpack.c.l.s4 1966171168
    %v650 = vunpack.c.0.s8 %v649
    %v651 = vlaneseq
    %v652 = vshrl.u32 %v651, 7
    %v653 = vsub.s32 %v650, %v652
    %v654 = vrot.slane %v638, %v653
    %v656 = vunpack.c.l.s4 1966171168
    %v657 = vunpack.c.0.s8 %v656
    %v658 = vlaneseq
    %v659 = vshrl.u32 %v658, 7
    %v660 = vsub.s32 %v657, %v659
    %v661 = vrot.slane %v645, %v660
    %v663 = vunpack.c.l.s4 1966171168
    %v664 = vunpack.c.0.s8 %v663
    %v665 = vlaneseq
    %v666 = vshrl.u32 %v665, 7
    %v667 = vsub.s32 %v664, %v666
    %v668 = vrot.slane %v646, %v667
    %v670 = vunpack.c.l.s4 1966171168
    %v671 = vunpack.c.0.s8 %v670
    %v672 = vlaneseq
    %v673 = vshrl.u32 %v672, 7
    %v674 = vsub.s32 %v671, %v673
    %v675 = vrot.slane %v647, %v674
    %v676 = vcombine.high %v654, %v654
    %v677 = vcombine.high %v661, %v661
    %v678 = vcombine.high %v668, %v668
    %v679 = vcombine.high %v675, %v675
    %688 = vst [vmem:[#allocation4 + $0x6] sm:$0x1] %v654
    %689 = vst [vmem:[#allocation4 + $0xe] sm:$0x1] %v668
    %690 = vst [vmem:[#allocation4 + $0x16] sm:$0x1] %v676
    %691 = vst [vmem:[#allocation4 + $0x1e] sm:$0x1] %v678
    %692 = vst [vmem:[#allocation4 + $0x26] sm:$0x1] %v661
    %693 = vst [vmem:[#allocation4 + $0x2e] sm:$0x1] %v675
    %694 = vst [vmem:[#allocation4 + $0x36] sm:$0x1] %v677
    %695 = vst [vmem:[#allocation4 + $0x3e] sm:$0x1] %v679
    %v697 = vcombine.high %v233, %v233
    %v699 = vunpack.c.l.s4 1966171168
    %v700 = vunpack.c.0.s8 %v699
    %v701 = vlaneseq
    %v702 = vshrl.u32 %v701, 7
    %v703 = vsub.s32 %v700, %v702
    %v704 = vrot.slane %v233, %v703
    %v706 = vunpack.c.l.s4 1966171168
    %v707 = vunpack.c.0.s8 %v706
    %v708 = vlaneseq
    %v709 = vshrl.u32 %v708, 7
    %v710 = vsub.s32 %v707, %v709
    %v711 = vrot.slane %v697, %v710
    %v712 = vcombine.high %v704, %v704
    %v713 = vcombine.high %v711, %v711
    %v715 = vunpack.c.l.s4 1966171168
    %v716 = vunpack.c.0.s8 %v715
    %v717 = vlaneseq
    %v718 = vshrl.u32 %v717, 7
    %v719 = vsub.s32 %v716, %v718
    %v720 = vrot.slane %v704, %v719
    %v722 = vunpack.c.l.s4 1966171168
    %v723 = vunpack.c.0.s8 %v722
    %v724 = vlaneseq
    %v725 = vshrl.u32 %v724, 7
    %v726 = vsub.s32 %v723, %v725
    %v727 = vrot.slane %v711, %v726
    %v729 = vunpack.c.l.s4 1966171168
    %v730 = vunpack.c.0.s8 %v729
    %v731 = vlaneseq
    %v732 = vshrl.u32 %v731, 7
    %v733 = vsub.s32 %v730, %v732
    %v734 = vrot.slane %v712, %v733
    %v736 = vunpack.c.l.s4 1966171168
    %v737 = vunpack.c.0.s8 %v736
    %v738 = vlaneseq
    %v739 = vshrl.u32 %v738, 7
    %v740 = vsub.s32 %v737, %v739
    %v741 = vrot.slane %v713, %v740
    %v742 = vcombine.high %v720, %v720
    %v743 = vcombine.high %v727, %v727
    %v744 = vcombine.high %v734, %v734
    %v745 = vcombine.high %v741, %v741
    %754 = vst [vmem:[#allocation4 + $0x7] sm:$0x1] %v720
    %755 = vst [vmem:[#allocation4 + $0xf] sm:$0x1] %v734
    %756 = vst [vmem:[#allocation4 + $0x17] sm:$0x1] %v742
    %757 = vst [vmem:[#allocation4 + $0x1f] sm:$0x1] %v744
    %758 = vst [vmem:[#allocation4 + $0x27] sm:$0x1] %v727
    %759 = vst [vmem:[#allocation4 + $0x2f] sm:$0x1] %v741
    %760 = vst [vmem:[#allocation4 + $0x37] sm:$0x1] %v743
    %761 = vst [vmem:[#allocation4 + $0x3f] sm:$0x1] %v745
    %v762 = vld [vmem:[#allocation4] sm:$0xff]
    %v763 = vld [vmem:[#allocation4 + $0x8] sm:$0xff]
    %v764 = vld [vmem:[#allocation4 + $0x10] sm:$0xff]
    %v765 = vld [vmem:[#allocation4 + $0x18] sm:$0xff]
    %v766 = vld [vmem:[#allocation4 + $0x20] sm:$0xff]
    %v767 = vld [vmem:[#allocation4 + $0x28] sm:$0xff]
    %v768 = vld [vmem:[#allocation4 + $0x30] sm:$0xff]
    %v769 = vld [vmem:[#allocation4 + $0x38] sm:$0xff]
    %v770 = vld [vmem:[#allocation11] sm:$0xff]
    %v771 = vld [vmem:[#allocation11 + $0x8] sm:$0xff]
    %v772 = vld [vmem:[#allocation11 + $0x10] sm:$0xff]
    %v773 = vld [vmem:[#allocation11 + $0x18] sm:$0xff]
    %v774 = vld [vmem:[#allocation11 + $0x20] sm:$0xff]
    %v775 = vld [vmem:[#allocation11 + $0x28] sm:$0xff]
    %v776 = vld [vmem:[#allocation11 + $0x30] sm:$0xff]
    %v777 = vld [vmem:[#allocation11 + $0x38] sm:$0xff]
    %v778 = vld [vmem:[#allocation11 + $0x40] sm:$0xff]
    %v779 = vld [vmem:[#allocation11 + $0x48] sm:$0xff]
    %v780 = vld [vmem:[#allocation11 + $0x50] sm:$0xff]
    %v781 = vld [vmem:[#allocation11 + $0x58] sm:$0xff]
    %v782 = vld [vmem:[#allocation11 + $0x60] sm:$0xff]
    %v783 = vld [vmem:[#allocation11 + $0x68] sm:$0xff]
    %v784 = vld [vmem:[#allocation11 + $0x70] sm:$0xff]
    %v785 = vld [vmem:[#allocation11 + $0x78] sm:$0xff]
    %v786 = vld [vmem:[#allocation11 + $0x80] sm:$0xff]
    %v787 = vld [vmem:[#allocation11 + $0x88] sm:$0xff]
    %v788 = vld [vmem:[#allocation11 + $0x90] sm:$0xff]
    %v789 = vld [vmem:[#allocation11 + $0x98] sm:$0xff]
    %v790 = vld [vmem:[#allocation11 + $0xa0] sm:$0xff]
    %v791 = vld [vmem:[#allocation11 + $0xa8] sm:$0xff]
    %v792 = vld [vmem:[#allocation11 + $0xb0] sm:$0xff]
    %v793 = vld [vmem:[#allocation11 + $0xb8] sm:$0xff]
    %v794 = vld [vmem:[#allocation11 + $0xc0] sm:$0xff]
    %v795 = vld [vmem:[#allocation11 + $0xc8] sm:$0xff]
    %v796 = vld [vmem:[#allocation11 + $0xd0] sm:$0xff]
    %v797 = vld [vmem:[#allocation11 + $0xd8] sm:$0xff]
    %v798 = vld [vmem:[#allocation11 + $0xe0] sm:$0xff]
    %v799 = vld [vmem:[#allocation11 + $0xe8] sm:$0xff]
    %v800 = vld [vmem:[#allocation11 + $0xf0] sm:$0xff]
    %v801 = vld [vmem:[#allocation11 + $0xf8] sm:$0xff]
    %v802 = vld [vmem:[#allocation11 + $0x100] sm:$0xff]
    %v803 = vld [vmem:[#allocation11 + $0x108] sm:$0xff]
    %v804 = vld [vmem:[#allocation11 + $0x110] sm:$0xff]
    %v805 = vld [vmem:[#allocation11 + $0x118] sm:$0xff]
    %v806 = vld [vmem:[#allocation11 + $0x120] sm:$0xff]
    %v807 = vld [vmem:[#allocation11 + $0x128] sm:$0xff]
    %v808 = vld [vmem:[#allocation11 + $0x130] sm:$0xff]
    %v809 = vld [vmem:[#allocation11 + $0x138] sm:$0xff]
    %v810 = vld [vmem:[#allocation11 + $0x140] sm:$0xff]
    %v811 = vld [vmem:[#allocation11 + $0x148] sm:$0xff]
    %v812 = vld [vmem:[#allocation11 + $0x150] sm:$0xff]
    %v813 = vld [vmem:[#allocation11 + $0x158] sm:$0xff]
    %v814 = vld [vmem:[#allocation11 + $0x160] sm:$0xff]
    %v815 = vld [vmem:[#allocation11 + $0x168] sm:$0xff]
    %v816 = vld [vmem:[#allocation11 + $0x170] sm:$0xff]
    %v817 = vld [vmem:[#allocation11 + $0x178] sm:$0xff]
    %v818 = vld [vmem:[#allocation11 + $0x180] sm:$0xff]
    %v819 = vld [vmem:[#allocation11 + $0x188] sm:$0xff]
    %v820 = vld [vmem:[#allocation11 + $0x190] sm:$0xff]
    %v821 = vld [vmem:[#allocation11 + $0x198] sm:$0xff]
    %v822 = vld [vmem:[#allocation11 + $0x1a0] sm:$0xff]
    %v823 = vld [vmem:[#allocation11 + $0x1a8] sm:$0xff]
    %v824 = vld [vmem:[#allocation11 + $0x1b0] sm:$0xff]
    %v825 = vld [vmem:[#allocation11 + $0x1b8] sm:$0xff]
    %v826 = vld [vmem:[#allocation11 + $0x1c0] sm:$0xff]
    %v827 = vld [vmem:[#allocation11 + $0x1c8] sm:$0xff]
    %v828 = vld [vmem:[#allocation11 + $0x1d0] sm:$0xff]
    %v829 = vld [vmem:[#allocation11 + $0x1d8] sm:$0xff]
    %v830 = vld [vmem:[#allocation11 + $0x1e0] sm:$0xff]
    %v831 = vld [vmem:[#allocation11 + $0x1e8] sm:$0xff]
    %v832 = vld [vmem:[#allocation11 + $0x1f0] sm:$0xff]
    %v833 = vld [vmem:[#allocation11 + $0x1f8] sm:$0xff]
    %v834 = vld [vmem:[#allocation11 + $0x200] sm:$0xff]
    %v835 = vld [vmem:[#allocation11 + $0x208] sm:$0xff]
    %v836 = vld [vmem:[#allocation11 + $0x210] sm:$0xff]
    %v837 = vld [vmem:[#allocation11 + $0x218] sm:$0xff]
    %v838 = vld [vmem:[#allocation11 + $0x220] sm:$0xff]
    %v839 = vld [vmem:[#allocation11 + $0x228] sm:$0xff]
    %v840 = vld [vmem:[#allocation11 + $0x230] sm:$0xff]
    %v841 = vld [vmem:[#allocation11 + $0x238] sm:$0xff]
    %v842 = vld [vmem:[#allocation11 + $0x240] sm:$0xff]
    %v843 = vld [vmem:[#allocation11 + $0x248] sm:$0xff]
    %v844 = vld [vmem:[#allocation11 + $0x250] sm:$0xff]
    %v845 = vld [vmem:[#allocation11 + $0x258] sm:$0xff]
    %v846 = vld [vmem:[#allocation11 + $0x260] sm:$0xff]
    %v847 = vld [vmem:[#allocation11 + $0x268] sm:$0xff]
    %v848 = vld [vmem:[#allocation11 + $0x270] sm:$0xff]
    %v849 = vld [vmem:[#allocation11 + $0x278] sm:$0xff]
    %v850 = vld [vmem:[#allocation14] sm:$0x1f]
    %v852 = vlaneseq
    %v853 = vshrl.u32 %v852, 7
    %v854 = vsub.s32 0, %v853
    %v855 = vrot.slane %v850, %v854
    %v856 = vlaneseq
    %v857 = vshrl.u32 %v856, 7
    %v858 = vsub.s32 1, %v857
    %v859 = vrot.slane %v850, %v858
    %v860 = vlaneseq
    %v861 = vshrl.u32 %v860, 7
    %v862 = vsub.s32 2, %v861
    %v863 = vrot.slane %v850, %v862
    %v864 = vlaneseq
    %v865 = vshrl.u32 %v864, 7
    %v866 = vsub.s32 3, %v865
    %v867 = vrot.slane %v850, %v866
    %v868 = vlaneseq
    %v869 = vshrl.u32 %v868, 7
    %v870 = vsub.s32 4, %v869
    %v871 = vrot.slane %v850, %v870
    %877 = vmatprep.subr.mxu0 %v771
    %878 = vmatpush1.msra.mxu0 %v770
    %879 = vmatprep.subr.mxu0 %v776
    %880 = vmatpush1.msra.mxu0 %v775
    %881 = vmatprep.subr.mxu0 %v781
    %882 = vmatpush1.msra.mxu0 %v780
    %883 = vmatprep.subr.mxu0 %v786
    %884 = vmatpush1.msra.mxu0 %v785
    %885 = vmatprep.subr.mxu0 %v791
    %886 = vmatpush1.msra.mxu0 %v790
    %887 = vmatprep.subr.mxu0 %v796
    %888 = vmatpush1.msra.mxu0 %v795
    %889 = vmatprep.subr.mxu0 %v801
    %890 = vmatpush1.msra.mxu0 %v800
    %891 = vmatprep.subr.mxu0 %v806
    %892 = vmatpush1.msra.mxu0 %v805
    %893 = vmatprep.subr.mxu0 %v811
    %894 = vmatpush1.msra.mxu0 %v810
    %895 = vmatprep.subr.mxu0 %v816
    %896 = vmatpush1.msra.mxu0 %v815
    %897 = vmatprep.subr.mxu0 %v821
    %898 = vmatpush1.msra.mxu0 %v820
    %899 = vmatprep.subr.mxu0 %v826
    %900 = vmatpush1.msra.mxu0 %v825
    %901 = vmatprep.subr.mxu0 %v831
    %902 = vmatpush1.msra.mxu0 %v830
    %903 = vmatprep.subr.mxu0 %v836
    %904 = vmatpush1.msra.mxu0 %v835
    %905 = vmatprep.subr.mxu0 %v841
    %906 = vmatpush1.msra.mxu0 %v840
    %907 = vmatprep.subr.mxu0 %v846
    %908 = vmatpush1.msra.mxu0 %v845
    %909 = vmatprep.subr.mxu0 0.0
    %910 = vmatpush1.msra.mxu0 0.0
    %911 = vmatprep.subr.mxu0 0.0
    %912 = vmatpush1.msra.mxu0 0.0
    %913 = vmatprep.subr.mxu0 0.0
    %914 = vmatpush1.msra.mxu0 0.0
    %915 = vmatprep.subr.mxu0 0.0
    %916 = vmatpush1.msra.mxu0 0.0
    %917 = vmatprep.subr.mxu0 0.0
    %918 = vmatpush1.msra.mxu0 0.0
    %919 = vmatprep.subr.mxu0 0.0
    %920 = vmatpush1.msra.mxu0 0.0
    %921 = vmatprep.subr.mxu0 0.0
    %922 = vmatpush1.msra.mxu0 0.0
    %923 = vmatprep.subr.mxu0 0.0
    %924 = vmatpush1.msra.mxu0 0.0
    %925 = vmatprep.subr.mxu0 0.0
    %926 = vmatpush1.msra.mxu0 0.0
    %927 = vmatprep.subr.mxu0 0.0
    %928 = vmatpush1.msra.mxu0 0.0
    %929 = vmatprep.subr.mxu0 0.0
    %930 = vmatpush1.msra.mxu0 0.0
    %931 = vmatprep.subr.mxu0 0.0
    %932 = vmatpush1.msra.mxu0 0.0
    %933 = vmatprep.subr.mxu0 0.0
    %934 = vmatpush1.msra.mxu0 0.0
    %935 = vmatprep.subr.mxu0 0.0
    %936 = vmatpush1.msra.mxu0 0.0
    %937 = vmatprep.subr.mxu0 0.0
    %938 = vmatpush1.msra.mxu0 0.0
    %939 = vmatprep.subr.mxu0 0.0
    %940 = vmatpush1.msra.mxu0 0.0
    %941 = vmatprep.mubr.f32.mxu0 0.0
    %942 = vmatmul.mubr.f32.gmra.mrb[0].mxu0 %v762
    %v943 = vpop.f32.mrb[0].mxu0
    %v944 = vadd.f32 %v855, %v943
    %v945 = vpop.f32.mrb[0].mxu0
    %v946 = vadd.f32 %v859, %v945
    %947 = vmatprep.mubr.f32.mxu0 0.0
    %948 = vmatmul.mubr.f32.gmra.mrb[0].mxu0 %v763
    %v949 = vpop.f32.mrb[0].mxu0
    %v950 = vadd.f32 %v855, %v949
    %v951 = vpop.f32.mrb[0].mxu0
    %v952 = vadd.f32 %v859, %v951
    %953 = vmatprep.mubr.f32.mxu0 0.0
    %954 = vmatmul.mubr.f32.gmra.mrb[0].mxu0 %v764
    %v955 = vpop.f32.mrb[0].mxu0
    %v956 = vadd.f32 %v855, %v955
    %v957 = vpop.f32.mrb[0].mxu0
    %v958 = vadd.f32 %v859, %v957
    %959 = vmatprep.mubr.f32.mxu0 0.0
    %960 = vmatmul.mubr.f32.gmra.mrb[0].mxu0 %v765
    %v961 = vpop.f32.mrb[0].mxu0
    %v962 = vadd.f32 %v855, %v961
    %v963 = vpop.f32.mrb[0].mxu0
    %v964 = vadd.f32 %v859, %v963
    %965 = vmatprep.mubr.f32.mxu0 0.0
    %966 = vmatmul.mubr.f32.gmra.mrb[0].mxu0 %v766
    %v967 = vpop.f32.mrb[0].mxu0
    %v968 = vadd.f32 %v855, %v967
    %v969 = vpop.f32.mrb[0].mxu0
    %v970 = vadd.f32 %v859, %v969
    %971 = vmatprep.mubr.f32.mxu0 0.0
    %972 = vmatmul.mubr.f32.gmra.mrb[0].mxu0 %v767
    %v973 = vpop.f32.mrb[0].mxu0
    %v974 = vadd.f32 %v855, %v973
    %v975 = vpop.f32.mrb[0].mxu0
    %v976 = vadd.f32 %v859, %v975
    %977 = vmatprep.mubr.f32.mxu0 0.0
    %978 = vmatmul.mubr.f32.gmra.mrb[0].mxu0 %v768
    %v979 = vpop.f32.mrb[0].mxu0
    %v980 = vadd.f32 %v855, %v979
    %v981 = vpop.f32.mrb[0].mxu0
    %v982 = vadd.f32 %v859, %v981
    %983 = vmatprep.mubr.f32.mxu0 0.0
    %984 = vmatmul.mubr.f32.gmra.mrb[0].mxu0 %v769
    %v985 = vpop.f32.mrb[0].mxu0
    %v986 = vadd.f32 %v855, %v985
    %v987 = vpop.f32.mrb[0].mxu0
    %v988 = vadd.f32 %v859, %v987
    %989 = vdwg.mxu0
    %990 = vmatprep.subr.mxu0 %v773
    %991 = vmatpush1.msra.mxu0 %v772
    %992 = vmatprep.subr.mxu0 %v778
    %993 = vmatpush1.msra.mxu0 %v777
    %994 = vmatprep.subr.mxu0 %v783
    %995 = vmatpush1.msra.mxu0 %v782
    %996 = vmatprep.subr.mxu0 %v788
    %997 = vmatpush1.msra.mxu0 %v787
    %998 = vmatprep.subr.mxu0 %v793
    %999 = vmatpush1.msra.mxu0 %v792
    %1000 = vmatprep.subr.mxu0 %v798
    %1001 = vmatpush1.msra.mxu0 %v797
    %1002 = vmatprep.subr.mxu0 %v803
    %1003 = vmatpush1.msra.mxu0 %v802
    %1004 = vmatprep.subr.mxu0 %v808
    %1005 = vmatpush1.msra.mxu0 %v807
    %1006 = vmatprep.subr.mxu0 %v813
    %1007 = vmatpush1.msra.mxu0 %v812
    %1008 = vmatprep.subr.mxu0 %v818
    %1009 = vmatpush1.msra.mxu0 %v817
    %1010 = vmatprep.subr.mxu0 %v823
    %1011 = vmatpush1.msra.mxu0 %v822
    %1012 = vmatprep.subr.mxu0 %v828
    %1013 = vmatpush1.msra.mxu0 %v827
    %1014 = vmatprep.subr.mxu0 %v833
    %1015 = vmatpush1.msra.mxu0 %v832
    %1016 = vmatprep.subr.mxu0 %v838
    %1017 = vmatpush1.msra.mxu0 %v837
    %1018 = vmatprep.subr.mxu0 %v843
    %1019 = vmatpush1.msra.mxu0 %v842
    %1020 = vmatprep.subr.mxu0 %v848
    %1021 = vmatpush1.msra.mxu0 %v847
    %1022 = vmatprep.subr.mxu0 0.0
    %1023 = vmatpush1.msra.mxu0 0.0
    %1024 = vmatprep.subr.mxu0 0.0
    %1025 = vmatpush1.msra.mxu0 0.0
    %1026 = vmatprep.subr.mxu0 0.0
    %1027 = vmatpush1.msra.mxu0 0.0
    %1028 = vmatprep.subr.mxu0 0.0
    %1029 = vmatpush1.msra.mxu0 0.0
    %1030 = vmatprep.subr.mxu0 0.0
    %1031 = vmatpush1.msra.mxu0 0.0
    %1032 = vmatprep.subr.mxu0 0.0
    %1033 = vmatpush1.msra.mxu0 0.0
    %1034 = vmatprep.subr.mxu0 0.0
    %1035 = vmatpush1.msra.mxu0 0.0
    %1036 = vmatprep.subr.mxu0 0.0
    %1037 = vmatpush1.msra.mxu0 0.0
    %1038 = vmatprep.subr.mxu0 0.0
    %1039 = vmatpush1.msra.mxu0 0.0
    %1040 = vmatprep.subr.mxu0 0.0
    %1041 = vmatpush1.msra.mxu0 0.0
    %1042 = vmatprep.subr.mxu0 0.0
    %1043 = vmatpush1.msra.mxu0 0.0
    %1044 = vmatprep.subr.mxu0 0.0
    %1045 = vmatpush1.msra.mxu0 0.0
    %1046 = vmatprep.subr.mxu0 0.0
    %1047 = vmatpush1.msra.mxu0 0.0
    %1048 = vmatprep.subr.mxu0 0.0
    %1049 = vmatpush1.msra.mxu0 0.0
    %1050 = vmatprep.subr.mxu0 0.0
    %1051 = vmatpush1.msra.mxu0 0.0
    %1052 = vmatprep.subr.mxu0 0.0
    %1053 = vmatpush1.msra.mxu0 0.0
    %1054 = vmatprep.mubr.f32.mxu0 0.0
    %1055 = vmatmul.mubr.f32.gmra.mrb[0].mxu0 %v762
    %v1056 = vpop.f32.mrb[0].mxu0
    %v1057 = vadd.f32 %v863, %v1056
    %v1058 = vpop.f32.mrb[0].mxu0
    %v1059 = vadd.f32 %v867, %v1058
    %1060 = vmatprep.mubr.f32.mxu0 0.0
    %1061 = vmatmul.mubr.f32.gmra.mrb[0].mxu0 %v763
    %v1062 = vpop.f32.mrb[0].mxu0
    %v1063 = vadd.f32 %v863, %v1062
    %v1064 = vpop.f32.mrb[0].mxu0
    %v1065 = vadd.f32 %v867, %v1064
    %1066 = vmatprep.mubr.f32.mxu0 0.0
    %1067 = vmatmul.mubr.f32.gmra.mrb[0].mxu0 %v764
    %v1068 = vpop.f32.mrb[0].mxu0
    %v1069 = vadd.f32 %v863, %v1068
    %v1070 = vpop.f32.mrb[0].mxu0
    %v1071 = vadd.f32 %v867, %v1070
    %1072 = vmatprep.mubr.f32.mxu0 0.0
    %1073 = vmatmul.mubr.f32.gmra.mrb[0].mxu0 %v765
    %v1074 = vpop.f32.mrb[0].mxu0
    %v1075 = vadd.f32 %v863, %v1074
    %v1076 = vpop.f32.mrb[0].mxu0
    %v1077 = vadd.f32 %v867, %v1076
    %1078 = vmatprep.mubr.f32.mxu0 0.0
    %1079 = vmatmul.mubr.f32.gmra.mrb[0].mxu0 %v766
    %v1080 = vpop.f32.mrb[0].mxu0
    %v1081 = vadd.f32 %v863, %v1080
    %v1082 = vpop.f32.mrb[0].mxu0
    %v1083 = vadd.f32 %v867, %v1082
    %1084 = vmatprep.mubr.f32.mxu0 0.0
    %1085 = vmatmul.mubr.f32.gmra.mrb[0].mxu0 %v767
    %v1086 = vpop.f32.mrb[0].mxu0
    %v1087 = vadd.f32 %v863, %v1086
    %v1088 = vpop.f32.mrb[0].mxu0
    %v1089 = vadd.f32 %v867, %v1088
    %1090 = vmatprep.mubr.f32.mxu0 0.0
    %1091 = vmatmul.mubr.f32.gmra.mrb[0].mxu0 %v768
    %v1092 = vpop.f32.mrb[0].mxu0
    %v1093 = vadd.f32 %v863, %v1092
    %v1094 = vpop.f32.mrb[0].mxu0
    %v1095 = vadd.f32 %v867, %v1094
    %1096 = vmatprep.mubr.f32.mxu0 0.0
    %1097 = vmatmul.mubr.f32.gmra.mrb[0].mxu0 %v769
    %v1098 = vpop.f32.mrb[0].mxu0
    %v1099 = vadd.f32 %v863, %v1098
    %v1100 = vpop.f32.mrb[0].mxu0
    %v1101 = vadd.f32 %v867, %v1100
    %1102 = vdwg.mxu0
    %1103 = vmatprep.subr.mxu0 0.0
    %1104 = vmatpush1.msra.mxu0 %v774
    %1105 = vmatprep.subr.mxu0 0.0
    %1106 = vmatpush1.msra.mxu0 %v779
    %1107 = vmatprep.subr.mxu0 0.0
    %1108 = vmatpush1.msra.mxu0 %v784
    %1109 = vmatprep.subr.mxu0 0.0
    %1110 = vmatpush1.msra.mxu0 %v789
    %1111 = vmatprep.subr.mxu0 0.0
    %1112 = vmatpush1.msra.mxu0 %v794
    %1113 = vmatprep.subr.mxu0 0.0
    %1114 = vmatpush1.msra.mxu0 %v799
    %1115 = vmatprep.subr.mxu0 0.0
    %1116 = vmatpush1.msra.mxu0 %v804
    %1117 = vmatprep.subr.mxu0 0.0
    %1118 = vmatpush1.msra.mxu0 %v809
    %1119 = vmatprep.subr.mxu0 0.0
    %1120 = vmatpush1.msra.mxu0 %v814
    %1121 = vmatprep.subr.mxu0 0.0
    %1122 = vmatpush1.msra.mxu0 %v819
    %1123 = vmatprep.subr.mxu0 0.0
    %1124 = vmatpush1.msra.mxu0 %v824
    %1125 = vmatprep.subr.mxu0 0.0
    %1126 = vmatpush1.msra.mxu0 %v829
    %1127 = vmatprep.subr.mxu0 0.0
    %1128 = vmatpush1.msra.mxu0 %v834
    %1129 = vmatprep.subr.mxu0 0.0
    %1130 = vmatpush1.msra.mxu0 %v839
    %1131 = vmatprep.subr.mxu0 0.0
    %1132 = vmatpush1.msra.mxu0 %v844
    %1133 = vmatprep.subr.mxu0 0.0
    %1134 = vmatpush1.msra.mxu0 %v849
    %1135 = vmatprep.subr.mxu0 0.0
    %1136 = vmatpush1.msra.mxu0 0.0
    %1137 = vmatprep.subr.mxu0 0.0
    %1138 = vmatpush1.msra.mxu0 0.0
    %1139 = vmatprep.subr.mxu0 0.0
    %1140 = vmatpush1.msra.mxu0 0.0
    %1141 = vmatprep.subr.mxu0 0.0
    %1142 = vmatpush1.msra.mxu0 0.0
    %1143 = vmatprep.subr.mxu0 0.0
    %1144 = vmatpush1.msra.mxu0 0.0
    %1145 = vmatprep.subr.mxu0 0.0
    %1146 = vmatpush1.msra.mxu0 0.0
    %1147 = vmatprep.subr.mxu0 0.0
    %1148 = vmatpush1.msra.mxu0 0.0
    %1149 = vmatprep.subr.mxu0 0.0
    %1150 = vmatpush1.msra.mxu0 0.0
    %1151 = vmatprep.subr.mxu0 0.0
    %1152 = vmatpush1.msra.mxu0 0.0
    %1153 = vmatprep.subr.mxu0 0.0
    %1154 = vmatpush1.msra.mxu0 0.0
    %1155 = vmatprep.subr.mxu0 0.0
    %1156 = vmatpush1.msra.mxu0 0.0
    %1157 = vmatprep.subr.mxu0 0.0
    %1158 = vmatpush1.msra.mxu0 0.0
    %1159 = vmatprep.subr.mxu0 0.0
    %1160 = vmatpush1.msra.mxu0 0.0
    %1161 = vmatprep.subr.mxu0 0.0
    %1162 = vmatpush1.msra.mxu0 0.0
    %1163 = vmatprep.subr.mxu0 0.0
    %1164 = vmatpush1.msra.mxu0 0.0
    %1165 = vmatprep.subr.mxu0 0.0
    %1166 = vmatpush1.msra.mxu0 0.0
    %1167 = vmatprep.mubr.f32.mxu0 0.0
    %1168 = vmatmul.mubr.f32.gmra.mrb[0].mxu0 %v762
    %v1169 = vpop.f32.mrb[0].mxu0
    %v1170 = vadd.f32 %v871, %v1169
    %v1171 = vpop.f32.mrb[0].mxu0
    %1172 = vmatprep.mubr.f32.mxu0 0.0
    %1173 = vmatmul.mubr.f32.gmra.mrb[0].mxu0 %v763
    %v1174 = vpop.f32.mrb[0].mxu0
    %v1175 = vadd.f32 %v871, %v1174
    %v1176 = vpop.f32.mrb[0].mxu0
    %1177 = vmatprep.mubr.f32.mxu0 0.0
    %1178 = vmatmul.mubr.f32.gmra.mrb[0].mxu0 %v764
    %v1179 = vpop.f32.mrb[0].mxu0
    %v1180 = vadd.f32 %v871, %v1179
    %v1181 = vpop.f32.mrb[0].mxu0
    %1182 = vmatprep.mubr.f32.mxu0 0.0
    %1183 = vmatmul.mubr.f32.gmra.mrb[0].mxu0 %v765
    %v1184 = vpop.f32.mrb[0].mxu0
    %v1185 = vadd.f32 %v871, %v1184
    %v1186 = vpop.f32.mrb[0].mxu0
    %1187 = vmatprep.mubr.f32.mxu0 0.0
    %1188 = vmatmul.mubr.f32.gmra.mrb[0].mxu0 %v766
    %v1189 = vpop.f32.mrb[0].mxu0
    %v1190 = vadd.f32 %v871, %v1189
    %v1191 = vpop.f32.mrb[0].mxu0
    %1192 = vmatprep.mubr.f32.mxu0 0.0
    %1193 = vmatmul.mubr.f32.gmra.mrb[0].mxu0 %v767
    %v1194 = vpop.f32.mrb[0].mxu0
    %v1195 = vadd.f32 %v871, %v1194
    %v1196 = vpop.f32.mrb[0].mxu0
    %1197 = vmatprep.mubr.f32.mxu0 0.0
    %1198 = vmatmul.mubr.f32.gmra.mrb[0].mxu0 %v768
    %v1199 = vpop.f32.mrb[0].mxu0
    %v1200 = vadd.f32 %v871, %v1199
    %v1201 = vpop.f32.mrb[0].mxu0
    %1202 = vmatprep.mubr.f32.mxu0 0.0
    %1203 = vmatmul.mubr.f32.gmra.mrb[0].mxu0 %v769
    %v1204 = vpop.f32.mrb[0].mxu0
    %v1205 = vadd.f32 %v871, %v1204
    %v1206 = vpop.f32.mrb[0].mxu0
    %1207 = vdwg.mxu0
    %1208 = vst [vmem:[#allocation2] sm:$0xff] %v944
    %1209 = vst [vmem:[#allocation2 + $0x8] sm:$0xff] %v946
    %1210 = vst [vmem:[#allocation2 + $0x10] sm:$0xff] %v1057
    %1211 = vst [vmem:[#allocation2 + $0x18] sm:$0xff] %v1059
    %1212 = vst [vmem:[#allocation2 + $0x20] sm:$0xff] %v950
    %1213 = vst [vmem:[#allocation2 + $0x28] sm:$0xff] %v952
    %1214 = vst [vmem:[#allocation2 + $0x30] sm:$0xff] %v1063
    %1215 = vst [vmem:[#allocation2 + $0x38] sm:$0xff] %v1065
    %1216 = vst [vmem:[#allocation2 + $0x40] sm:$0xff] %v956
    %1217 = vst [vmem:[#allocation2 + $0x48] sm:$0xff] %v958
    %1218 = vst [vmem:[#allocation2 + $0x50] sm:$0xff] %v1069
    %1219 = vst [vmem:[#allocation2 + $0x58] sm:$0xff] %v1071
    %1220 = vst [vmem:[#allocation2 + $0x60] sm:$0xff] %v962
    %1221 = vst [vmem:[#allocation2 + $0x68] sm:$0xff] %v964
    %1222 = vst [vmem:[#allocation2 + $0x70] sm:$0xff] %v1075
    %1223 = vst [vmem:[#allocation2 + $0x78] sm:$0xff] %v1077
    %1224 = vst [vmem:[#allocation2 + $0x80] sm:$0xff] %v968
    %1225 = vst [vmem:[#allocation2 + $0x88] sm:$0xff] %v970
    %1226 = vst [vmem:[#allocation2 + $0x90] sm:$0xff] %v1081
    %1227 = vst [vmem:[#allocation2 + $0x98] sm:$0xff] %v1083
    %1228 = vst [vmem:[#allocation2 + $0xa0] sm:$0xff] %v974
    %1229 = vst [vmem:[#allocation2 + $0xa8] sm:$0xff] %v976
    %1230 = vst [vmem:[#allocation2 + $0xb0] sm:$0xff] %v1087
    %1231 = vst [vmem:[#allocation2 + $0xb8] sm:$0xff] %v1089
    %1232 = vst [vmem:[#allocation2 + $0xc0] sm:$0xff] %v980
    %1233 = vst [vmem:[#allocation2 + $0xc8] sm:$0xff] %v982
    %1234 = vst [vmem:[#allocation2 + $0xd0] sm:$0xff] %v1093
    %1235 = vst [vmem:[#allocation2 + $0xd8] sm:$0xff] %v1095
    %1236 = vst [vmem:[#allocation2 + $0xe0] sm:$0xff] %v986
    %1237 = vst [vmem:[#allocation2 + $0xe8] sm:$0xff] %v988
    %1238 = vst [vmem:[#allocation2 + $0xf0] sm:$0xff] %v1099
    %1239 = vst [vmem:[#allocation2 + $0xf8] sm:$0xff] %v1101
    %v1240 = vxor.u32 %v1170, 2147483648
    %v1241 = vxor.u32 %v1175, 2147483648
    %v1242 = vxor.u32 %v1180, 2147483648
    %v1243 = vxor.u32 %v1185, 2147483648
    %v1244 = vxor.u32 %v1190, 2147483648
    %v1245 = vxor.u32 %v1195, 2147483648
    %v1246 = vxor.u32 %v1200, 2147483648
    %v1247 = vxor.u32 %v1205, 2147483648
    %v1248 = vmul.f32 %v1240, 1.442695
    %v1249 = vpow.pop %v1248
    %v1250 = vmul.f32 %v1241, 1.442695
    %v1251 = vpow.pop %v1250
    %v1252 = vmul.f32 %v1242, 1.442695
    %v1253 = vpow.pop %v1252
    %v1254 = vmul.f32 %v1243, 1.442695
    %v1255 = vpow.pop %v1254
    %v1256 = vmul.f32 %v1244, 1.442695
    %v1257 = vpow.pop %v1256
    %v1258 = vmul.f32 %v1245, 1.442695
    %v1259 = vpow.pop %v1258
    %v1260 = vmul.f32 %v1246, 1.442695
    %v1261 = vpow.pop %v1260
    %v1262 = vmul.f32 %v1247, 1.442695
    %v1263 = vpow.pop %v1262
    %v1264 = vadd.f32 %v1249, 1.0
    %v1265 = vadd.f32 %v1251, 1.0
    %v1266 = vadd.f32 %v1253, 1.0
    %v1267 = vadd.f32 %v1255, 1.0
    %v1268 = vadd.f32 %v1257, 1.0
    %v1269 = vadd.f32 %v1259, 1.0
    %v1270 = vadd.f32 %v1261, 1.0
    %v1271 = vadd.f32 %v1263, 1.0
    %v1272 = vrcp.pop %v1264
    %v1273 = vmul.f32 1.0, %v1272
    %v1274 = vrcp.pop %v1265
    %v1275 = vmul.f32 1.0, %v1274
    %v1276 = vrcp.pop %v1266
    %v1277 = vmul.f32 1.0, %v1276
    %v1278 = vrcp.pop %v1267
    %v1279 = vmul.f32 1.0, %v1278
    %v1280 = vrcp.pop %v1268
    %v1281 = vmul.f32 1.0, %v1280
    %v1282 = vrcp.pop %v1269
    %v1283 = vmul.f32 1.0, %v1282
    %v1284 = vrcp.pop %v1270
    %v1285 = vmul.f32 1.0, %v1284
    %v1286 = vrcp.pop %v1271
    %v1287 = vmul.f32 1.0, %v1286
    %v1288 = vmul.f32 %v1170, %v1273
    %v1289 = vmul.f32 %v1175, %v1275
    %v1290 = vmul.f32 %v1180, %v1277
    %v1291 = vmul.f32 %v1185, %v1279
    %v1292 = vmul.f32 %v1190, %v1281
    %v1293 = vmul.f32 %v1195, %v1283
    %v1294 = vmul.f32 %v1200, %v1285
    %v1295 = vmul.f32 %v1205, %v1287
    %1296 = vst [vmem:[#allocation3] sm:$0xff] %v1288
    %1297 = vst [vmem:[#allocation3 + $0x8] sm:$0xff] %v1289
    %1298 = vst [vmem:[#allocation3 + $0x10] sm:$0xff] %v1290
    %1299 = vst [vmem:[#allocation3 + $0x18] sm:$0xff] %v1291
    %1300 = vst [vmem:[#allocation3 + $0x20] sm:$0xff] %v1292
    %1301 = vst [vmem:[#allocation3 + $0x28] sm:$0xff] %v1293
    %1302 = vst [vmem:[#allocation3 + $0x30] sm:$0xff] %v1294
    %1303 = vst [vmem:[#allocation3 + $0x38] sm:$0xff] %v1295
    %v1304 = vld [vmem:[#allocation6] sm:$0xff]
    %v1305 = vld [vmem:[#allocation7] sm:$0xff]
    %v1306 = vld [vmem:[#allocation2] sm:$0xff]
    %v1307 = vld [vmem:[#allocation2 + $0x8] sm:$0xff]
    %v1308 = vld [vmem:[#allocation2 + $0x10] sm:$0xff]
    %v1309 = vld [vmem:[#allocation2 + $0x18] sm:$0xff]
    %v1310 = vld [vmem:[#allocation13] sm:$0xff]
    %v1311 = vld [vmem:[#allocation13 + $0x8] sm:$0xff]
    %v1312 = vld [vmem:[#allocation13 + $0x10] sm:$0xff]
    %v1313 = vld [vmem:[#allocation13 + $0x18] sm:$0xff]
    %v1314 = vld [vmem:[#allocation13 + $0x20] sm:$0xff]
    %v1315 = vld [vmem:[#allocation13 + $0x28] sm:$0xff]
    %v1316 = vld [vmem:[#allocation13 + $0x30] sm:$0xff]
    %v1317 = vld [vmem:[#allocation13 + $0x38] sm:$0xff]
    %v1318 = vld [vmem:[#allocation13 + $0x40] sm:$0xff]
    %v1319 = vld [vmem:[#allocation13 + $0x48] sm:$0xff]
    %v1320 = vld [vmem:[#allocation13 + $0x50] sm:$0xff]
    %v1321 = vld [vmem:[#allocation13 + $0x58] sm:$0xff]
    %v1322 = vld [vmem:[#allocation13 + $0x60] sm:$0xff]
    %v1323 = vld [vmem:[#allocation13 + $0x68] sm:$0xff]
    %v1324 = vld [vmem:[#allocation13 + $0x70] sm:$0xff]
    %v1325 = vld [vmem:[#allocation13 + $0x78] sm:$0xff]
    %v1326 = vld [vmem:[#allocation13 + $0x80] sm:$0xff]
    %v1327 = vld [vmem:[#allocation13 + $0x88] sm:$0xff]
    %v1328 = vld [vmem:[#allocation13 + $0x90] sm:$0xff]
    %v1329 = vld [vmem:[#allocation13 + $0x98] sm:$0xff]
    %v1330 = vld [vmem:[#allocation13 + $0xa0] sm:$0xff]
    %v1331 = vld [vmem:[#allocation13 + $0xa8] sm:$0xff]
    %v1332 = vld [vmem:[#allocation13 + $0xb0] sm:$0xff]
    %v1333 = vld [vmem:[#allocation13 + $0xb8] sm:$0xff]
    %v1334 = vld [vmem:[#allocation13 + $0xc0] sm:$0xff]
    %v1335 = vld [vmem:[#allocation13 + $0xc8] sm:$0xff]
    %v1336 = vld [vmem:[#allocation13 + $0xd0] sm:$0xff]
    %v1337 = vld [vmem:[#allocation13 + $0xd8] sm:$0xff]
    %v1338 = vld [vmem:[#allocation13 + $0xe0] sm:$0xff]
    %v1339 = vld [vmem:[#allocation13 + $0xe8] sm:$0xff]
    %v1340 = vld [vmem:[#allocation13 + $0xf0] sm:$0xff]
    %v1341 = vld [vmem:[#allocation13 + $0xf8] sm:$0xff]
    %v1342 = vld [vmem:[#allocation13 + $0x100] sm:$0xff]
    %v1343 = vld [vmem:[#allocation13 + $0x108] sm:$0xff]
    %v1344 = vld [vmem:[#allocation13 + $0x110] sm:$0xff]
    %v1345 = vld [vmem:[#allocation13 + $0x118] sm:$0xff]
    %v1346 = vld [vmem:[#allocation13 + $0x120] sm:$0xff]
    %v1347 = vld [vmem:[#allocation13 + $0x128] sm:$0xff]
    %v1348 = vld [vmem:[#allocation13 + $0x130] sm:$0xff]
    %v1349 = vld [vmem:[#allocation13 + $0x138] sm:$0xff]
    %v1350 = vld [vmem:[#allocation13 + $0x140] sm:$0xff]
    %v1351 = vld [vmem:[#allocation13 + $0x148] sm:$0xff]
    %v1352 = vld [vmem:[#allocation13 + $0x150] sm:$0xff]
    %v1353 = vld [vmem:[#allocation13 + $0x158] sm:$0xff]
    %v1354 = vld [vmem:[#allocation13 + $0x160] sm:$0xff]
    %v1355 = vld [vmem:[#allocation13 + $0x168] sm:$0xff]
    %v1356 = vld [vmem:[#allocation13 + $0x170] sm:$0xff]
    %v1357 = vld [vmem:[#allocation13 + $0x178] sm:$0xff]
    %v1358 = vld [vmem:[#allocation13 + $0x180] sm:$0xff]
    %v1359 = vld [vmem:[#allocation13 + $0x188] sm:$0xff]
    %v1360 = vld [vmem:[#allocation13 + $0x190] sm:$0xff]
    %v1361 = vld [vmem:[#allocation13 + $0x198] sm:$0xff]
    %v1362 = vld [vmem:[#allocation13 + $0x1a0] sm:$0xff]
    %v1363 = vld [vmem:[#allocation13 + $0x1a8] sm:$0xff]
    %v1364 = vld [vmem:[#allocation13 + $0x1b0] sm:$0xff]
    %v1365 = vld [vmem:[#allocation13 + $0x1b8] sm:$0xff]
    %v1366 = vld [vmem:[#allocation13 + $0x1c0] sm:$0xff]
    %v1367 = vld [vmem:[#allocation13 + $0x1c8] sm:$0xff]
    %v1368 = vld [vmem:[#allocation13 + $0x1d0] sm:$0xff]
    %v1369 = vld [vmem:[#allocation13 + $0x1d8] sm:$0xff]
    %v1370 = vld [vmem:[#allocation13 + $0x1e0] sm:$0xff]
    %v1371 = vld [vmem:[#allocation13 + $0x1e8] sm:$0xff]
    %v1372 = vld [vmem:[#allocation13 + $0x1f0] sm:$0xff]
    %v1373 = vld [vmem:[#allocation13 + $0x1f8] sm:$0xff]
    %1374 = vmatprep.subr.mxu0 %v1311
    %1375 = vmatpush1.msra.mxu0 %v1310
    %1376 = vmatprep.subr.mxu0 %v1315
    %1377 = vmatpush1.msra.mxu0 %v1314
    %1378 = vmatprep.subr.mxu0 %v1319
    %1379 = vmatpush1.msra.mxu0 %v1318
    %1380 = vmatprep.subr.mxu0 %v1323
    %1381 = vmatpush1.msra.mxu0 %v1322
    %1382 = vmatprep.subr.mxu0 %v1327
    %1383 = vmatpush1.msra.mxu0 %v1326
    %1384 = vmatprep.subr.mxu0 %v1331
    %1385 = vmatpush1.msra.mxu0 %v1330
    %1386 = vmatprep.subr.mxu0 %v1335
    %1387 = vmatpush1.msra.mxu0 %v1334
    %1388 = vmatprep.subr.mxu0 %v1339
    %1389 = vmatpush1.msra.mxu0 %v1338
    %1390 = vmatprep.subr.mxu0 %v1343
    %1391 = vmatpush1.msra.mxu0 %v1342
    %1392 = vmatprep.subr.mxu0 %v1347
    %1393 = vmatpush1.msra.mxu0 %v1346
    %1394 = vmatprep.subr.mxu0 %v1351
    %1395 = vmatpush1.msra.mxu0 %v1350
    %1396 = vmatprep.subr.mxu0 %v1355
    %1397 = vmatpush1.msra.mxu0 %v1354
    %1398 = vmatprep.subr.mxu0 %v1359
    %1399 = vmatpush1.msra.mxu0 %v1358
    %1400 = vmatprep.subr.mxu0 %v1363
    %1401 = vmatpush1.msra.mxu0 %v1362
    %1402 = vmatprep.subr.mxu0 %v1367
    %1403 = vmatpush1.msra.mxu0 %v1366
    %1404 = vmatprep.subr.mxu0 %v1371
    %1405 = vmatpush1.msra.mxu0 %v1370
    %1406 = vmatprep.subr.mxu0 0.0
    %1407 = vmatpush1.msra.mxu0 0.0
    %1408 = vmatprep.subr.mxu0 0.0
    %1409 = vmatpush1.msra.mxu0 0.0
    %1410 = vmatprep.subr.mxu0 0.0
    %1411 = vmatpush1.msra.mxu0 0.0
    %1412 = vmatprep.subr.mxu0 0.0
    %1413 = vmatpush1.msra.mxu0 0.0
    %1414 = vmatprep.subr.mxu0 0.0
    %1415 = vmatpush1.msra.mxu0 0.0
    %1416 = vmatprep.subr.mxu0 0.0
    %1417 = vmatpush1.msra.mxu0 0.0
    %1418 = vmatprep.subr.mxu0 0.0
    %1419 = vmatpush1.msra.mxu0 0.0
    %1420 = vmatprep.subr.mxu0 0.0
    %1421 = vmatpush1.msra.mxu0 0.0
    %1422 = vmatprep.subr.mxu0 0.0
    %1423 = vmatpush1.msra.mxu0 0.0
    %1424 = vmatprep.subr.mxu0 0.0
    %1425 = vmatpush1.msra.mxu0 0.0
    %1426 = vmatprep.subr.mxu0 0.0
    %1427 = vmatpush1.msra.mxu0 0.0
    %1428 = vmatprep.subr.mxu0 0.0
    %1429 = vmatpush1.msra.mxu0 0.0
    %1430 = vmatprep.subr.mxu0 0.0
    %1431 = vmatpush1.msra.mxu0 0.0
    %1432 = vmatprep.subr.mxu0 0.0
    %1433 = vmatpush1.msra.mxu0 0.0
    %1434 = vmatprep.subr.mxu0 0.0
    %1435 = vmatpush1.msra.mxu0 0.0
    %1436 = vmatprep.subr.mxu0 0.0
    %1437 = vmatpush1.msra.mxu0 0.0
    %1438 = vmatprep.mubr.f32.mxu0 0.0
    %1439 = vmatmul.mubr.f32.gmra.mrb[0].mxu0 %v1304
    %v1440 = vpop.f32.mrb[0].mxu0
    %v1441 = vadd.f32 0.0, %v1440
    %v1442 = vpop.f32.mrb[0].mxu0
    %v1443 = vadd.f32 0.0, %v1442
    %1444 = vdwg.mxu0
    %1445 = vmatprep.subr.mxu0 %v1313
    %1446 = vmatpush1.msra.mxu0 %v1312
    %1447 = vmatprep.subr.mxu0 %v1317
    %1448 = vmatpush1.msra.mxu0 %v1316
    %1449 = vmatprep.subr.mxu0 %v1321
    %1450 = vmatpush1.msra.mxu0 %v1320
    %1451 = vmatprep.subr.mxu0 %v1325
    %1452 = vmatpush1.msra.mxu0 %v1324
    %1453 = vmatprep.subr.mxu0 %v1329
    %1454 = vmatpush1.msra.mxu0 %v1328
    %1455 = vmatprep.subr.mxu0 %v1333
    %1456 = vmatpush1.msra.mxu0 %v1332
    %1457 = vmatprep.subr.mxu0 %v1337
    %1458 = vmatpush1.msra.mxu0 %v1336
    %1459 = vmatprep.subr.mxu0 %v1341
    %1460 = vmatpush1.msra.mxu0 %v1340
    %1461 = vmatprep.subr.mxu0 %v1345
    %1462 = vmatpush1.msra.mxu0 %v1344
    %1463 = vmatprep.subr.mxu0 %v1349
    %1464 = vmatpush1.msra.mxu0 %v1348
    %1465 = vmatprep.subr.mxu0 %v1353
    %1466 = vmatpush1.msra.mxu0 %v1352
    %1467 = vmatprep.subr.mxu0 %v1357
    %1468 = vmatpush1.msra.mxu0 %v1356
    %1469 = vmatprep.subr.mxu0 %v1361
    %1470 = vmatpush1.msra.mxu0 %v1360
    %1471 = vmatprep.subr.mxu0 %v1365
    %1472 = vmatpush1.msra.mxu0 %v1364
    %1473 = vmatprep.subr.mxu0 %v1369
    %1474 = vmatpush1.msra.mxu0 %v1368
    %1475 = vmatprep.subr.mxu0 %v1373
    %1476 = vmatpush1.msra.mxu0 %v1372
    %1477 = vmatprep.subr.mxu0 0.0
    %1478 = vmatpush1.msra.mxu0 0.0
    %1479 = vmatprep.subr.mxu0 0.0
    %1480 = vmatpush1.msra.mxu0 0.0
    %1481 = vmatprep.subr.mxu0 0.0
    %1482 = vmatpush1.msra.mxu0 0.0
    %1483 = vmatprep.subr.mxu0 0.0
    %1484 = vmatpush1.msra.mxu0 0.0
    %1485 = vmatprep.subr.mxu0 0.0
    %1486 = vmatpush1.msra.mxu0 0.0
    %1487 = vmatprep.subr.mxu0 0.0
    %1488 = vmatpush1.msra.mxu0 0.0
    %1489 = vmatprep.subr.mxu0 0.0
    %1490 = vmatpush1.msra.mxu0 0.0
    %1491 = vmatprep.subr.mxu0 0.0
    %1492 = vmatpush1.msra.mxu0 0.0
    %1493 = vmatprep.subr.mxu0 0.0
    %1494 = vmatpush1.msra.mxu0 0.0
    %1495 = vmatprep.subr.mxu0 0.0
    %1496 = vmatpush1.msra.mxu0 0.0
    %1497 = vmatprep.subr.mxu0 0.0
    %1498 = vmatpush1.msra.mxu0 0.0
    %1499 = vmatprep.subr.mxu0 0.0
    %1500 = vmatpush1.msra.mxu0 0.0
    %1501 = vmatprep.subr.mxu0 0.0
    %1502 = vmatpush1.msra.mxu0 0.0
    %1503 = vmatprep.subr.mxu0 0.0
    %1504 = vmatpush1.msra.mxu0 0.0
    %1505 = vmatprep.subr.mxu0 0.0
    %1506 = vmatpush1.msra.mxu0 0.0
    %1507 = vmatprep.subr.mxu0 0.0
    %1508 = vmatpush1.msra.mxu0 0.0
    %1509 = vmatprep.mubr.f32.mxu0 0.0
    %1510 = vmatmul.mubr.f32.gmra.mrb[0].mxu0 %v1304
    %v1511 = vpop.f32.mrb[0].mxu0
    %v1512 = vadd.f32 0.0, %v1511
    %v1513 = vpop.f32.mrb[0].mxu0
    %v1514 = vadd.f32 0.0, %v1513
    %1515 = vdwg.mxu0
    %v1516 = vadd.f32 %v1306, %v1441
    %v1517 = vadd.f32 %v1307, %v1443
    %v1518 = vadd.f32 %v1308, %v1512
    %v1519 = vadd.f32 %v1309, %v1514
    %v1520 = vxor.u32 %v1516, 2147483648
    %v1521 = vmul.f32 %v1520, 1.442695
    %v1522 = vpow.pop %v1521
    %v1523 = vadd.f32 %v1522, 1.0
    %v1524 = vrcp.pop %v1523
    %v1525 = vmul.f32 1.0, %v1524
    %v1526 = vxor.u32 %v1517, 2147483648
    %v1527 = vmul.f32 %v1526, 1.442695
    %v1528 = vpow.pop %v1527
    %v1529 = vadd.f32 %v1528, 1.0
    %v1530 = vrcp.pop %v1529
    %v1531 = vmul.f32 1.0, %v1530
    %v1532 = vtanh.pop %v1518
    %v1533 = vxor.u32 %v1519, 2147483648
    %v1534 = vmul.f32 %v1533, 1.442695
    %v1535 = vpow.pop %v1534
    %v1536 = vadd.f32 %v1535, 1.0
    %v1537 = vrcp.pop %v1536
    %v1538 = vmul.f32 1.0, %v1537
    %v1539 = vmul.f32 %v1531, %v1305
    %v1540 = vmul.f32 %v1525, %v1532
    %v1541 = vadd.f32 %v1539, %v1540
    %v1542 = vtanh.pop %v1541
    %v1543 = vmul.f32 %v1538, %v1542
    %1544 = vst [vmem:[#allocation7] sm:$0xff] %v1541
    %1545 = vst [vmem:[#allocation6] sm:$0xff] %v1543
    %v1546 = vld [vmem:[#allocation3] sm:$0xff]
    %v1547 = vmul.f32 %v1543, %v1546
    %v1548 = vld [vmem:[#allocation4] sm:$0xff]
    %v1549 = vadd.f32 %v1547, %v1548
    %1550 = vst [vmem:[#allocation5] sm:$0xff] %v1549
    %v1551 = vld [vmem:[#allocation6] sm:$0xff]
    %v1552 = vld [vmem:[#allocation7] sm:$0xff]
    %s1553 = scalar_lea.vmem [#allocation2], 32
    %v1554 = vld [vmem:[%s1553] sm:$0xff]
    %v1555 = vld [vmem:[%s1553 + $0x8] sm:$0xff]
    %v1556 = vld [vmem:[%s1553 + $0x10] sm:$0xff]
    %v1557 = vld [vmem:[%s1553 + $0x18] sm:$0xff]
    %v1558 = vld [vmem:[#allocation13] sm:$0xff]
    %v1559 = vld [vmem:[#allocation13 + $0x8] sm:$0xff]
    %v1560 = vld [vmem:[#allocation13 + $0x10] sm:$0xff]
    %v1561 = vld [vmem:[#allocation13 + $0x18] sm:$0xff]
    %v1562 = vld [vmem:[#allocation13 + $0x20] sm:$0xff]
    %v1563 = vld [vmem:[#allocation13 + $0x28] sm:$0xff]
    %v1564 = vld [vmem:[#allocation13 + $0x30] sm:$0xff]
    %v1565 = vld [vmem:[#allocation13 + $0x38] sm:$0xff]
    %v1566 = vld [vmem:[#allocation13 + $0x40] sm:$0xff]
    %v1567 = vld [vmem:[#allocation13 + $0x48] sm:$0xff]
    %v1568 = vld [vmem:[#allocation13 + $0x50] sm:$0xff]
    %v1569 = vld [vmem:[#allocation13 + $0x58] sm:$0xff]
    %v1570 = vld [vmem:[#allocation13 + $0x60] sm:$0xff]
    %v1571 = vld [vmem:[#allocation13 + $0x68] sm:$0xff]
    %v1572 = vld [vmem:[#allocation13 + $0x70] sm:$0xff]
    %v1573 = vld [vmem:[#allocation13 + $0x78] sm:$0xff]
    %v1574 = vld [vmem:[#allocation13 + $0x80] sm:$0xff]
    %v1575 = vld [vmem:[#allocation13 + $0x88] sm:$0xff]
    %v1576 = vld [vmem:[#allocation13 + $0x90] sm:$0xff]
    %v1577 = vld [vmem:[#allocation13 + $0x98] sm:$0xff]
    %v1578 = vld [vmem:[#allocation13 + $0xa0] sm:$0xff]
    %v1579 = vld [vmem:[#allocation13 + $0xa8] sm:$0xff]
    %v1580 = vld [vmem:[#allocation13 + $0xb0] sm:$0xff]
    %v1581 = vld [vmem:[#allocation13 + $0xb8] sm:$0xff]
    %v1582 = vld [vmem:[#allocation13 + $0xc0] sm:$0xff]
    %v1583 = vld [vmem:[#allocation13 + $0xc8] sm:$0xff]
    %v1584 = vld [vmem:[#allocation13 + $0xd0] sm:$0xff]
    %v1585 = vld [vmem:[#allocation13 + $0xd8] sm:$0xff]
    %v1586 = vld [vmem:[#allocation13 + $0xe0] sm:$0xff]
    %v1587 = vld [vmem:[#allocation13 + $0xe8] sm:$0xff]
    %v1588 = vld [vmem:[#allocation13 + $0xf0] sm:$0xff]
    %v1589 = vld [vmem:[#allocation13 + $0xf8] sm:$0xff]
    %v1590 = vld [vmem:[#allocation13 + $0x100] sm:$0xff]
    %v1591 = vld [vmem:[#allocation13 + $0x108] sm:$0xff]
    %v1592 = vld [vmem:[#allocation13 + $0x110] sm:$0xff]
    %v1593 = vld [vmem:[#allocation13 + $0x118] sm:$0xff]
    %v1594 = vld [vmem:[#allocation13 + $0x120] sm:$0xff]
    %v1595 = vld [vmem:[#allocation13 + $0x128] sm:$0xff]
    %v1596 = vld [vmem:[#allocation13 + $0x130] sm:$0xff]
    %v1597 = vld [vmem:[#allocation13 + $0x138] sm:$0xff]
    %v1598 = vld [vmem:[#allocation13 + $0x140] sm:$0xff]
    %v1599 = vld [vmem:[#allocation13 + $0x148] sm:$0xff]
    %v1600 = vld [vmem:[#allocation13 + $0x150] sm:$0xff]
    %v1601 = vld [vmem:[#allocation13 + $0x158] sm:$0xff]
    %v1602 = vld [vmem:[#allocation13 + $0x160] sm:$0xff]
    %v1603 = vld [vmem:[#allocation13 + $0x168] sm:$0xff]
    %v1604 = vld [vmem:[#allocation13 + $0x170] sm:$0xff]
    %v1605 = vld [vmem:[#allocation13 + $0x178] sm:$0xff]
    %v1606 = vld [vmem:[#allocation13 + $0x180] sm:$0xff]
    %v1607 = vld [vmem:[#allocation13 + $0x188] sm:$0xff]
    %v1608 = vld [vmem:[#allocation13 + $0x190] sm:$0xff]
    %v1609 = vld [vmem:[#allocation13 + $0x198] sm:$0xff]
    %v1610 = vld [vmem:[#allocation13 + $0x1a0] sm:$0xff]
    %v1611 = vld [vmem:[#allocation13 + $0x1a8] sm:$0xff]
    %v1612 = vld [vmem:[#allocation13 + $0x1b0] sm:$0xff]
    %v1613 = vld [vmem:[#allocation13 + $0x1b8] sm:$0xff]
    %v1614 = vld [vmem:[#allocation13 + $0x1c0] sm:$0xff]
    %v1615 = vld [vmem:[#allocation13 + $0x1c8] sm:$0xff]
    %v1616 = vld [vmem:[#allocation13 + $0x1d0] sm:$0xff]
    %v1617 = vld [vmem:[#allocation13 + $0x1d8] sm:$0xff]
    %v1618 = vld [vmem:[#allocation13 + $0x1e0] sm:$0xff]
    %v1619 = vld [vmem:[#allocation13 + $0x1e8] sm:$0xff]
    %v1620 = vld [vmem:[#allocation13 + $0x1f0] sm:$0xff]
    %v1621 = vld [vmem:[#allocation13 + $0x1f8] sm:$0xff]
    %1622 = vmatprep.subr.mxu0 %v1559
    %1623 = vmatpush1.msra.mxu0 %v1558
    %1624 = vmatprep.subr.mxu0 %v1563
    %1625 = vmatpush1.msra.mxu0 %v1562
    %1626 = vmatprep.subr.mxu0 %v1567
    %1627 = vmatpush1.msra.mxu0 %v1566
    %1628 = vmatprep.subr.mxu0 %v1571
    %1629 = vmatpush1.msra.mxu0 %v1570
    %1630 = vmatprep.subr.mxu0 %v1575
    %1631 = vmatpush1.msra.mxu0 %v1574
    %1632 = vmatprep.subr.mxu0 %v1579
    %1633 = vmatpush1.msra.mxu0 %v1578
    %1634 = vmatprep.subr.mxu0 %v1583
    %1635 = vmatpush1.msra.mxu0 %v1582
    %1636 = vmatprep.subr.mxu0 %v1587
    %1637 = vmatpush1.msra.mxu0 %v1586
    %1638 = vmatprep.subr.mxu0 %v1591
    %1639 = vmatpush1.msra.mxu0 %v1590
    %1640 = vmatprep.subr.mxu0 %v1595
    %1641 = vmatpush1.msra.mxu0 %v1594
    %1642 = vmatprep.subr.mxu0 %v1599
    %1643 = vmatpush1.msra.mxu0 %v1598
    %1644 = vmatprep.subr.mxu0 %v1603
    %1645 = vmatpush1.msra.mxu0 %v1602
    %1646 = vmatprep.subr.mxu0 %v1607
    %1647 = vmatpush1.msra.mxu0 %v1606
    %1648 = vmatprep.subr.mxu0 %v1611
    %1649 = vmatpush1.msra.mxu0 %v1610
    %1650 = vmatprep.subr.mxu0 %v1615
    %1651 = vmatpush1.msra.mxu0 %v1614
    %1652 = vmatprep.subr.mxu0 %v1619
    %1653 = vmatpush1.msra.mxu0 %v1618
    %1654 = vmatprep.subr.mxu0 0.0
    %1655 = vmatpush1.msra.mxu0 0.0
    %1656 = vmatprep.subr.mxu0 0.0
    %1657 = vmatpush1.msra.mxu0 0.0
    %1658 = vmatprep.subr.mxu0 0.0
    %1659 = vmatpush1.msra.mxu0 0.0
    %1660 = vmatprep.subr.mxu0 0.0
    %1661 = vmatpush1.msra.mxu0 0.0
    %1662 = vmatprep.subr.mxu0 0.0
    %1663 = vmatpush1.msra.mxu0 0.0
    %1664 = vmatprep.subr.mxu0 0.0
    %1665 = vmatpush1.msra.mxu0 0.0
    %1666 = vmatprep.subr.mxu0 0.0
    %1667 = vmatpush1.msra.mxu0 0.0
    %1668 = vmatprep.subr.mxu0 0.0
    %1669 = vmatpush1.msra.mxu0 0.0
    %1670 = vmatprep.subr.mxu0 0.0
    %1671 = vmatpush1.msra.mxu0 0.0
    %1672 = vmatprep.subr.mxu0 0.0
    %1673 = vmatpush1.msra.mxu0 0.0
    %1674 = vmatprep.subr.mxu0 0.0
    %1675 = vmatpush1.msra.mxu0 0.0
    %1676 = vmatprep.subr.mxu0 0.0
    %1677 = vmatpush1.msra.mxu0 0.0
    %1678 = vmatprep.subr.mxu0 0.0
    %1679 = vmatpush1.msra.mxu0 0.0
    %1680 = vmatprep.subr.mxu0 0.0
    %1681 = vmatpush1.msra.mxu0 0.0
    %1682 = vmatprep.subr.mxu0 0.0
    %1683 = vmatpush1.msra.mxu0 0.0
    %1684 = vmatprep.subr.mxu0 0.0
    %1685 = vmatpush1.msra.mxu0 0.0
    %1686 = vmatprep.mubr.f32.mxu0 0.0
    %1687 = vmatmul.mubr.f32.gmra.mrb[0].mxu0 %v1551
    %v1688 = vpop.f32.mrb[0].mxu0
    %v1689 = vadd.f32 0.0, %v1688
    %v1690 = vpop.f32.mrb[0].mxu0
    %v1691 = vadd.f32 0.0, %v1690
    %1692 = vdwg.mxu0
    %1693 = vmatprep.subr.mxu0 %v1561
    %1694 = vmatpush1.msra.mxu0 %v1560
    %1695 = vmatprep.subr.mxu0 %v1565
    %1696 = vmatpush1.msra.mxu0 %v1564
    %1697 = vmatprep.subr.mxu0 %v1569
    %1698 = vmatpush1.msra.mxu0 %v1568
    %1699 = vmatprep.subr.mxu0 %v1573
    %1700 = vmatpush1.msra.mxu0 %v1572
    %1701 = vmatprep.subr.mxu0 %v1577
    %1702 = vmatpush1.msra.mxu0 %v1576
    %1703 = vmatprep.subr.mxu0 %v1581
    %1704 = vmatpush1.msra.mxu0 %v1580
    %1705 = vmatprep.subr.mxu0 %v1585
    %1706 = vmatpush1.msra.mxu0 %v1584
    %1707 = vmatprep.subr.mxu0 %v1589
    %1708 = vmatpush1.msra.mxu0 %v1588
    %1709 = vmatprep.subr.mxu0 %v1593
    %1710 = vmatpush1.msra.mxu0 %v1592
    %1711 = vmatprep.subr.mxu0 %v1597
    %1712 = vmatpush1.msra.mxu0 %v1596
    %1713 = vmatprep.subr.mxu0 %v1601
    %1714 = vmatpush1.msra.mxu0 %v1600
    %1715 = vmatprep.subr.mxu0 %v1605
    %1716 = vmatpush1.msra.mxu0 %v1604
    %1717 = vmatprep.subr.mxu0 %v1609
    %1718 = vmatpush1.msra.mxu0 %v1608
    %1719 = vmatprep.subr.mxu0 %v1613
    %1720 = vmatpush1.msra.mxu0 %v1612
    %1721 = vmatprep.subr.mxu0 %v1617
    %1722 = vmatpush1.msra.mxu0 %v1616
    %1723 = vmatprep.subr.mxu0 %v1621
    %1724 = vmatpush1.msra.mxu0 %v1620
    %1725 = vmatprep.subr.mxu0 0.0
    %1726 = vmatpush1.msra.mxu0 0.0
    %1727 = vmatprep.subr.mxu0 0.0
    %1728 = vmatpush1.msra.mxu0 0.0
    %1729 = vmatprep.subr.mxu0 0.0
    %1730 = vmatpush1.msra.mxu0 0.0
    %1731 = vmatprep.subr.mxu0 0.0
    %1732 = vmatpush1.msra.mxu0 0.0
    %1733 = vmatprep.subr.mxu0 0.0
    %1734 = vmatpush1.msra.mxu0 0.0
    %1735 = vmatprep.subr.mxu0 0.0
    %1736 = vmatpush1.msra.mxu0 0.0
    %1737 = vmatprep.subr.mxu0 0.0
    %1738 = vmatpush1.msra.mxu0 0.0
    %1739 = vmatprep.subr.mxu0 0.0
    %1740 = vmatpush1.msra.mxu0 0.0
    %1741 = vmatprep.subr.mxu0 0.0
    %1742 = vmatpush1.msra.mxu0 0.0
    %1743 = vmatprep.subr.mxu0 0.0
    %1744 = vmatpush1.msra.mxu0 0.0
    %1745 = vmatprep.subr.mxu0 0.0
    %1746 = vmatpush1.msra.mxu0 0.0
    %1747 = vmatprep.subr.mxu0 0.0
    %1748 = vmatpush1.msra.mxu0 0.0
    %1749 = vmatprep.subr.mxu0 0.0
    %1750 = vmatpush1.msra.mxu0 0.0
    %1751 = vmatprep.subr.mxu0 0.0
    %1752 = vmatpush1.msra.mxu0 0.0
    %1753 = vmatprep.subr.mxu0 0.0
    %1754 = vmatpush1.msra.mxu0 0.0
    %1755 = vmatprep.subr.mxu0 0.0
    %1756 = vmatpush1.msra.mxu0 0.0
    %1757 = vmatprep.mubr.f32.mxu0 0.0
    %1758 = vmatmul.mubr.f32.gmra.mrb[0].mxu0 %v1551
    %v1759 = vpop.f32.mrb[0].mxu0
    %v1760 = vadd.f32 0.0, %v1759
    %v1761 = vpop.f32.mrb[0].mxu0
    %v1762 = vadd.f32 0.0, %v1761
    %1763 = vdwg.mxu0
    %v1764 = vadd.f32 %v1554, %v1689
    %v1765 = vadd.f32 %v1555, %v1691
    %v1766 = vadd.f32 %v1556, %v1760
    %v1767 = vadd.f32 %v1557, %v1762
    %v1768 = vxor.u32 %v1764, 2147483648
    %v1769 = vmul.f32 %v1768, 1.442695
    %v1770 = vpow.pop %v1769
    %v1771 = vadd.f32 %v1770, 1.0
    %v1772 = vrcp.pop %v1771
    %v1773 = vmul.f32 1.0, %v1772
    %v1774 = vxor.u32 %v1765, 2147483648
    %v1775 = vmul.f32 %v1774, 1.442695
    %v1776 = vpow.pop %v1775
    %v1777 = vadd.f32 %v1776, 1.0
    %v1778 = vrcp.pop %v1777
    %v1779 = vmul.f32 1.0, %v1778
    %v1780 = vtanh.pop %v1766
    %v1781 = vxor.u32 %v1767, 2147483648
    %v1782 = vmul.f32 %v1781, 1.442695
    %v1783 = vpow.pop %v1782
    %v1784 = vadd.f32 %v1783, 1.0
    %v1785 = vrcp.pop %v1784
    %v1786 = vmul.f32 1.0, %v1785
    %v1787 = vmul.f32 %v1779, %v1552
    %v1788 = vmul.f32 %v1773, %v1780
    %v1789 = vadd.f32 %v1787, %v1788
    %v1790 = vtanh.pop %v1789
    %v1791 = vmul.f32 %v1786, %v1790
    %1792 = vst [vmem:[#allocation7] sm:$0xff] %v1789
    %1793 = vst [vmem:[#allocation6] sm:$0xff] %v1791
    %s1794 = scalar_lea.vmem [#allocation3], 8
    %v1795 = vld [vmem:[%s1794] sm:$0xff]
    %v1796 = vmul.f32 %v1791, %v1795
    %s1797 = scalar_lea.vmem [#allocation4], 8
    %v1798 = vld [vmem:[%s1797] sm:$0xff]
    %v1799 = vadd.f32 %v1796, %v1798
    %s1800 = scalar_lea.vmem [#allocation5], 8
    %1801 = vst [vmem:[%s1800] sm:$0xff] %v1799
    %v1802 = vld [vmem:[#allocation6] sm:$0xff]
    %v1803 = vld [vmem:[#allocation7] sm:$0xff]
    %s1804 = scalar_lea.vmem [#allocation2], 64
    %v1805 = vld [vmem:[%s1804] sm:$0xff]
    %v1806 = vld [vmem:[%s1804 + $0x8] sm:$0xff]
    %v1807 = vld [vmem:[%s1804 + $0x10] sm:$0xff]
    %v1808 = vld [vmem:[%s1804 + $0x18] sm:$0xff]
    %v1809 = vld [vmem:[#allocation13] sm:$0xff]
    %v1810 = vld [vmem:[#allocation13 + $0x8] sm:$0xff]
    %v1811 = vld [vmem:[#allocation13 + $0x10] sm:$0xff]
    %v1812 = vld [vmem:[#allocation13 + $0x18] sm:$0xff]
    %v1813 = vld [vmem:[#allocation13 + $0x20] sm:$0xff]
    %v1814 = vld [vmem:[#allocation13 + $0x28] sm:$0xff]
    %v1815 = vld [vmem:[#allocation13 + $0x30] sm:$0xff]
    %v1816 = vld [vmem:[#allocation13 + $0x38] sm:$0xff]
    %v1817 = vld [vmem:[#allocation13 + $0x40] sm:$0xff]
    %v1818 = vld [vmem:[#allocation13 + $0x48] sm:$0xff]
    %v1819 = vld [vmem:[#allocation13 + $0x50] sm:$0xff]
    %v1820 = vld [vmem:[#allocation13 + $0x58] sm:$0xff]
    %v1821 = vld [vmem:[#allocation13 + $0x60] sm:$0xff]
    %v1822 = vld [vmem:[#allocation13 + $0x68] sm:$0xff]
    %v1823 = vld [vmem:[#allocation13 + $0x70] sm:$0xff]
    %v1824 = vld [vmem:[#allocation13 + $0x78] sm:$0xff]
    %v1825 = vld [vmem:[#allocation13 + $0x80] sm:$0xff]
    %v1826 = vld [vmem:[#allocation13 + $0x88] sm:$0xff]
    %v1827 = vld [vmem:[#allocation13 + $0x90] sm:$0xff]
    %v1828 = vld [vmem:[#allocation13 + $0x98] sm:$0xff]
    %v1829 = vld [vmem:[#allocation13 + $0xa0] sm:$0xff]
    %v1830 = vld [vmem:[#allocation13 + $0xa8] sm:$0xff]
    %v1831 = vld [vmem:[#allocation13 + $0xb0] sm:$0xff]
    %v1832 = vld [vmem:[#allocation13 + $0xb8] sm:$0xff]
    %v1833 = vld [vmem:[#allocation13 + $0xc0] sm:$0xff]
    %v1834 = vld [vmem:[#allocation13 + $0xc8] sm:$0xff]
    %v1835 = vld [vmem:[#allocation13 + $0xd0] sm:$0xff]
    %v1836 = vld [vmem:[#allocation13 + $0xd8] sm:$0xff]
    %v1837 = vld [vmem:[#allocation13 + $0xe0] sm:$0xff]
    %v1838 = vld [vmem:[#allocation13 + $0xe8] sm:$0xff]
    %v1839 = vld [vmem:[#allocation13 + $0xf0] sm:$0xff]
    %v1840 = vld [vmem:[#allocation13 + $0xf8] sm:$0xff]
    %v1841 = vld [vmem:[#allocation13 + $0x100] sm:$0xff]
    %v1842 = vld [vmem:[#allocation13 + $0x108] sm:$0xff]
    %v1843 = vld [vmem:[#allocation13 + $0x110] sm:$0xff]
    %v1844 = vld [vmem:[#allocation13 + $0x118] sm:$0xff]
    %v1845 = vld [vmem:[#allocation13 + $0x120] sm:$0xff]
    %v1846 = vld [vmem:[#allocation13 + $0x128] sm:$0xff]
    %v1847 = vld [vmem:[#allocation13 + $0x130] sm:$0xff]
    %v1848 = vld [vmem:[#allocation13 + $0x138] sm:$0xff]
    %v1849 = vld [vmem:[#allocation13 + $0x140] sm:$0xff]
    %v1850 = vld [vmem:[#allocation13 + $0x148] sm:$0xff]
    %v1851 = vld [vmem:[#allocation13 + $0x150] sm:$0xff]
    %v1852 = vld [vmem:[#allocation13 + $0x158] sm:$0xff]
    %v1853 = vld [vmem:[#allocation13 + $0x160] sm:$0xff]
    %v1854 = vld [vmem:[#allocation13 + $0x168] sm:$0xff]
    %v1855 = vld [vmem:[#allocation13 + $0x170] sm:$0xff]
    %v1856 = vld [vmem:[#allocation13 + $0x178] sm:$0xff]
    %v1857 = vld [vmem:[#allocation13 + $0x180] sm:$0xff]
    %v1858 = vld [vmem:[#allocation13 + $0x188] sm:$0xff]
    %v1859 = vld [vmem:[#allocation13 + $0x190] sm:$0xff]
    %v1860 = vld [vmem:[#allocation13 + $0x198] sm:$0xff]
    %v1861 = vld [vmem:[#allocation13 + $0x1a0] sm:$0xff]
    %v1862 = vld [vmem:[#allocation13 + $0x1a8] sm:$0xff]
    %v1863 = vld [vmem:[#allocation13 + $0x1b0] sm:$0xff]
    %v1864 = vld [vmem:[#allocation13 + $0x1b8] sm:$0xff]
    %v1865 = vld [vmem:[#allocation13 + $0x1c0] sm:$0xff]
    %v1866 = vld [vmem:[#allocation13 + $0x1c8] sm:$0xff]
    %v1867 = vld [vmem:[#allocation13 + $0x1d0] sm:$0xff]
    %v1868 = vld [vmem:[#allocation13 + $0x1d8] sm:$0xff]
    %v1869 = vld [vmem:[#allocation13 + $0x1e0] sm:$0xff]
    %v1870 = vld [vmem:[#allocation13 + $0x1e8] sm:$0xff]
    %v1871 = vld [vmem:[#allocation13 + $0x1f0] sm:$0xff]
    %v1872 = vld [vmem:[#allocation13 + $0x1f8] sm:$0xff]
    %1873 = vmatprep.subr.mxu0 %v1810
    %1874 = vmatpush1.msra.mxu0 %v1809
    %1875 = vmatprep.subr.mxu0 %v1814
    %1876 = vmatpush1.msra.mxu0 %v1813
    %1877 = vmatprep.subr.mxu0 %v1818
    %1878 = vmatpush1.msra.mxu0 %v1817
    %1879 = vmatprep.subr.mxu0 %v1822
    %1880 = vmatpush1.msra.mxu0 %v1821
    %1881 = vmatprep.subr.mxu0 %v1826
    %1882 = vmatpush1.msra.mxu0 %v1825
    %1883 = vmatprep.subr.mxu0 %v1830
    %1884 = vmatpush1.msra.mxu0 %v1829
    %1885 = vmatprep.subr.mxu0 %v1834
    %1886 = vmatpush1.msra.mxu0 %v1833
    %1887 = vmatprep.subr.mxu0 %v1838
    %1888 = vmatpush1.msra.mxu0 %v1837
    %1889 = vmatprep.subr.mxu0 %v1842
    %1890 = vmatpush1.msra.mxu0 %v1841
    %1891 = vmatprep.subr.mxu0 %v1846
    %1892 = vmatpush1.msra.mxu0 %v1845
    %1893 = vmatprep.subr.mxu0 %v1850
    %1894 = vmatpush1.msra.mxu0 %v1849
    %1895 = vmatprep.subr.mxu0 %v1854
    %1896 = vmatpush1.msra.mxu0 %v1853
    %1897 = vmatprep.subr.mxu0 %v1858
    %1898 = vmatpush1.msra.mxu0 %v1857
    %1899 = vmatprep.subr.mxu0 %v1862
    %1900 = vmatpush1.msra.mxu0 %v1861
    %1901 = vmatprep.subr.mxu0 %v1866
    %1902 = vmatpush1.msra.mxu0 %v1865
    %1903 = vmatprep.subr.mxu0 %v1870
    %1904 = vmatpush1.msra.mxu0 %v1869
    %1905 = vmatprep.subr.mxu0 0.0
    %1906 = vmatpush1.msra.mxu0 0.0
    %1907 = vmatprep.subr.mxu0 0.0
    %1908 = vmatpush1.msra.mxu0 0.0
    %1909 = vmatprep.subr.mxu0 0.0
    %1910 = vmatpush1.msra.mxu0 0.0
    %1911 = vmatprep.subr.mxu0 0.0
    %1912 = vmatpush1.msra.mxu0 0.0
    %1913 = vmatprep.subr.mxu0 0.0
    %1914 = vmatpush1.msra.mxu0 0.0
    %1915 = vmatprep.subr.mxu0 0.0
    %1916 = vmatpush1.msra.mxu0 0.0
    %1917 = vmatprep.subr.mxu0 0.0
    %1918 = vmatpush1.msra.mxu0 0.0
    %1919 = vmatprep.subr.mxu0 0.0
    %1920 = vmatpush1.msra.mxu0 0.0
    %1921 = vmatprep.subr.mxu0 0.0
    %1922 = vmatpush1.msra.mxu0 0.0
    %1923 = vmatprep.subr.mxu0 0.0
    %1924 = vmatpush1.msra.mxu0 0.0
    %1925 = vmatprep.subr.mxu0 0.0
    %1926 = vmatpush1.msra.mxu0 0.0
    %1927 = vmatprep.subr.mxu0 0.0
    %1928 = vmatpush1.msra.mxu0 0.0
    %1929 = vmatprep.subr.mxu0 0.0
    %1930 = vmatpush1.msra.mxu0 0.0
    %1931 = vmatprep.subr.mxu0 0.0
    %1932 = vmatpush1.msra.mxu0 0.0
    %1933 = vmatprep.subr.mxu0 0.0
    %1934 = vmatpush1.msra.mxu0 0.0
    %1935 = vmatprep.subr.mxu0 0.0
    %1936 = vmatpush1.msra.mxu0 0.0
    %1937 = vmatprep.mubr.f32.mxu0 0.0
    %1938 = vmatmul.mubr.f32.gmra.mrb[0].mxu0 %v1802
    %v1939 = vpop.f32.mrb[0].mxu0
    %v1940 = vadd.f32 0.0, %v1939
    %v1941 = vpop.f32.mrb[0].mxu0
    %v1942 = vadd.f32 0.0, %v1941
    %1943 = vdwg.mxu0
    %1944 = vmatprep.subr.mxu0 %v1812
    %1945 = vmatpush1.msra.mxu0 %v1811
    %1946 = vmatprep.subr.mxu0 %v1816
    %1947 = vmatpush1.msra.mxu0 %v1815
    %1948 = vmatprep.subr.mxu0 %v1820
    %1949 = vmatpush1.msra.mxu0 %v1819
    %1950 = vmatprep.subr.mxu0 %v1824
    %1951 = vmatpush1.msra.mxu0 %v1823
    %1952 = vmatprep.subr.mxu0 %v1828
    %1953 = vmatpush1.msra.mxu0 %v1827
    %1954 = vmatprep.subr.mxu0 %v1832
    %1955 = vmatpush1.msra.mxu0 %v1831
    %1956 = vmatprep.subr.mxu0 %v1836
    %1957 = vmatpush1.msra.mxu0 %v1835
    %1958 = vmatprep.subr.mxu0 %v1840
    %1959 = vmatpush1.msra.mxu0 %v1839
    %1960 = vmatprep.subr.mxu0 %v1844
    %1961 = vmatpush1.msra.mxu0 %v1843
    %1962 = vmatprep.subr.mxu0 %v1848
    %1963 = vmatpush1.msra.mxu0 %v1847
    %1964 = vmatprep.subr.mxu0 %v1852
    %1965 = vmatpush1.msra.mxu0 %v1851
    %1966 = vmatprep.subr.mxu0 %v1856
    %1967 = vmatpush1.msra.mxu0 %v1855
    %1968 = vmatprep.subr.mxu0 %v1860
    %1969 = vmatpush1.msra.mxu0 %v1859
    %1970 = vmatprep.subr.mxu0 %v1864
    %1971 = vmatpush1.msra.mxu0 %v1863
    %1972 = vmatprep.subr.mxu0 %v1868
    %1973 = vmatpush1.msra.mxu0 %v1867
    %1974 = vmatprep.subr.mxu0 %v1872
    %1975 = vmatpush1.msra.mxu0 %v1871
    %1976 = vmatprep.subr.mxu0 0.0
    %1977 = vmatpush1.msra.mxu0 0.0
    %1978 = vmatprep.subr.mxu0 0.0
    %1979 = vmatpush1.msra.mxu0 0.0
    %1980 = vmatprep.subr.mxu0 0.0
    %1981 = vmatpush1.msra.mxu0 0.0
    %1982 = vmatprep.subr.mxu0 0.0
    %1983 = vmatpush1.msra.mxu0 0.0
    %1984 = vmatprep.subr.mxu0 0.0
    %1985 = vmatpush1.msra.mxu0 0.0
    %1986 = vmatprep.subr.mxu0 0.0
    %1987 = vmatpush1.msra.mxu0 0.0
    %1988 = vmatprep.subr.mxu0 0.0
    %1989 = vmatpush1.msra.mxu0 0.0
    %1990 = vmatprep.subr.mxu0 0.0
    %1991 = vmatpush1.msra.mxu0 0.0
    %1992 = vmatprep.subr.mxu0 0.0
    %1993 = vmatpush1.msra.mxu0 0.0
    %1994 = vmatprep.subr.mxu0 0.0
    %1995 = vmatpush1.msra.mxu0 0.0
    %1996 = vmatprep.subr.mxu0 0.0
    %1997 = vmatpush1.msra.mxu0 0.0
    %1998 = vmatprep.subr.mxu0 0.0
    %1999 = vmatpush1.msra.mxu0 0.0
    %2000 = vmatprep.subr.mxu0 0.0
    %2001 = vmatpush1.msra.mxu0 0.0
    %2002 = vmatprep.subr.mxu0 0.0
    %2003 = vmatpush1.msra.mxu0 0.0
    %2004 = vmatprep.subr.mxu0 0.0
    %2005 = vmatpush1.msra.mxu0 0.0
    %2006 = vmatprep.subr.mxu0 0.0
    %2007 = vmatpush1.msra.mxu0 0.0
    %2008 = vmatprep.mubr.f32.mxu0 0.0
    %2009 = vmatmul.mubr.f32.gmra.mrb[0].mxu0 %v1802
    %v2010 = vpop.f32.mrb[0].mxu0
    %v2011 = vadd.f32 0.0, %v2010
    %v2012 = vpop.f32.mrb[0].mxu0
    %v2013 = vadd.f32 0.0, %v2012
    %2014 = vdwg.mxu0
    %v2015 = vadd.f32 %v1805, %v1940
    %v2016 = vadd.f32 %v1806, %v1942
    %v2017 = vadd.f32 %v1807, %v2011
    %v2018 = vadd.f32 %v1808, %v2013
    %v2019 = vxor.u32 %v2015, 2147483648
    %v2020 = vmul.f32 %v2019, 1.442695
    %v2021 = vpow.pop %v2020
    %v2022 = vadd.f32 %v2021, 1.0
    %v2023 = vrcp.pop %v2022
    %v2024 = vmul.f32 1.0, %v2023
    %v2025 = vxor.u32 %v2016, 2147483648
    %v2026 = vmul.f32 %v2025, 1.442695
    %v2027 = vpow.pop %v2026
    %v2028 = vadd.f32 %v2027, 1.0
    %v2029 = vrcp.pop %v2028
    %v2030 = vmul.f32 1.0, %v2029
    %v2031 = vtanh.pop %v2017
    %v2032 = vxor.u32 %v2018, 2147483648
    %v2033 = vmul.f32 %v2032, 1.442695
    %v2034 = vpow.pop %v2033
    %v2035 = vadd.f32 %v2034, 1.0
    %v2036 = vrcp.pop %v2035
    %v2037 = vmul.f32 1.0, %v2036
    %v2038 = vmul.f32 %v2030, %v1803
    %v2039 = vmul.f32 %v2024, %v2031
    %v2040 = vadd.f32 %v2038, %v2039
    %v2041 = vtanh.pop %v2040
    %v2042 = vmul.f32 %v2037, %v2041
    %2043 = vst [vmem:[#allocation7] sm:$0xff] %v2040
    %2044 = vst [vmem:[#allocation6] sm:$0xff] %v2042
    %s2045 = scalar_lea.vmem [#allocation3], 16
    %v2046 = vld [vmem:[%s2045] sm:$0xff]
    %v2047 = vmul.f32 %v2042, %v2046
    %s2048 = scalar_lea.vmem [#allocation4], 16
    %v2049 = vld [vmem:[%s2048] sm:$0xff]
    %v2050 = vadd.f32 %v2047, %v2049
    %s2051 = scalar_lea.vmem [#allocation5], 16
    %2052 = vst [vmem:[%s2051] sm:$0xff] %v2050
    %v2053 = vld [vmem:[#allocation6] sm:$0xff]
    %v2054 = vld [vmem:[#allocation7] sm:$0xff]
    %s2055 = scalar_lea.vmem [#allocation2], 96
    %v2056 = vld [vmem:[%s2055] sm:$0xff]
    %v2057 = vld [vmem:[%s2055 + $0x8] sm:$0xff]
    %v2058 = vld [vmem:[%s2055 + $0x10] sm:$0xff]
    %v2059 = vld [vmem:[%s2055 + $0x18] sm:$0xff]
    %v2060 = vld [vmem:[#allocation13] sm:$0xff]
    %v2061 = vld [vmem:[#allocation13 + $0x8] sm:$0xff]
    %v2062 = vld [vmem:[#allocation13 + $0x10] sm:$0xff]
    %v2063 = vld [vmem:[#allocation13 + $0x18] sm:$0xff]
    %v2064 = vld [vmem:[#allocation13 + $0x20] sm:$0xff]
    %v2065 = vld [vmem:[#allocation13 + $0x28] sm:$0xff]
    %v2066 = vld [vmem:[#allocation13 + $0x30] sm:$0xff]
    %v2067 = vld [vmem:[#allocation13 + $0x38] sm:$0xff]
    %v2068 = vld [vmem:[#allocation13 + $0x40] sm:$0xff]
    %v2069 = vld [vmem:[#allocation13 + $0x48] sm:$0xff]
    %v2070 = vld [vmem:[#allocation13 + $0x50] sm:$0xff]
    %v2071 = vld [vmem:[#allocation13 + $0x58] sm:$0xff]
    %v2072 = vld [vmem:[#allocation13 + $0x60] sm:$0xff]
    %v2073 = vld [vmem:[#allocation13 + $0x68] sm:$0xff]
    %v2074 = vld [vmem:[#allocation13 + $0x70] sm:$0xff]
    %v2075 = vld [vmem:[#allocation13 + $0x78] sm:$0xff]
    %v2076 = vld [vmem:[#allocation13 + $0x80] sm:$0xff]
    %v2077 = vld [vmem:[#allocation13 + $0x88] sm:$0xff]
    %v2078 = vld [vmem:[#allocation13 + $0x90] sm:$0xff]
    %v2079 = vld [vmem:[#allocation13 + $0x98] sm:$0xff]
    %v2080 = vld [vmem:[#allocation13 + $0xa0] sm:$0xff]
    %v2081 = vld [vmem:[#allocation13 + $0xa8] sm:$0xff]
    %v2082 = vld [vmem:[#allocation13 + $0xb0] sm:$0xff]
    %v2083 = vld [vmem:[#allocation13 + $0xb8] sm:$0xff]
    %v2084 = vld [vmem:[#allocation13 + $0xc0] sm:$0xff]
    %v2085 = vld [vmem:[#allocation13 + $0xc8] sm:$0xff]
    %v2086 = vld [vmem:[#allocation13 + $0xd0] sm:$0xff]
    %v2087 = vld [vmem:[#allocation13 + $0xd8] sm:$0xff]
    %v2088 = vld [vmem:[#allocation13 + $0xe0] sm:$0xff]
    %v2089 = vld [vmem:[#allocation13 + $0xe8] sm:$0xff]
    %v2090 = vld [vmem:[#allocation13 + $0xf0] sm:$0xff]
    %v2091 = vld [vmem:[#allocation13 + $0xf8] sm:$0xff]
    %v2092 = vld [vmem:[#allocation13 + $0x100] sm:$0xff]
    %v2093 = vld [vmem:[#allocation13 + $0x108] sm:$0xff]
    %v2094 = vld [vmem:[#allocation13 + $0x110] sm:$0xff]
    %v2095 = vld [vmem:[#allocation13 + $0x118] sm:$0xff]
    %v2096 = vld [vmem:[#allocation13 + $0x120] sm:$0xff]
    %v2097 = vld [vmem:[#allocation13 + $0x128] sm:$0xff]
    %v2098 = vld [vmem:[#allocation13 + $0x130] sm:$0xff]
    %v2099 = vld [vmem:[#allocation13 + $0x138] sm:$0xff]
    %v2100 = vld [vmem:[#allocation13 + $0x140] sm:$0xff]
    %v2101 = vld [vmem:[#allocation13 + $0x148] sm:$0xff]
    %v2102 = vld [vmem:[#allocation13 + $0x150] sm:$0xff]
    %v2103 = vld [vmem:[#allocation13 + $0x158] sm:$0xff]
    %v2104 = vld [vmem:[#allocation13 + $0x160] sm:$0xff]
    %v2105 = vld [vmem:[#allocation13 + $0x168] sm:$0xff]
    %v2106 = vld [vmem:[#allocation13 + $0x170] sm:$0xff]
    %v2107 = vld [vmem:[#allocation13 + $0x178] sm:$0xff]
    %v2108 = vld [vmem:[#allocation13 + $0x180] sm:$0xff]
    %v2109 = vld [vmem:[#allocation13 + $0x188] sm:$0xff]
    %v2110 = vld [vmem:[#allocation13 + $0x190] sm:$0xff]
    %v2111 = vld [vmem:[#allocation13 + $0x198] sm:$0xff]
    %v2112 = vld [vmem:[#allocation13 + $0x1a0] sm:$0xff]
    %v2113 = vld [vmem:[#allocation13 + $0x1a8] sm:$0xff]
    %v2114 = vld [vmem:[#allocation13 + $0x1b0] sm:$0xff]
    %v2115 = vld [vmem:[#allocation13 + $0x1b8] sm:$0xff]
    %v2116 = vld [vmem:[#allocation13 + $0x1c0] sm:$0xff]
    %v2117 = vld [vmem:[#allocation13 + $0x1c8] sm:$0xff]
    %v2118 = vld [vmem:[#allocation13 + $0x1d0] sm:$0xff]
    %v2119 = vld [vmem:[#allocation13 + $0x1d8] sm:$0xff]
    %v2120 = vld [vmem:[#allocation13 + $0x1e0] sm:$0xff]
    %v2121 = vld [vmem:[#allocation13 + $0x1e8] sm:$0xff]
    %v2122 = vld [vmem:[#allocation13 + $0x1f0] sm:$0xff]
    %v2123 = vld [vmem:[#allocation13 + $0x1f8] sm:$0xff]
    %2124 = vmatprep.subr.mxu0 %v2061
    %2125 = vmatpush1.msra.mxu0 %v2060
    %2126 = vmatprep.subr.mxu0 %v2065
    %2127 = vmatpush1.msra.mxu0 %v2064
    %2128 = vmatprep.subr.mxu0 %v2069
    %2129 = vmatpush1.msra.mxu0 %v2068
    %2130 = vmatprep.subr.mxu0 %v2073
    %2131 = vmatpush1.msra.mxu0 %v2072
    %2132 = vmatprep.subr.mxu0 %v2077
    %2133 = vmatpush1.msra.mxu0 %v2076
    %2134 = vmatprep.subr.mxu0 %v2081
    %2135 = vmatpush1.msra.mxu0 %v2080
    %2136 = vmatprep.subr.mxu0 %v2085
    %2137 = vmatpush1.msra.mxu0 %v2084
    %2138 = vmatprep.subr.mxu0 %v2089
    %2139 = vmatpush1.msra.mxu0 %v2088
    %2140 = vmatprep.subr.mxu0 %v2093
    %2141 = vmatpush1.msra.mxu0 %v2092
    %2142 = vmatprep.subr.mxu0 %v2097
    %2143 = vmatpush1.msra.mxu0 %v2096
    %2144 = vmatprep.subr.mxu0 %v2101
    %2145 = vmatpush1.msra.mxu0 %v2100
    %2146 = vmatprep.subr.mxu0 %v2105
    %2147 = vmatpush1.msra.mxu0 %v2104
    %2148 = vmatprep.subr.mxu0 %v2109
    %2149 = vmatpush1.msra.mxu0 %v2108
    %2150 = vmatprep.subr.mxu0 %v2113
    %2151 = vmatpush1.msra.mxu0 %v2112
    %2152 = vmatprep.subr.mxu0 %v2117
    %2153 = vmatpush1.msra.mxu0 %v2116
    %2154 = vmatprep.subr.mxu0 %v2121
    %2155 = vmatpush1.msra.mxu0 %v2120
    %2156 = vmatprep.subr.mxu0 0.0
    %2157 = vmatpush1.msra.mxu0 0.0
    %2158 = vmatprep.subr.mxu0 0.0
    %2159 = vmatpush1.msra.mxu0 0.0
    %2160 = vmatprep.subr.mxu0 0.0
    %2161 = vmatpush1.msra.mxu0 0.0
    %2162 = vmatprep.subr.mxu0 0.0
    %2163 = vmatpush1.msra.mxu0 0.0
    %2164 = vmatprep.subr.mxu0 0.0
    %2165 = vmatpush1.msra.mxu0 0.0
    %2166 = vmatprep.subr.mxu0 0.0
    %2167 = vmatpush1.msra.mxu0 0.0
    %2168 = vmatprep.subr.mxu0 0.0
    %2169 = vmatpush1.msra.mxu0 0.0
    %2170 = vmatprep.subr.mxu0 0.0
    %2171 = vmatpush1.msra.mxu0 0.0
    %2172 = vmatprep.subr.mxu0 0.0
    %2173 = vmatpush1.msra.mxu0 0.0
    %2174 = vmatprep.subr.mxu0 0.0
    %2175 = vmatpush1.msra.mxu0 0.0
    %2176 = vmatprep.subr.mxu0 0.0
    %2177 = vmatpush1.msra.mxu0 0.0
    %2178 = vmatprep.subr.mxu0 0.0
    %2179 = vmatpush1.msra.mxu0 0.0
    %2180 = vmatprep.subr.mxu0 0.0
    %2181 = vmatpush1.msra.mxu0 0.0
    %2182 = vmatprep.subr.mxu0 0.0
    %2183 = vmatpush1.msra.mxu0 0.0
    %2184 = vmatprep.subr.mxu0 0.0
    %2185 = vmatpush1.msra.mxu0 0.0
    %2186 = vmatprep.subr.mxu0 0.0
    %2187 = vmatpush1.msra.mxu0 0.0
    %2188 = vmatprep.mubr.f32.mxu0 0.0
    %2189 = vmatmul.mubr.f32.gmra.mrb[0].mxu0 %v2053
    %v2190 = vpop.f32.mrb[0].mxu0
    %v2191 = vadd.f32 0.0, %v2190
    %v2192 = vpop.f32.mrb[0].mxu0
    %v2193 = vadd.f32 0.0, %v2192
    %2194 = vdwg.mxu0
    %2195 = vmatprep.subr.mxu0 %v2063
    %2196 = vmatpush1.msra.mxu0 %v2062
    %2197 = vmatprep.subr.mxu0 %v2067
    %2198 = vmatpush1.msra.mxu0 %v2066
    %2199 = vmatprep.subr.mxu0 %v2071
    %2200 = vmatpush1.msra.mxu0 %v2070
    %2201 = vmatprep.subr.mxu0 %v2075
    %2202 = vmatpush1.msra.mxu0 %v2074
    %2203 = vmatprep.subr.mxu0 %v2079
    %2204 = vmatpush1.msra.mxu0 %v2078
    %2205 = vmatprep.subr.mxu0 %v2083
    %2206 = vmatpush1.msra.mxu0 %v2082
    %2207 = vmatprep.subr.mxu0 %v2087
    %2208 = vmatpush1.msra.mxu0 %v2086
    %2209 = vmatprep.subr.mxu0 %v2091
    %2210 = vmatpush1.msra.mxu0 %v2090
    %2211 = vmatprep.subr.mxu0 %v2095
    %2212 = vmatpush1.msra.mxu0 %v2094
    %2213 = vmatprep.subr.mxu0 %v2099
    %2214 = vmatpush1.msra.mxu0 %v2098
    %2215 = vmatprep.subr.mxu0 %v2103
    %2216 = vmatpush1.msra.mxu0 %v2102
    %2217 = vmatprep.subr.mxu0 %v2107
    %2218 = vmatpush1.msra.mxu0 %v2106
    %2219 = vmatprep.subr.mxu0 %v2111
    %2220 = vmatpush1.msra.mxu0 %v2110
    %2221 = vmatprep.subr.mxu0 %v2115
    %2222 = vmatpush1.msra.mxu0 %v2114
    %2223 = vmatprep.subr.mxu0 %v2119
    %2224 = vmatpush1.msra.mxu0 %v2118
    %2225 = vmatprep.subr.mxu0 %v2123
    %2226 = vmatpush1.msra.mxu0 %v2122
    %2227 = vmatprep.subr.mxu0 0.0
    %2228 = vmatpush1.msra.mxu0 0.0
    %2229 = vmatprep.subr.mxu0 0.0
    %2230 = vmatpush1.msra.mxu0 0.0
    %2231 = vmatprep.subr.mxu0 0.0
    %2232 = vmatpush1.msra.mxu0 0.0
    %2233 = vmatprep.subr.mxu0 0.0
    %2234 = vmatpush1.msra.mxu0 0.0
    %2235 = vmatprep.subr.mxu0 0.0
    %2236 = vmatpush1.msra.mxu0 0.0
    %2237 = vmatprep.subr.mxu0 0.0
    %2238 = vmatpush1.msra.mxu0 0.0
    %2239 = vmatprep.subr.mxu0 0.0
    %2240 = vmatpush1.msra.mxu0 0.0
    %2241 = vmatprep.subr.mxu0 0.0
    %2242 = vmatpush1.msra.mxu0 0.0
    %2243 = vmatprep.subr.mxu0 0.0
    %2244 = vmatpush1.msra.mxu0 0.0
    %2245 = vmatprep.subr.mxu0 0.0
    %2246 = vmatpush1.msra.mxu0 0.0
    %2247 = vmatprep.subr.mxu0 0.0
    %2248 = vmatpush1.msra.mxu0 0.0
    %2249 = vmatprep.subr.mxu0 0.0
    %2250 = vmatpush1.msra.mxu0 0.0
    %2251 = vmatprep.subr.mxu0 0.0
    %2252 = vmatpush1.msra.mxu0 0.0
    %2253 = vmatprep.subr.mxu0 0.0
    %2254 = vmatpush1.msra.mxu0 0.0
    %2255 = vmatprep.subr.mxu0 0.0
    %2256 = vmatpush1.msra.mxu0 0.0
    %2257 = vmatprep.subr.mxu0 0.0
    %2258 = vmatpush1.msra.mxu0 0.0
    %2259 = vmatprep.mubr.f32.mxu0 0.0
    %2260 = vmatmul.mubr.f32.gmra.mrb[0].mxu0 %v2053
    %v2261 = vpop.f32.mrb[0].mxu0
    %v2262 = vadd.f32 0.0, %v2261
    %v2263 = vpop.f32.mrb[0].mxu0
    %v2264 = vadd.f32 0.0, %v2263
    %2265 = vdwg.mxu0
    %v2266 = vadd.f32 %v2056, %v2191
    %v2267 = vadd.f32 %v2057, %v2193
    %v2268 = vadd.f32 %v2058, %v2262
    %v2269 = vadd.f32 %v2059, %v2264
    %v2270 = vxor.u32 %v2266, 2147483648
    %v2271 = vmul.f32 %v2270, 1.442695
    %v2272 = vpow.pop %v2271
    %v2273 = vadd.f32 %v2272, 1.0
    %v2274 = vrcp.pop %v2273
    %v2275 = vmul.f32 1.0, %v2274
    %v2276 = vxor.u32 %v2267, 2147483648
    %v2277 = vmul.f32 %v2276, 1.442695
    %v2278 = vpow.pop %v2277
    %v2279 = vadd.f32 %v2278, 1.0
    %v2280 = vrcp.pop %v2279
    %v2281 = vmul.f32 1.0, %v2280
    %v2282 = vtanh.pop %v2268
    %v2283 = vxor.u32 %v2269, 2147483648
    %v2284 = vmul.f32 %v2283, 1.442695
    %v2285 = vpow.pop %v2284
    %v2286 = vadd.f32 %v2285, 1.0
    %v2287 = vrcp.pop %v2286
    %v2288 = vmul.f32 1.0, %v2287
    %v2289 = vmul.f32 %v2281, %v2054
    %v2290 = vmul.f32 %v2275, %v2282
    %v2291 = vadd.f32 %v2289, %v2290
    %v2292 = vtanh.pop %v2291
    %v2293 = vmul.f32 %v2288, %v2292
    %2294 = vst [vmem:[#allocation7] sm:$0xff] %v2291
    %2295 = vst [vmem:[#allocation6] sm:$0xff] %v2293
    %s2296 = scalar_lea.vmem [#allocation3], 24
    %v2297 = vld [vmem:[%s2296] sm:$0xff]
    %v2298 = vmul.f32 %v2293, %v2297
    %s2299 = scalar_lea.vmem [#allocation4], 24
    %v2300 = vld [vmem:[%s2299] sm:$0xff]
    %v2301 = vadd.f32 %v2298, %v2300
    %s2302 = scalar_lea.vmem [#allocation5], 24
    %2303 = vst [vmem:[%s2302] sm:$0xff] %v2301
    %v2304 = vld [vmem:[#allocation6] sm:$0xff]
    %v2305 = vld [vmem:[#allocation7] sm:$0xff]
    %s2306 = scalar_lea.vmem [#allocation2], 128
    %v2307 = vld [vmem:[%s2306] sm:$0xff]
    %v2308 = vld [vmem:[%s2306 + $0x8] sm:$0xff]
    %v2309 = vld [vmem:[%s2306 + $0x10] sm:$0xff]
    %v2310 = vld [vmem:[%s2306 + $0x18] sm:$0xff]
    %v2311 = vld [vmem:[#allocation13] sm:$0xff]
    %v2312 = vld [vmem:[#allocation13 + $0x8] sm:$0xff]
    %v2313 = vld [vmem:[#allocation13 + $0x10] sm:$0xff]
    %v2314 = vld [vmem:[#allocation13 + $0x18] sm:$0xff]
    %v2315 = vld [vmem:[#allocation13 + $0x20] sm:$0xff]
    %v2316 = vld [vmem:[#allocation13 + $0x28] sm:$0xff]
    %v2317 = vld [vmem:[#allocation13 + $0x30] sm:$0xff]
    %v2318 = vld [vmem:[#allocation13 + $0x38] sm:$0xff]
    %v2319 = vld [vmem:[#allocation13 + $0x40] sm:$0xff]
    %v2320 = vld [vmem:[#allocation13 + $0x48] sm:$0xff]
    %v2321 = vld [vmem:[#allocation13 + $0x50] sm:$0xff]
    %v2322 = vld [vmem:[#allocation13 + $0x58] sm:$0xff]
    %v2323 = vld [vmem:[#allocation13 + $0x60] sm:$0xff]
    %v2324 = vld [vmem:[#allocation13 + $0x68] sm:$0xff]
    %v2325 = vld [vmem:[#allocation13 + $0x70] sm:$0xff]
    %v2326 = vld [vmem:[#allocation13 + $0x78] sm:$0xff]
    %v2327 = vld [vmem:[#allocation13 + $0x80] sm:$0xff]
    %v2328 = vld [vmem:[#allocation13 + $0x88] sm:$0xff]
    %v2329 = vld [vmem:[#allocation13 + $0x90] sm:$0xff]
    %v2330 = vld [vmem:[#allocation13 + $0x98] sm:$0xff]
    %v2331 = vld [vmem:[#allocation13 + $0xa0] sm:$0xff]
    %v2332 = vld [vmem:[#allocation13 + $0xa8] sm:$0xff]
    %v2333 = vld [vmem:[#allocation13 + $0xb0] sm:$0xff]
    %v2334 = vld [vmem:[#allocation13 + $0xb8] sm:$0xff]
    %v2335 = vld [vmem:[#allocation13 + $0xc0] sm:$0xff]
    %v2336 = vld [vmem:[#allocation13 + $0xc8] sm:$0xff]
    %v2337 = vld [vmem:[#allocation13 + $0xd0] sm:$0xff]
    %v2338 = vld [vmem:[#allocation13 + $0xd8] sm:$0xff]
    %v2339 = vld [vmem:[#allocation13 + $0xe0] sm:$0xff]
    %v2340 = vld [vmem:[#allocation13 + $0xe8] sm:$0xff]
    %v2341 = vld [vmem:[#allocation13 + $0xf0] sm:$0xff]
    %v2342 = vld [vmem:[#allocation13 + $0xf8] sm:$0xff]
    %v2343 = vld [vmem:[#allocation13 + $0x100] sm:$0xff]
    %v2344 = vld [vmem:[#allocation13 + $0x108] sm:$0xff]
    %v2345 = vld [vmem:[#allocation13 + $0x110] sm:$0xff]
    %v2346 = vld [vmem:[#allocation13 + $0x118] sm:$0xff]
    %v2347 = vld [vmem:[#allocation13 + $0x120] sm:$0xff]
    %v2348 = vld [vmem:[#allocation13 + $0x128] sm:$0xff]
    %v2349 = vld [vmem:[#allocation13 + $0x130] sm:$0xff]
    %v2350 = vld [vmem:[#allocation13 + $0x138] sm:$0xff]
    %v2351 = vld [vmem:[#allocation13 + $0x140] sm:$0xff]
    %v2352 = vld [vmem:[#allocation13 + $0x148] sm:$0xff]
    %v2353 = vld [vmem:[#allocation13 + $0x150] sm:$0xff]
    %v2354 = vld [vmem:[#allocation13 + $0x158] sm:$0xff]
    %v2355 = vld [vmem:[#allocation13 + $0x160] sm:$0xff]
    %v2356 = vld [vmem:[#allocation13 + $0x168] sm:$0xff]
    %v2357 = vld [vmem:[#allocation13 + $0x170] sm:$0xff]
    %v2358 = vld [vmem:[#allocation13 + $0x178] sm:$0xff]
    %v2359 = vld [vmem:[#allocation13 + $0x180] sm:$0xff]
    %v2360 = vld [vmem:[#allocation13 + $0x188] sm:$0xff]
    %v2361 = vld [vmem:[#allocation13 + $0x190] sm:$0xff]
    %v2362 = vld [vmem:[#allocation13 + $0x198] sm:$0xff]
    %v2363 = vld [vmem:[#allocation13 + $0x1a0] sm:$0xff]
    %v2364 = vld [vmem:[#allocation13 + $0x1a8] sm:$0xff]
    %v2365 = vld [vmem:[#allocation13 + $0x1b0] sm:$0xff]
    %v2366 = vld [vmem:[#allocation13 + $0x1b8] sm:$0xff]
    %v2367 = vld [vmem:[#allocation13 + $0x1c0] sm:$0xff]
    %v2368 = vld [vmem:[#allocation13 + $0x1c8] sm:$0xff]
    %v2369 = vld [vmem:[#allocation13 + $0x1d0] sm:$0xff]
    %v2370 = vld [vmem:[#allocation13 + $0x1d8] sm:$0xff]
    %v2371 = vld [vmem:[#allocation13 + $0x1e0] sm:$0xff]
    %v2372 = vld [vmem:[#allocation13 + $0x1e8] sm:$0xff]
    %v2373 = vld [vmem:[#allocation13 + $0x1f0] sm:$0xff]
    %v2374 = vld [vmem:[#allocation13 + $0x1f8] sm:$0xff]
    %2375 = vmatprep.subr.mxu0 %v2312
    %2376 = vmatpush1.msra.mxu0 %v2311
    %2377 = vmatprep.subr.mxu0 %v2316
    %2378 = vmatpush1.msra.mxu0 %v2315
    %2379 = vmatprep.subr.mxu0 %v2320
    %2380 = vmatpush1.msra.mxu0 %v2319
    %2381 = vmatprep.subr.mxu0 %v2324
    %2382 = vmatpush1.msra.mxu0 %v2323
    %2383 = vmatprep.subr.mxu0 %v2328
    %2384 = vmatpush1.msra.mxu0 %v2327
    %2385 = vmatprep.subr.mxu0 %v2332
    %2386 = vmatpush1.msra.mxu0 %v2331
    %2387 = vmatprep.subr.mxu0 %v2336
    %2388 = vmatpush1.msra.mxu0 %v2335
    %2389 = vmatprep.subr.mxu0 %v2340
    %2390 = vmatpush1.msra.mxu0 %v2339
    %2391 = vmatprep.subr.mxu0 %v2344
    %2392 = vmatpush1.msra.mxu0 %v2343
    %2393 = vmatprep.subr.mxu0 %v2348
    %2394 = vmatpush1.msra.mxu0 %v2347
    %2395 = vmatprep.subr.mxu0 %v2352
    %2396 = vmatpush1.msra.mxu0 %v2351
    %2397 = vmatprep.subr.mxu0 %v2356
    %2398 = vmatpush1.msra.mxu0 %v2355
    %2399 = vmatprep.subr.mxu0 %v2360
    %2400 = vmatpush1.msra.mxu0 %v2359
    %2401 = vmatprep.subr.mxu0 %v2364
    %2402 = vmatpush1.msra.mxu0 %v2363
    %2403 = vmatprep.subr.mxu0 %v2368
    %2404 = vmatpush1.msra.mxu0 %v2367
    %2405 = vmatprep.subr.mxu0 %v2372
    %2406 = vmatpush1.msra.mxu0 %v2371
    %2407 = vmatprep.subr.mxu0 0.0
    %2408 = vmatpush1.msra.mxu0 0.0
    %2409 = vmatprep.subr.mxu0 0.0
    %2410 = vmatpush1.msra.mxu0 0.0
    %2411 = vmatprep.subr.mxu0 0.0
    %2412 = vmatpush1.msra.mxu0 0.0
    %2413 = vmatprep.subr.mxu0 0.0
    %2414 = vmatpush1.msra.mxu0 0.0
    %2415 = vmatprep.subr.mxu0 0.0
    %2416 = vmatpush1.msra.mxu0 0.0
    %2417 = vmatprep.subr.mxu0 0.0
    %2418 = vmatpush1.msra.mxu0 0.0
    %2419 = vmatprep.subr.mxu0 0.0
    %2420 = vmatpush1.msra.mxu0 0.0
    %2421 = vmatprep.subr.mxu0 0.0
    %2422 = vmatpush1.msra.mxu0 0.0
    %2423 = vmatprep.subr.mxu0 0.0
    %2424 = vmatpush1.msra.mxu0 0.0
    %2425 = vmatprep.subr.mxu0 0.0
    %2426 = vmatpush1.msra.mxu0 0.0
    %2427 = vmatprep.subr.mxu0 0.0
    %2428 = vmatpush1.msra.mxu0 0.0
    %2429 = vmatprep.subr.mxu0 0.0
    %2430 = vmatpush1.msra.mxu0 0.0
    %2431 = vmatprep.subr.mxu0 0.0
    %2432 = vmatpush1.msra.mxu0 0.0
    %2433 = vmatprep.subr.mxu0 0.0
    %2434 = vmatpush1.msra.mxu0 0.0
    %2435 = vmatprep.subr.mxu0 0.0
    %2436 = vmatpush1.msra.mxu0 0.0
    %2437 = vmatprep.subr.mxu0 0.0
    %2438 = vmatpush1.msra.mxu0 0.0
    %2439 = vmatprep.mubr.f32.mxu0 0.0
    %2440 = vmatmul.mubr.f32.gmra.mrb[0].mxu0 %v2304
    %v2441 = vpop.f32.mrb[0].mxu0
    %v2442 = vadd.f32 0.0, %v2441
    %v2443 = vpop.f32.mrb[0].mxu0
    %v2444 = vadd.f32 0.0, %v2443
    %2445 = vdwg.mxu0
    %2446 = vmatprep.subr.mxu0 %v2314
    %2447 = vmatpush1.msra.mxu0 %v2313
    %2448 = vmatprep.subr.mxu0 %v2318
    %2449 = vmatpush1.msra.mxu0 %v2317
    %2450 = vmatprep.subr.mxu0 %v2322
    %2451 = vmatpush1.msra.mxu0 %v2321
    %2452 = vmatprep.subr.mxu0 %v2326
    %2453 = vmatpush1.msra.mxu0 %v2325
    %2454 = vmatprep.subr.mxu0 %v2330
    %2455 = vmatpush1.msra.mxu0 %v2329
    %2456 = vmatprep.subr.mxu0 %v2334
    %2457 = vmatpush1.msra.mxu0 %v2333
    %2458 = vmatprep.subr.mxu0 %v2338
    %2459 = vmatpush1.msra.mxu0 %v2337
    %2460 = vmatprep.subr.mxu0 %v2342
    %2461 = vmatpush1.msra.mxu0 %v2341
    %2462 = vmatprep.subr.mxu0 %v2346
    %2463 = vmatpush1.msra.mxu0 %v2345
    %2464 = vmatprep.subr.mxu0 %v2350
    %2465 = vmatpush1.msra.mxu0 %v2349
    %2466 = vmatprep.subr.mxu0 %v2354
    %2467 = vmatpush1.msra.mxu0 %v2353
    %2468 = vmatprep.subr.mxu0 %v2358
    %2469 = vmatpush1.msra.mxu0 %v2357
    %2470 = vmatprep.subr.mxu0 %v2362
    %2471 = vmatpush1.msra.mxu0 %v2361
    %2472 = vmatprep.subr.mxu0 %v2366
    %2473 = vmatpush1.msra.mxu0 %v2365
    %2474 = vmatprep.subr.mxu0 %v2370
    %2475 = vmatpush1.msra.mxu0 %v2369
    %2476 = vmatprep.subr.mxu0 %v2374
    %2477 = vmatpush1.msra.mxu0 %v2373
    %2478 = vmatprep.subr.mxu0 0.0
    %2479 = vmatpush1.msra.mxu0 0.0
    %2480 = vmatprep.subr.mxu0 0.0
    %2481 = vmatpush1.msra.mxu0 0.0
    %2482 = vmatprep.subr.mxu0 0.0
    %2483 = vmatpush1.msra.mxu0 0.0
    %2484 = vmatprep.subr.mxu0 0.0
    %2485 = vmatpush1.msra.mxu0 0.0
    %2486 = vmatprep.subr.mxu0 0.0
    %2487 = vmatpush1.msra.mxu0 0.0
    %2488 = vmatprep.subr.mxu0 0.0
    %2489 = vmatpush1.msra.mxu0 0.0
    %2490 = vmatprep.subr.mxu0 0.0
    %2491 = vmatpush1.msra.mxu0 0.0
    %2492 = vmatprep.subr.mxu0 0.0
    %2493 = vmatpush1.msra.mxu0 0.0
    %2494 = vmatprep.subr.mxu0 0.0
    %2495 = vmatpush1.msra.mxu0 0.0
    %2496 = vmatprep.subr.mxu0 0.0
    %2497 = vmatpush1.msra.mxu0 0.0
    %2498 = vmatprep.subr.mxu0 0.0
    %2499 = vmatpush1.msra.mxu0 0.0
    %2500 = vmatprep.subr.mxu0 0.0
    %2501 = vmatpush1.msra.mxu0 0.0
    %2502 = vmatprep.subr.mxu0 0.0
    %2503 = vmatpush1.msra.mxu0 0.0
    %2504 = vmatprep.subr.mxu0 0.0
    %2505 = vmatpush1.msra.mxu0 0.0
    %2506 = vmatprep.subr.mxu0 0.0
    %2507 = vmatpush1.msra.mxu0 0.0
    %2508 = vmatprep.subr.mxu0 0.0
    %2509 = vmatpush1.msra.mxu0 0.0
    %2510 = vmatprep.mubr.f32.mxu0 0.0
    %2511 = vmatmul.mubr.f32.gmra.mrb[0].mxu0 %v2304
    %v2512 = vpop.f32.mrb[0].mxu0
    %v2513 = vadd.f32 0.0, %v2512
    %v2514 = vpop.f32.mrb[0].mxu0
    %v2515 = vadd.f32 0.0, %v2514
    %2516 = vdwg.mxu0
    %v2517 = vadd.f32 %v2307, %v2442
    %v2518 = vadd.f32 %v2308, %v2444
    %v2519 = vadd.f32 %v2309, %v2513
    %v2520 = vadd.f32 %v2310, %v2515
    %v2521 = vxor.u32 %v2517, 2147483648
    %v2522 = vmul.f32 %v2521, 1.442695
    %v2523 = vpow.pop %v2522
    %v2524 = vadd.f32 %v2523, 1.0
    %v2525 = vrcp.pop %v2524
    %v2526 = vmul.f32 1.0, %v2525
    %v2527 = vxor.u32 %v2518, 2147483648
    %v2528 = vmul.f32 %v2527, 1.442695
    %v2529 = vpow.pop %v2528
    %v2530 = vadd.f32 %v2529, 1.0
    %v2531 = vrcp.pop %v2530
    %v2532 = vmul.f32 1.0, %v2531
    %v2533 = vtanh.pop %v2519
    %v2534 = vxor.u32 %v2520, 2147483648
    %v2535 = vmul.f32 %v2534, 1.442695
    %v2536 = vpow.pop %v2535
    %v2537 = vadd.f32 %v2536, 1.0
    %v2538 = vrcp.pop %v2537
    %v2539 = vmul.f32 1.0, %v2538
    %v2540 = vmul.f32 %v2532, %v2305
    %v2541 = vmul.f32 %v2526, %v2533
    %v2542 = vadd.f32 %v2540, %v2541
    %v2543 = vtanh.pop %v2542
    %v2544 = vmul.f32 %v2539, %v2543
    %2545 = vst [vmem:[#allocation7] sm:$0xff] %v2542
    %2546 = vst [vmem:[#allocation6] sm:$0xff] %v2544
    %s2547 = scalar_lea.vmem [#allocation3], 32
    %v2548 = vld [vmem:[%s2547] sm:$0xff]
    %v2549 = vmul.f32 %v2544, %v2548
    %s2550 = scalar_lea.vmem [#allocation4], 32
    %v2551 = vld [vmem:[%s2550] sm:$0xff]
    %v2552 = vadd.f32 %v2549, %v2551
    %s2553 = scalar_lea.vmem [#allocation5], 32
    %2554 = vst [vmem:[%s2553] sm:$0xff] %v2552
    %v2555 = vld [vmem:[#allocation6] sm:$0xff]
    %v2556 = vld [vmem:[#allocation7] sm:$0xff]
    %s2557 = scalar_lea.vmem [#allocation2], 160
    %v2558 = vld [vmem:[%s2557] sm:$0xff]
    %v2559 = vld [vmem:[%s2557 + $0x8] sm:$0xff]
    %v2560 = vld [vmem:[%s2557 + $0x10] sm:$0xff]
    %v2561 = vld [vmem:[%s2557 + $0x18] sm:$0xff]
    %v2562 = vld [vmem:[#allocation13] sm:$0xff]
    %v2563 = vld [vmem:[#allocation13 + $0x8] sm:$0xff]
    %v2564 = vld [vmem:[#allocation13 + $0x10] sm:$0xff]
    %v2565 = vld [vmem:[#allocation13 + $0x18] sm:$0xff]
    %v2566 = vld [vmem:[#allocation13 + $0x20] sm:$0xff]
    %v2567 = vld [vmem:[#allocation13 + $0x28] sm:$0xff]
    %v2568 = vld [vmem:[#allocation13 + $0x30] sm:$0xff]
    %v2569 = vld [vmem:[#allocation13 + $0x38] sm:$0xff]
    %v2570 = vld [vmem:[#allocation13 + $0x40] sm:$0xff]
    %v2571 = vld [vmem:[#allocation13 + $0x48] sm:$0xff]
    %v2572 = vld [vmem:[#allocation13 + $0x50] sm:$0xff]
    %v2573 = vld [vmem:[#allocation13 + $0x58] sm:$0xff]
    %v2574 = vld [vmem:[#allocation13 + $0x60] sm:$0xff]
    %v2575 = vld [vmem:[#allocation13 + $0x68] sm:$0xff]
    %v2576 = vld [vmem:[#allocation13 + $0x70] sm:$0xff]
    %v2577 = vld [vmem:[#allocation13 + $0x78] sm:$0xff]
    %v2578 = vld [vmem:[#allocation13 + $0x80] sm:$0xff]
    %v2579 = vld [vmem:[#allocation13 + $0x88] sm:$0xff]
    %v2580 = vld [vmem:[#allocation13 + $0x90] sm:$0xff]
    %v2581 = vld [vmem:[#allocation13 + $0x98] sm:$0xff]
    %v2582 = vld [vmem:[#allocation13 + $0xa0] sm:$0xff]
    %v2583 = vld [vmem:[#allocation13 + $0xa8] sm:$0xff]
    %v2584 = vld [vmem:[#allocation13 + $0xb0] sm:$0xff]
    %v2585 = vld [vmem:[#allocation13 + $0xb8] sm:$0xff]
    %v2586 = vld [vmem:[#allocation13 + $0xc0] sm:$0xff]
    %v2587 = vld [vmem:[#allocation13 + $0xc8] sm:$0xff]
    %v2588 = vld [vmem:[#allocation13 + $0xd0] sm:$0xff]
    %v2589 = vld [vmem:[#allocation13 + $0xd8] sm:$0xff]
    %v2590 = vld [vmem:[#allocation13 + $0xe0] sm:$0xff]
    %v2591 = vld [vmem:[#allocation13 + $0xe8] sm:$0xff]
    %v2592 = vld [vmem:[#allocation13 + $0xf0] sm:$0xff]
    %v2593 = vld [vmem:[#allocation13 + $0xf8] sm:$0xff]
    %v2594 = vld [vmem:[#allocation13 + $0x100] sm:$0xff]
    %v2595 = vld [vmem:[#allocation13 + $0x108] sm:$0xff]
    %v2596 = vld [vmem:[#allocation13 + $0x110] sm:$0xff]
    %v2597 = vld [vmem:[#allocation13 + $0x118] sm:$0xff]
    %v2598 = vld [vmem:[#allocation13 + $0x120] sm:$0xff]
    %v2599 = vld [vmem:[#allocation13 + $0x128] sm:$0xff]
    %v2600 = vld [vmem:[#allocation13 + $0x130] sm:$0xff]
    %v2601 = vld [vmem:[#allocation13 + $0x138] sm:$0xff]
    %v2602 = vld [vmem:[#allocation13 + $0x140] sm:$0xff]
    %v2603 = vld [vmem:[#allocation13 + $0x148] sm:$0xff]
    %v2604 = vld [vmem:[#allocation13 + $0x150] sm:$0xff]
    %v2605 = vld [vmem:[#allocation13 + $0x158] sm:$0xff]
    %v2606 = vld [vmem:[#allocation13 + $0x160] sm:$0xff]
    %v2607 = vld [vmem:[#allocation13 + $0x168] sm:$0xff]
    %v2608 = vld [vmem:[#allocation13 + $0x170] sm:$0xff]
    %v2609 = vld [vmem:[#allocation13 + $0x178] sm:$0xff]
    %v2610 = vld [vmem:[#allocation13 + $0x180] sm:$0xff]
    %v2611 = vld [vmem:[#allocation13 + $0x188] sm:$0xff]
    %v2612 = vld [vmem:[#allocation13 + $0x190] sm:$0xff]
    %v2613 = vld [vmem:[#allocation13 + $0x198] sm:$0xff]
    %v2614 = vld [vmem:[#allocation13 + $0x1a0] sm:$0xff]
    %v2615 = vld [vmem:[#allocation13 + $0x1a8] sm:$0xff]
    %v2616 = vld [vmem:[#allocation13 + $0x1b0] sm:$0xff]
    %v2617 = vld [vmem:[#allocation13 + $0x1b8] sm:$0xff]
    %v2618 = vld [vmem:[#allocation13 + $0x1c0] sm:$0xff]
    %v2619 = vld [vmem:[#allocation13 + $0x1c8] sm:$0xff]
    %v2620 = vld [vmem:[#allocation13 + $0x1d0] sm:$0xff]
    %v2621 = vld [vmem:[#allocation13 + $0x1d8] sm:$0xff]
    %v2622 = vld [vmem:[#allocation13 + $0x1e0] sm:$0xff]
    %v2623 = vld [vmem:[#allocation13 + $0x1e8] sm:$0xff]
    %v2624 = vld [vmem:[#allocation13 + $0x1f0] sm:$0xff]
    %v2625 = vld [vmem:[#allocation13 + $0x1f8] sm:$0xff]
    %2626 = vmatprep.subr.mxu0 %v2563
    %2627 = vmatpush1.msra.mxu0 %v2562
    %2628 = vmatprep.subr.mxu0 %v2567
    %2629 = vmatpush1.msra.mxu0 %v2566
    %2630 = vmatprep.subr.mxu0 %v2571
    %2631 = vmatpush1.msra.mxu0 %v2570
    %2632 = vmatprep.subr.mxu0 %v2575
    %2633 = vmatpush1.msra.mxu0 %v2574
    %2634 = vmatprep.subr.mxu0 %v2579
    %2635 = vmatpush1.msra.mxu0 %v2578
    %2636 = vmatprep.subr.mxu0 %v2583
    %2637 = vmatpush1.msra.mxu0 %v2582
    %2638 = vmatprep.subr.mxu0 %v2587
    %2639 = vmatpush1.msra.mxu0 %v2586
    %2640 = vmatprep.subr.mxu0 %v2591
    %2641 = vmatpush1.msra.mxu0 %v2590
    %2642 = vmatprep.subr.mxu0 %v2595
    %2643 = vmatpush1.msra.mxu0 %v2594
    %2644 = vmatprep.subr.mxu0 %v2599
    %2645 = vmatpush1.msra.mxu0 %v2598
    %2646 = vmatprep.subr.mxu0 %v2603
    %2647 = vmatpush1.msra.mxu0 %v2602
    %2648 = vmatprep.subr.mxu0 %v2607
    %2649 = vmatpush1.msra.mxu0 %v2606
    %2650 = vmatprep.subr.mxu0 %v2611
    %2651 = vmatpush1.msra.mxu0 %v2610
    %2652 = vmatprep.subr.mxu0 %v2615
    %2653 = vmatpush1.msra.mxu0 %v2614
    %2654 = vmatprep.subr.mxu0 %v2619
    %2655 = vmatpush1.msra.mxu0 %v2618
    %2656 = vmatprep.subr.mxu0 %v2623
    %2657 = vmatpush1.msra.mxu0 %v2622
    %2658 = vmatprep.subr.mxu0 0.0
    %2659 = vmatpush1.msra.mxu0 0.0
    %2660 = vmatprep.subr.mxu0 0.0
    %2661 = vmatpush1.msra.mxu0 0.0
    %2662 = vmatprep.subr.mxu0 0.0
    %2663 = vmatpush1.msra.mxu0 0.0
    %2664 = vmatprep.subr.mxu0 0.0
    %2665 = vmatpush1.msra.mxu0 0.0
    %2666 = vmatprep.subr.mxu0 0.0
    %2667 = vmatpush1.msra.mxu0 0.0
    %2668 = vmatprep.subr.mxu0 0.0
    %2669 = vmatpush1.msra.mxu0 0.0
    %2670 = vmatprep.subr.mxu0 0.0
    %2671 = vmatpush1.msra.mxu0 0.0
    %2672 = vmatprep.subr.mxu0 0.0
    %2673 = vmatpush1.msra.mxu0 0.0
    %2674 = vmatprep.subr.mxu0 0.0
    %2675 = vmatpush1.msra.mxu0 0.0
    %2676 = vmatprep.subr.mxu0 0.0
    %2677 = vmatpush1.msra.mxu0 0.0
    %2678 = vmatprep.subr.mxu0 0.0
    %2679 = vmatpush1.msra.mxu0 0.0
    %2680 = vmatprep.subr.mxu0 0.0
    %2681 = vmatpush1.msra.mxu0 0.0
    %2682 = vmatprep.subr.mxu0 0.0
    %2683 = vmatpush1.msra.mxu0 0.0
    %2684 = vmatprep.subr.mxu0 0.0
    %2685 = vmatpush1.msra.mxu0 0.0
    %2686 = vmatprep.subr.mxu0 0.0
    %2687 = vmatpush1.msra.mxu0 0.0
    %2688 = vmatprep.subr.mxu0 0.0
    %2689 = vmatpush1.msra.mxu0 0.0
    %2690 = vmatprep.mubr.f32.mxu0 0.0
    %2691 = vmatmul.mubr.f32.gmra.mrb[0].mxu0 %v2555
    %v2692 = vpop.f32.mrb[0].mxu0
    %v2693 = vadd.f32 0.0, %v2692
    %v2694 = vpop.f32.mrb[0].mxu0
    %v2695 = vadd.f32 0.0, %v2694
    %2696 = vdwg.mxu0
    %2697 = vmatprep.subr.mxu0 %v2565
    %2698 = vmatpush1.msra.mxu0 %v2564
    %2699 = vmatprep.subr.mxu0 %v2569
    %2700 = vmatpush1.msra.mxu0 %v2568
    %2701 = vmatprep.subr.mxu0 %v2573
    %2702 = vmatpush1.msra.mxu0 %v2572
    %2703 = vmatprep.subr.mxu0 %v2577
    %2704 = vmatpush1.msra.mxu0 %v2576
    %2705 = vmatprep.subr.mxu0 %v2581
    %2706 = vmatpush1.msra.mxu0 %v2580
    %2707 = vmatprep.subr.mxu0 %v2585
    %2708 = vmatpush1.msra.mxu0 %v2584
    %2709 = vmatprep.subr.mxu0 %v2589
    %2710 = vmatpush1.msra.mxu0 %v2588
    %2711 = vmatprep.subr.mxu0 %v2593
    %2712 = vmatpush1.msra.mxu0 %v2592
    %2713 = vmatprep.subr.mxu0 %v2597
    %2714 = vmatpush1.msra.mxu0 %v2596
    %2715 = vmatprep.subr.mxu0 %v2601
    %2716 = vmatpush1.msra.mxu0 %v2600
    %2717 = vmatprep.subr.mxu0 %v2605
    %2718 = vmatpush1.msra.mxu0 %v2604
    %2719 = vmatprep.subr.mxu0 %v2609
    %2720 = vmatpush1.msra.mxu0 %v2608
    %2721 = vmatprep.subr.mxu0 %v2613
    %2722 = vmatpush1.msra.mxu0 %v2612
    %2723 = vmatprep.subr.mxu0 %v2617
    %2724 = vmatpush1.msra.mxu0 %v2616
    %2725 = vmatprep.subr.mxu0 %v2621
    %2726 = vmatpush1.msra.mxu0 %v2620
    %2727 = vmatprep.subr.mxu0 %v2625
    %2728 = vmatpush1.msra.mxu0 %v2624
    %2729 = vmatprep.subr.mxu0 0.0
    %2730 = vmatpush1.msra.mxu0 0.0
    %2731 = vmatprep.subr.mxu0 0.0
    %2732 = vmatpush1.msra.mxu0 0.0
    %2733 = vmatprep.subr.mxu0 0.0
    %2734 = vmatpush1.msra.mxu0 0.0
    %2735 = vmatprep.subr.mxu0 0.0
    %2736 = vmatpush1.msra.mxu0 0.0
    %2737 = vmatprep.subr.mxu0 0.0
    %2738 = vmatpush1.msra.mxu0 0.0
    %2739 = vmatprep.subr.mxu0 0.0
    %2740 = vmatpush1.msra.mxu0 0.0
    %2741 = vmatprep.subr.mxu0 0.0
    %2742 = vmatpush1.msra.mxu0 0.0
    %2743 = vmatprep.subr.mxu0 0.0
    %2744 = vmatpush1.msra.mxu0 0.0
    %2745 = vmatprep.subr.mxu0 0.0
    %2746 = vmatpush1.msra.mxu0 0.0
    %2747 = vmatprep.subr.mxu0 0.0
    %2748 = vmatpush1.msra.mxu0 0.0
    %2749 = vmatprep.subr.mxu0 0.0
    %2750 = vmatpush1.msra.mxu0 0.0
    %2751 = vmatprep.subr.mxu0 0.0
    %2752 = vmatpush1.msra.mxu0 0.0
    %2753 = vmatprep.subr.mxu0 0.0
    %2754 = vmatpush1.msra.mxu0 0.0
    %2755 = vmatprep.subr.mxu0 0.0
    %2756 = vmatpush1.msra.mxu0 0.0
    %2757 = vmatprep.subr.mxu0 0.0
    %2758 = vmatpush1.msra.mxu0 0.0
    %2759 = vmatprep.subr.mxu0 0.0
    %2760 = vmatpush1.msra.mxu0 0.0
    %2761 = vmatprep.mubr.f32.mxu0 0.0
    %2762 = vmatmul.mubr.f32.gmra.mrb[0].mxu0 %v2555
    %v2763 = vpop.f32.mrb[0].mxu0
    %v2764 = vadd.f32 0.0, %v2763
    %v2765 = vpop.f32.mrb[0].mxu0
    %v2766 = vadd.f32 0.0, %v2765
    %2767 = vdwg.mxu0
    %v2768 = vadd.f32 %v2558, %v2693
    %v2769 = vadd.f32 %v2559, %v2695
    %v2770 = vadd.f32 %v2560, %v2764
    %v2771 = vadd.f32 %v2561, %v2766
    %v2772 = vxor.u32 %v2768, 2147483648
    %v2773 = vmul.f32 %v2772, 1.442695
    %v2774 = vpow.pop %v2773
    %v2775 = vadd.f32 %v2774, 1.0
    %v2776 = vrcp.pop %v2775
    %v2777 = vmul.f32 1.0, %v2776
    %v2778 = vxor.u32 %v2769, 2147483648
    %v2779 = vmul.f32 %v2778, 1.442695
    %v2780 = vpow.pop %v2779
    %v2781 = vadd.f32 %v2780, 1.0
    %v2782 = vrcp.pop %v2781
    %v2783 = vmul.f32 1.0, %v2782
    %v2784 = vtanh.pop %v2770
    %v2785 = vxor.u32 %v2771, 2147483648
    %v2786 = vmul.f32 %v2785, 1.442695
    %v2787 = vpow.pop %v2786
    %v2788 = vadd.f32 %v2787, 1.0
    %v2789 = vrcp.pop %v2788
    %v2790 = vmul.f32 1.0, %v2789
    %v2791 = vmul.f32 %v2783, %v2556
    %v2792 = vmul.f32 %v2777, %v2784
    %v2793 = vadd.f32 %v2791, %v2792
    %v2794 = vtanh.pop %v2793
    %v2795 = vmul.f32 %v2790, %v2794
    %2796 = vst [vmem:[#allocation7] sm:$0xff] %v2793
    %2797 = vst [vmem:[#allocation6] sm:$0xff] %v2795
    %s2798 = scalar_lea.vmem [#allocation3], 40
    %v2799 = vld [vmem:[%s2798] sm:$0xff]
    %v2800 = vmul.f32 %v2795, %v2799
    %s2801 = scalar_lea.vmem [#allocation4], 40
    %v2802 = vld [vmem:[%s2801] sm:$0xff]
    %v2803 = vadd.f32 %v2800, %v2802
    %s2804 = scalar_lea.vmem [#allocation5], 40
    %2805 = vst [vmem:[%s2804] sm:$0xff] %v2803
    %v2806 = vld [vmem:[#allocation6] sm:$0xff]
    %v2807 = vld [vmem:[#allocation7] sm:$0xff]
    %s2808 = scalar_lea.vmem [#allocation2], 192
    %v2809 = vld [vmem:[%s2808] sm:$0xff]
    %v2810 = vld [vmem:[%s2808 + $0x8] sm:$0xff]
    %v2811 = vld [vmem:[%s2808 + $0x10] sm:$0xff]
    %v2812 = vld [vmem:[%s2808 + $0x18] sm:$0xff]
    %v2813 = vld [vmem:[#allocation13] sm:$0xff]
    %v2814 = vld [vmem:[#allocation13 + $0x8] sm:$0xff]
    %v2815 = vld [vmem:[#allocation13 + $0x10] sm:$0xff]
    %v2816 = vld [vmem:[#allocation13 + $0x18] sm:$0xff]
    %v2817 = vld [vmem:[#allocation13 + $0x20] sm:$0xff]
    %v2818 = vld [vmem:[#allocation13 + $0x28] sm:$0xff]
    %v2819 = vld [vmem:[#allocation13 + $0x30] sm:$0xff]
    %v2820 = vld [vmem:[#allocation13 + $0x38] sm:$0xff]
    %v2821 = vld [vmem:[#allocation13 + $0x40] sm:$0xff]
    %v2822 = vld [vmem:[#allocation13 + $0x48] sm:$0xff]
    %v2823 = vld [vmem:[#allocation13 + $0x50] sm:$0xff]
    %v2824 = vld [vmem:[#allocation13 + $0x58] sm:$0xff]
    %v2825 = vld [vmem:[#allocation13 + $0x60] sm:$0xff]
    %v2826 = vld [vmem:[#allocation13 + $0x68] sm:$0xff]
    %v2827 = vld [vmem:[#allocation13 + $0x70] sm:$0xff]
    %v2828 = vld [vmem:[#allocation13 + $0x78] sm:$0xff]
    %v2829 = vld [vmem:[#allocation13 + $0x80] sm:$0xff]
    %v2830 = vld [vmem:[#allocation13 + $0x88] sm:$0xff]
    %v2831 = vld [vmem:[#allocation13 + $0x90] sm:$0xff]
    %v2832 = vld [vmem:[#allocation13 + $0x98] sm:$0xff]
    %v2833 = vld [vmem:[#allocation13 + $0xa0] sm:$0xff]
    %v2834 = vld [vmem:[#allocation13 + $0xa8] sm:$0xff]
    %v2835 = vld [vmem:[#allocation13 + $0xb0] sm:$0xff]
    %v2836 = vld [vmem:[#allocation13 + $0xb8] sm:$0xff]
    %v2837 = vld [vmem:[#allocation13 + $0xc0] sm:$0xff]
    %v2838 = vld [vmem:[#allocation13 + $0xc8] sm:$0xff]
    %v2839 = vld [vmem:[#allocation13 + $0xd0] sm:$0xff]
    %v2840 = vld [vmem:[#allocation13 + $0xd8] sm:$0xff]
    %v2841 = vld [vmem:[#allocation13 + $0xe0] sm:$0xff]
    %v2842 = vld [vmem:[#allocation13 + $0xe8] sm:$0xff]
    %v2843 = vld [vmem:[#allocation13 + $0xf0] sm:$0xff]
    %v2844 = vld [vmem:[#allocation13 + $0xf8] sm:$0xff]
    %v2845 = vld [vmem:[#allocation13 + $0x100] sm:$0xff]
    %v2846 = vld [vmem:[#allocation13 + $0x108] sm:$0xff]
    %v2847 = vld [vmem:[#allocation13 + $0x110] sm:$0xff]
    %v2848 = vld [vmem:[#allocation13 + $0x118] sm:$0xff]
    %v2849 = vld [vmem:[#allocation13 + $0x120] sm:$0xff]
    %v2850 = vld [vmem:[#allocation13 + $0x128] sm:$0xff]
    %v2851 = vld [vmem:[#allocation13 + $0x130] sm:$0xff]
    %v2852 = vld [vmem:[#allocation13 + $0x138] sm:$0xff]
    %v2853 = vld [vmem:[#allocation13 + $0x140] sm:$0xff]
    %v2854 = vld [vmem:[#allocation13 + $0x148] sm:$0xff]
    %v2855 = vld [vmem:[#allocation13 + $0x150] sm:$0xff]
    %v2856 = vld [vmem:[#allocation13 + $0x158] sm:$0xff]
    %v2857 = vld [vmem:[#allocation13 + $0x160] sm:$0xff]
    %v2858 = vld [vmem:[#allocation13 + $0x168] sm:$0xff]
    %v2859 = vld [vmem:[#allocation13 + $0x170] sm:$0xff]
    %v2860 = vld [vmem:[#allocation13 + $0x178] sm:$0xff]
    %v2861 = vld [vmem:[#allocation13 + $0x180] sm:$0xff]
    %v2862 = vld [vmem:[#allocation13 + $0x188] sm:$0xff]
    %v2863 = vld [vmem:[#allocation13 + $0x190] sm:$0xff]
    %v2864 = vld [vmem:[#allocation13 + $0x198] sm:$0xff]
    %v2865 = vld [vmem:[#allocation13 + $0x1a0] sm:$0xff]
    %v2866 = vld [vmem:[#allocation13 + $0x1a8] sm:$0xff]
    %v2867 = vld [vmem:[#allocation13 + $0x1b0] sm:$0xff]
    %v2868 = vld [vmem:[#allocation13 + $0x1b8] sm:$0xff]
    %v2869 = vld [vmem:[#allocation13 + $0x1c0] sm:$0xff]
    %v2870 = vld [vmem:[#allocation13 + $0x1c8] sm:$0xff]
    %v2871 = vld [vmem:[#allocation13 + $0x1d0] sm:$0xff]
    %v2872 = vld [vmem:[#allocation13 + $0x1d8] sm:$0xff]
    %v2873 = vld [vmem:[#allocation13 + $0x1e0] sm:$0xff]
    %v2874 = vld [vmem:[#allocation13 + $0x1e8] sm:$0xff]
    %v2875 = vld [vmem:[#allocation13 + $0x1f0] sm:$0xff]
    %v2876 = vld [vmem:[#allocation13 + $0x1f8] sm:$0xff]
    %2877 = vmatprep.subr.mxu0 %v2814
    %2878 = vmatpush1.msra.mxu0 %v2813
    %2879 = vmatprep.subr.mxu0 %v2818
    %2880 = vmatpush1.msra.mxu0 %v2817
    %2881 = vmatprep.subr.mxu0 %v2822
    %2882 = vmatpush1.msra.mxu0 %v2821
    %2883 = vmatprep.subr.mxu0 %v2826
    %2884 = vmatpush1.msra.mxu0 %v2825
    %2885 = vmatprep.subr.mxu0 %v2830
    %2886 = vmatpush1.msra.mxu0 %v2829
    %2887 = vmatprep.subr.mxu0 %v2834
    %2888 = vmatpush1.msra.mxu0 %v2833
    %2889 = vmatprep.subr.mxu0 %v2838
    %2890 = vmatpush1.msra.mxu0 %v2837
    %2891 = vmatprep.subr.mxu0 %v2842
    %2892 = vmatpush1.msra.mxu0 %v2841
    %2893 = vmatprep.subr.mxu0 %v2846
    %2894 = vmatpush1.msra.mxu0 %v2845
    %2895 = vmatprep.subr.mxu0 %v2850
    %2896 = vmatpush1.msra.mxu0 %v2849
    %2897 = vmatprep.subr.mxu0 %v2854
    %2898 = vmatpush1.msra.mxu0 %v2853
    %2899 = vmatprep.subr.mxu0 %v2858
    %2900 = vmatpush1.msra.mxu0 %v2857
    %2901 = vmatprep.subr.mxu0 %v2862
    %2902 = vmatpush1.msra.mxu0 %v2861
    %2903 = vmatprep.subr.mxu0 %v2866
    %2904 = vmatpush1.msra.mxu0 %v2865
    %2905 = vmatprep.subr.mxu0 %v2870
    %2906 = vmatpush1.msra.mxu0 %v2869
    %2907 = vmatprep.subr.mxu0 %v2874
    %2908 = vmatpush1.msra.mxu0 %v2873
    %2909 = vmatprep.subr.mxu0 0.0
    %2910 = vmatpush1.msra.mxu0 0.0
    %2911 = vmatprep.subr.mxu0 0.0
    %2912 = vmatpush1.msra.mxu0 0.0
    %2913 = vmatprep.subr.mxu0 0.0
    %2914 = vmatpush1.msra.mxu0 0.0
    %2915 = vmatprep.subr.mxu0 0.0
    %2916 = vmatpush1.msra.mxu0 0.0
    %2917 = vmatprep.subr.mxu0 0.0
    %2918 = vmatpush1.msra.mxu0 0.0
    %2919 = vmatprep.subr.mxu0 0.0
    %2920 = vmatpush1.msra.mxu0 0.0
    %2921 = vmatprep.subr.mxu0 0.0
    %2922 = vmatpush1.msra.mxu0 0.0
    %2923 = vmatprep.subr.mxu0 0.0
    %2924 = vmatpush1.msra.mxu0 0.0
    %2925 = vmatprep.subr.mxu0 0.0
    %2926 = vmatpush1.msra.mxu0 0.0
    %2927 = vmatprep.subr.mxu0 0.0
    %2928 = vmatpush1.msra.mxu0 0.0
    %2929 = vmatprep.subr.mxu0 0.0
    %2930 = vmatpush1.msra.mxu0 0.0
    %2931 = vmatprep.subr.mxu0 0.0
    %2932 = vmatpush1.msra.mxu0 0.0
    %2933 = vmatprep.subr.mxu0 0.0
    %2934 = vmatpush1.msra.mxu0 0.0
    %2935 = vmatprep.subr.mxu0 0.0
    %2936 = vmatpush1.msra.mxu0 0.0
    %2937 = vmatprep.subr.mxu0 0.0
    %2938 = vmatpush1.msra.mxu0 0.0
    %2939 = vmatprep.subr.mxu0 0.0
    %2940 = vmatpush1.msra.mxu0 0.0
    %2941 = vmatprep.mubr.f32.mxu0 0.0
    %2942 = vmatmul.mubr.f32.gmra.mrb[0].mxu0 %v2806
    %v2943 = vpop.f32.mrb[0].mxu0
    %v2944 = vadd.f32 0.0, %v2943
    %v2945 = vpop.f32.mrb[0].mxu0
    %v2946 = vadd.f32 0.0, %v2945
    %2947 = vdwg.mxu0
    %2948 = vmatprep.subr.mxu0 %v2816
    %2949 = vmatpush1.msra.mxu0 %v2815
    %2950 = vmatprep.subr.mxu0 %v2820
    %2951 = vmatpush1.msra.mxu0 %v2819
    %2952 = vmatprep.subr.mxu0 %v2824
    %2953 = vmatpush1.msra.mxu0 %v2823
    %2954 = vmatprep.subr.mxu0 %v2828
    %2955 = vmatpush1.msra.mxu0 %v2827
    %2956 = vmatprep.subr.mxu0 %v2832
    %2957 = vmatpush1.msra.mxu0 %v2831
    %2958 = vmatprep.subr.mxu0 %v2836
    %2959 = vmatpush1.msra.mxu0 %v2835
    %2960 = vmatprep.subr.mxu0 %v2840
    %2961 = vmatpush1.msra.mxu0 %v2839
    %2962 = vmatprep.subr.mxu0 %v2844
    %2963 = vmatpush1.msra.mxu0 %v2843
    %2964 = vmatprep.subr.mxu0 %v2848
    %2965 = vmatpush1.msra.mxu0 %v2847
    %2966 = vmatprep.subr.mxu0 %v2852
    %2967 = vmatpush1.msra.mxu0 %v2851
    %2968 = vmatprep.subr.mxu0 %v2856
    %2969 = vmatpush1.msra.mxu0 %v2855
    %2970 = vmatprep.subr.mxu0 %v2860
    %2971 = vmatpush1.msra.mxu0 %v2859
    %2972 = vmatprep.subr.mxu0 %v2864
    %2973 = vmatpush1.msra.mxu0 %v2863
    %2974 = vmatprep.subr.mxu0 %v2868
    %2975 = vmatpush1.msra.mxu0 %v2867
    %2976 = vmatprep.subr.mxu0 %v2872
    %2977 = vmatpush1.msra.mxu0 %v2871
    %2978 = vmatprep.subr.mxu0 %v2876
    %2979 = vmatpush1.msra.mxu0 %v2875
    %2980 = vmatprep.subr.mxu0 0.0
    %2981 = vmatpush1.msra.mxu0 0.0
    %2982 = vmatprep.subr.mxu0 0.0
    %2983 = vmatpush1.msra.mxu0 0.0
    %2984 = vmatprep.subr.mxu0 0.0
    %2985 = vmatpush1.msra.mxu0 0.0
    %2986 = vmatprep.subr.mxu0 0.0
    %2987 = vmatpush1.msra.mxu0 0.0
    %2988 = vmatprep.subr.mxu0 0.0
    %2989 = vmatpush1.msra.mxu0 0.0
    %2990 = vmatprep.subr.mxu0 0.0
    %2991 = vmatpush1.msra.mxu0 0.0
    %2992 = vmatprep.subr.mxu0 0.0
    %2993 = vmatpush1.msra.mxu0 0.0
    %2994 = vmatprep.subr.mxu0 0.0
    %2995 = vmatpush1.msra.mxu0 0.0
    %2996 = vmatprep.subr.mxu0 0.0
    %2997 = vmatpush1.msra.mxu0 0.0
    %2998 = vmatprep.subr.mxu0 0.0
    %2999 = vmatpush1.msra.mxu0 0.0
    %3000 = vmatprep.subr.mxu0 0.0
    %3001 = vmatpush1.msra.mxu0 0.0
    %3002 = vmatprep.subr.mxu0 0.0
    %3003 = vmatpush1.msra.mxu0 0.0
    %3004 = vmatprep.subr.mxu0 0.0
    %3005 = vmatpush1.msra.mxu0 0.0
    %3006 = vmatprep.subr.mxu0 0.0
    %3007 = vmatpush1.msra.mxu0 0.0
    %3008 = vmatprep.subr.mxu0 0.0
    %3009 = vmatpush1.msra.mxu0 0.0
    %3010 = vmatprep.subr.mxu0 0.0
    %3011 = vmatpush1.msra.mxu0 0.0
    %3012 = vmatprep.mubr.f32.mxu0 0.0
    %3013 = vmatmul.mubr.f32.gmra.mrb[0].mxu0 %v2806
    %v3014 = vpop.f32.mrb[0].mxu0
    %v3015 = vadd.f32 0.0, %v3014
    %v3016 = vpop.f32.mrb[0].mxu0
    %v3017 = vadd.f32 0.0, %v3016
    %3018 = vdwg.mxu0
    %v3019 = vadd.f32 %v2809, %v2944
    %v3020 = vadd.f32 %v2810, %v2946
    %v3021 = vadd.f32 %v2811, %v3015
    %v3022 = vadd.f32 %v2812, %v3017
    %v3023 = vxor.u32 %v3019, 2147483648
    %v3024 = vmul.f32 %v3023, 1.442695
    %v3025 = vpow.pop %v3024
    %v3026 = vadd.f32 %v3025, 1.0
    %v3027 = vrcp.pop %v3026
    %v3028 = vmul.f32 1.0, %v3027
    %v3029 = vxor.u32 %v3020, 2147483648
    %v3030 = vmul.f32 %v3029, 1.442695
    %v3031 = vpow.pop %v3030
    %v3032 = vadd.f32 %v3031, 1.0
    %v3033 = vrcp.pop %v3032
    %v3034 = vmul.f32 1.0, %v3033
    %v3035 = vtanh.pop %v3021
    %v3036 = vxor.u32 %v3022, 2147483648
    %v3037 = vmul.f32 %v3036, 1.442695
    %v3038 = vpow.pop %v3037
    %v3039 = vadd.f32 %v3038, 1.0
    %v3040 = vrcp.pop %v3039
    %v3041 = vmul.f32 1.0, %v3040
    %v3042 = vmul.f32 %v3034, %v2807
    %v3043 = vmul.f32 %v3028, %v3035
    %v3044 = vadd.f32 %v3042, %v3043
    %v3045 = vtanh.pop %v3044
    %v3046 = vmul.f32 %v3041, %v3045
    %3047 = vst [vmem:[#allocation7] sm:$0xff] %v3044
    %3048 = vst [vmem:[#allocation6] sm:$0xff] %v3046
    %s3049 = scalar_lea.vmem [#allocation3], 48
    %v3050 = vld [vmem:[%s3049] sm:$0xff]
    %v3051 = vmul.f32 %v3046, %v3050
    %s3052 = scalar_lea.vmem [#allocation4], 48
    %v3053 = vld [vmem:[%s3052] sm:$0xff]
    %v3054 = vadd.f32 %v3051, %v3053
    %s3055 = scalar_lea.vmem [#allocation5], 48
    %3056 = vst [vmem:[%s3055] sm:$0xff] %v3054
    %v3057 = vld [vmem:[#allocation6] sm:$0xff]
    %v3058 = vld [vmem:[#allocation7] sm:$0xff]
    %s3059 = scalar_lea.vmem [#allocation2], 224
    %v3060 = vld [vmem:[%s3059] sm:$0xff]
    %v3061 = vld [vmem:[%s3059 + $0x8] sm:$0xff]
    %v3062 = vld [vmem:[%s3059 + $0x10] sm:$0xff]
    %v3063 = vld [vmem:[%s3059 + $0x18] sm:$0xff]
    %v3064 = vld [vmem:[#allocation13] sm:$0xff]
    %v3065 = vld [vmem:[#allocation13 + $0x8] sm:$0xff]
    %v3066 = vld [vmem:[#allocation13 + $0x10] sm:$0xff]
    %v3067 = vld [vmem:[#allocation13 + $0x18] sm:$0xff]
    %v3068 = vld [vmem:[#allocation13 + $0x20] sm:$0xff]
    %v3069 = vld [vmem:[#allocation13 + $0x28] sm:$0xff]
    %v3070 = vld [vmem:[#allocation13 + $0x30] sm:$0xff]
    %v3071 = vld [vmem:[#allocation13 + $0x38] sm:$0xff]
    %v3072 = vld [vmem:[#allocation13 + $0x40] sm:$0xff]
    %v3073 = vld [vmem:[#allocation13 + $0x48] sm:$0xff]
    %v3074 = vld [vmem:[#allocation13 + $0x50] sm:$0xff]
    %v3075 = vld [vmem:[#allocation13 + $0x58] sm:$0xff]
    %v3076 = vld [vmem:[#allocation13 + $0x60] sm:$0xff]
    %v3077 = vld [vmem:[#allocation13 + $0x68] sm:$0xff]
    %v3078 = vld [vmem:[#allocation13 + $0x70] sm:$0xff]
    %v3079 = vld [vmem:[#allocation13 + $0x78] sm:$0xff]
    %v3080 = vld [vmem:[#allocation13 + $0x80] sm:$0xff]
    %v3081 = vld [vmem:[#allocation13 + $0x88] sm:$0xff]
    %v3082 = vld [vmem:[#allocation13 + $0x90] sm:$0xff]
    %v3083 = vld [vmem:[#allocation13 + $0x98] sm:$0xff]
    %v3084 = vld [vmem:[#allocation13 + $0xa0] sm:$0xff]
    %v3085 = vld [vmem:[#allocation13 + $0xa8] sm:$0xff]
    %v3086 = vld [vmem:[#allocation13 + $0xb0] sm:$0xff]
    %v3087 = vld [vmem:[#allocation13 + $0xb8] sm:$0xff]
    %v3088 = vld [vmem:[#allocation13 + $0xc0] sm:$0xff]
    %v3089 = vld [vmem:[#allocation13 + $0xc8] sm:$0xff]
    %v3090 = vld [vmem:[#allocation13 + $0xd0] sm:$0xff]
    %v3091 = vld [vmem:[#allocation13 + $0xd8] sm:$0xff]
    %v3092 = vld [vmem:[#allocation13 + $0xe0] sm:$0xff]
    %v3093 = vld [vmem:[#allocation13 + $0xe8] sm:$0xff]
    %v3094 = vld [vmem:[#allocation13 + $0xf0] sm:$0xff]
    %v3095 = vld [vmem:[#allocation13 + $0xf8] sm:$0xff]
    %v3096 = vld [vmem:[#allocation13 + $0x100] sm:$0xff]
    %v3097 = vld [vmem:[#allocation13 + $0x108] sm:$0xff]
    %v3098 = vld [vmem:[#allocation13 + $0x110] sm:$0xff]
    %v3099 = vld [vmem:[#allocation13 + $0x118] sm:$0xff]
    %v3100 = vld [vmem:[#allocation13 + $0x120] sm:$0xff]
    %v3101 = vld [vmem:[#allocation13 + $0x128] sm:$0xff]
    %v3102 = vld [vmem:[#allocation13 + $0x130] sm:$0xff]
    %v3103 = vld [vmem:[#allocation13 + $0x138] sm:$0xff]
    %v3104 = vld [vmem:[#allocation13 + $0x140] sm:$0xff]
    %v3105 = vld [vmem:[#allocation13 + $0x148] sm:$0xff]
    %v3106 = vld [vmem:[#allocation13 + $0x150] sm:$0xff]
    %v3107 = vld [vmem:[#allocation13 + $0x158] sm:$0xff]
    %v3108 = vld [vmem:[#allocation13 + $0x160] sm:$0xff]
    %v3109 = vld [vmem:[#allocation13 + $0x168] sm:$0xff]
    %v3110 = vld [vmem:[#allocation13 + $0x170] sm:$0xff]
    %v3111 = vld [vmem:[#allocation13 + $0x178] sm:$0xff]
    %v3112 = vld [vmem:[#allocation13 + $0x180] sm:$0xff]
    %v3113 = vld [vmem:[#allocation13 + $0x188] sm:$0xff]
    %v3114 = vld [vmem:[#allocation13 + $0x190] sm:$0xff]
    %v3115 = vld [vmem:[#allocation13 + $0x198] sm:$0xff]
    %v3116 = vld [vmem:[#allocation13 + $0x1a0] sm:$0xff]
    %v3117 = vld [vmem:[#allocation13 + $0x1a8] sm:$0xff]
    %v3118 = vld [vmem:[#allocation13 + $0x1b0] sm:$0xff]
    %v3119 = vld [vmem:[#allocation13 + $0x1b8] sm:$0xff]
    %v3120 = vld [vmem:[#allocation13 + $0x1c0] sm:$0xff]
    %v3121 = vld [vmem:[#allocation13 + $0x1c8] sm:$0xff]
    %v3122 = vld [vmem:[#allocation13 + $0x1d0] sm:$0xff]
    %v3123 = vld [vmem:[#allocation13 + $0x1d8] sm:$0xff]
    %v3124 = vld [vmem:[#allocation13 + $0x1e0] sm:$0xff]
    %v3125 = vld [vmem:[#allocation13 + $0x1e8] sm:$0xff]
    %v3126 = vld [vmem:[#allocation13 + $0x1f0] sm:$0xff]
    %v3127 = vld [vmem:[#allocation13 + $0x1f8] sm:$0xff]
    %3128 = vmatprep.subr.mxu0 %v3065
    %3129 = vmatpush1.msra.mxu0 %v3064
    %3130 = vmatprep.subr.mxu0 %v3069
    %3131 = vmatpush1.msra.mxu0 %v3068
    %3132 = vmatprep.subr.mxu0 %v3073
    %3133 = vmatpush1.msra.mxu0 %v3072
    %3134 = vmatprep.subr.mxu0 %v3077
    %3135 = vmatpush1.msra.mxu0 %v3076
    %3136 = vmatprep.subr.mxu0 %v3081
    %3137 = vmatpush1.msra.mxu0 %v3080
    %3138 = vmatprep.subr.mxu0 %v3085
    %3139 = vmatpush1.msra.mxu0 %v3084
    %3140 = vmatprep.subr.mxu0 %v3089
    %3141 = vmatpush1.msra.mxu0 %v3088
    %3142 = vmatprep.subr.mxu0 %v3093
    %3143 = vmatpush1.msra.mxu0 %v3092
    %3144 = vmatprep.subr.mxu0 %v3097
    %3145 = vmatpush1.msra.mxu0 %v3096
    %3146 = vmatprep.subr.mxu0 %v3101
    %3147 = vmatpush1.msra.mxu0 %v3100
    %3148 = vmatprep.subr.mxu0 %v3105
    %3149 = vmatpush1.msra.mxu0 %v3104
    %3150 = vmatprep.subr.mxu0 %v3109
    %3151 = vmatpush1.msra.mxu0 %v3108
    %3152 = vmatprep.subr.mxu0 %v3113
    %3153 = vmatpush1.msra.mxu0 %v3112
    %3154 = vmatprep.subr.mxu0 %v3117
    %3155 = vmatpush1.msra.mxu0 %v3116
    %3156 = vmatprep.subr.mxu0 %v3121
    %3157 = vmatpush1.msra.mxu0 %v3120
    %3158 = vmatprep.subr.mxu0 %v3125
    %3159 = vmatpush1.msra.mxu0 %v3124
    %3160 = vmatprep.subr.mxu0 0.0
    %3161 = vmatpush1.msra.mxu0 0.0
    %3162 = vmatprep.subr.mxu0 0.0
    %3163 = vmatpush1.msra.mxu0 0.0
    %3164 = vmatprep.subr.mxu0 0.0
    %3165 = vmatpush1.msra.mxu0 0.0
    %3166 = vmatprep.subr.mxu0 0.0
    %3167 = vmatpush1.msra.mxu0 0.0
    %3168 = vmatprep.subr.mxu0 0.0
    %3169 = vmatpush1.msra.mxu0 0.0
    %3170 = vmatprep.subr.mxu0 0.0
    %3171 = vmatpush1.msra.mxu0 0.0
    %3172 = vmatprep.subr.mxu0 0.0
    %3173 = vmatpush1.msra.mxu0 0.0
    %3174 = vmatprep.subr.mxu0 0.0
    %3175 = vmatpush1.msra.mxu0 0.0
    %3176 = vmatprep.subr.mxu0 0.0
    %3177 = vmatpush1.msra.mxu0 0.0
    %3178 = vmatprep.subr.mxu0 0.0
    %3179 = vmatpush1.msra.mxu0 0.0
    %3180 = vmatprep.subr.mxu0 0.0
    %3181 = vmatpush1.msra.mxu0 0.0
    %3182 = vmatprep.subr.mxu0 0.0
    %3183 = vmatpush1.msra.mxu0 0.0
    %3184 = vmatprep.subr.mxu0 0.0
    %3185 = vmatpush1.msra.mxu0 0.0
    %3186 = vmatprep.subr.mxu0 0.0
    %3187 = vmatpush1.msra.mxu0 0.0
    %3188 = vmatprep.subr.mxu0 0.0
    %3189 = vmatpush1.msra.mxu0 0.0
    %3190 = vmatprep.subr.mxu0 0.0
    %3191 = vmatpush1.msra.mxu0 0.0
    %3192 = vmatprep.mubr.f32.mxu0 0.0
    %3193 = vmatmul.mubr.f32.gmra.mrb[0].mxu0 %v3057
    %v3194 = vpop.f32.mrb[0].mxu0
    %v3195 = vadd.f32 0.0, %v3194
    %v3196 = vpop.f32.mrb[0].mxu0
    %v3197 = vadd.f32 0.0, %v3196
    %3198 = vdwg.mxu0
    %3199 = vmatprep.subr.mxu0 %v3067
    %3200 = vmatpush1.msra.mxu0 %v3066
    %3201 = vmatprep.subr.mxu0 %v3071
    %3202 = vmatpush1.msra.mxu0 %v3070
    %3203 = vmatprep.subr.mxu0 %v3075
    %3204 = vmatpush1.msra.mxu0 %v3074
    %3205 = vmatprep.subr.mxu0 %v3079
    %3206 = vmatpush1.msra.mxu0 %v3078
    %3207 = vmatprep.subr.mxu0 %v3083
    %3208 = vmatpush1.msra.mxu0 %v3082
    %3209 = vmatprep.subr.mxu0 %v3087
    %3210 = vmatpush1.msra.mxu0 %v3086
    %3211 = vmatprep.subr.mxu0 %v3091
    %3212 = vmatpush1.msra.mxu0 %v3090
    %3213 = vmatprep.subr.mxu0 %v3095
    %3214 = vmatpush1.msra.mxu0 %v3094
    %3215 = vmatprep.subr.mxu0 %v3099
    %3216 = vmatpush1.msra.mxu0 %v3098
    %3217 = vmatprep.subr.mxu0 %v3103
    %3218 = vmatpush1.msra.mxu0 %v3102
    %3219 = vmatprep.subr.mxu0 %v3107
    %3220 = vmatpush1.msra.mxu0 %v3106
    %3221 = vmatprep.subr.mxu0 %v3111
    %3222 = vmatpush1.msra.mxu0 %v3110
    %3223 = vmatprep.subr.mxu0 %v3115
    %3224 = vmatpush1.msra.mxu0 %v3114
    %3225 = vmatprep.subr.mxu0 %v3119
    %3226 = vmatpush1.msra.mxu0 %v3118
    %3227 = vmatprep.subr.mxu0 %v3123
    %3228 = vmatpush1.msra.mxu0 %v3122
    %3229 = vmatprep.subr.mxu0 %v3127
    %3230 = vmatpush1.msra.mxu0 %v3126
    %3231 = vmatprep.subr.mxu0 0.0
    %3232 = vmatpush1.msra.mxu0 0.0
    %3233 = vmatprep.subr.mxu0 0.0
    %3234 = vmatpush1.msra.mxu0 0.0
    %3235 = vmatprep.subr.mxu0 0.0
    %3236 = vmatpush1.msra.mxu0 0.0
    %3237 = vmatprep.subr.mxu0 0.0
    %3238 = vmatpush1.msra.mxu0 0.0
    %3239 = vmatprep.subr.mxu0 0.0
    %3240 = vmatpush1.msra.mxu0 0.0
    %3241 = vmatprep.subr.mxu0 0.0
    %3242 = vmatpush1.msra.mxu0 0.0
    %3243 = vmatprep.subr.mxu0 0.0
    %3244 = vmatpush1.msra.mxu0 0.0
    %3245 = vmatprep.subr.mxu0 0.0
    %3246 = vmatpush1.msra.mxu0 0.0
    %3247 = vmatprep.subr.mxu0 0.0
    %3248 = vmatpush1.msra.mxu0 0.0
    %3249 = vmatprep.subr.mxu0 0.0
    %3250 = vmatpush1.msra.mxu0 0.0
    %3251 = vmatprep.subr.mxu0 0.0
    %3252 = vmatpush1.msra.mxu0 0.0
    %3253 = vmatprep.subr.mxu0 0.0
    %3254 = vmatpush1.msra.mxu0 0.0
    %3255 = vmatprep.subr.mxu0 0.0
    %3256 = vmatpush1.msra.mxu0 0.0
    %3257 = vmatprep.subr.mxu0 0.0
    %3258 = vmatpush1.msra.mxu0 0.0
    %3259 = vmatprep.subr.mxu0 0.0
    %3260 = vmatpush1.msra.mxu0 0.0
    %3261 = vmatprep.subr.mxu0 0.0
    %3262 = vmatpush1.msra.mxu0 0.0
    %3263 = vmatprep.mubr.f32.mxu0 0.0
    %3264 = vmatmul.mubr.f32.gmra.mrb[0].mxu0 %v3057
    %v3265 = vpop.f32.mrb[0].mxu0
    %v3266 = vadd.f32 0.0, %v3265
    %v3267 = vpop.f32.mrb[0].mxu0
    %v3268 = vadd.f32 0.0, %v3267
    %3269 = vdwg.mxu0
    %v3270 = vadd.f32 %v3060, %v3195
    %v3271 = vadd.f32 %v3061, %v3197
    %v3272 = vadd.f32 %v3062, %v3266
    %v3273 = vadd.f32 %v3063, %v3268
    %v3274 = vxor.u32 %v3270, 2147483648
    %v3275 = vmul.f32 %v3274, 1.442695
    %v3276 = vpow.pop %v3275
    %v3277 = vadd.f32 %v3276, 1.0
    %v3278 = vrcp.pop %v3277
    %v3279 = vmul.f32 1.0, %v3278
    %v3280 = vxor.u32 %v3271, 2147483648
    %v3281 = vmul.f32 %v3280, 1.442695
    %v3282 = vpow.pop %v3281
    %v3283 = vadd.f32 %v3282, 1.0
    %v3284 = vrcp.pop %v3283
    %v3285 = vmul.f32 1.0, %v3284
    %v3286 = vtanh.pop %v3272
    %v3287 = vxor.u32 %v3273, 2147483648
    %v3288 = vmul.f32 %v3287, 1.442695
    %v3289 = vpow.pop %v3288
    %v3290 = vadd.f32 %v3289, 1.0
    %v3291 = vrcp.pop %v3290
    %v3292 = vmul.f32 1.0, %v3291
    %v3293 = vmul.f32 %v3285, %v3058
    %v3294 = vmul.f32 %v3279, %v3286
    %v3295 = vadd.f32 %v3293, %v3294
    %v3296 = vtanh.pop %v3295
    %v3297 = vmul.f32 %v3292, %v3296
    %3298 = vst [vmem:[#allocation7] sm:$0xff] %v3295
    %3299 = vst [vmem:[#allocation6] sm:$0xff] %v3297
    %s3300 = scalar_lea.vmem [#allocation3], 56
    %v3301 = vld [vmem:[%s3300] sm:$0xff]
    %v3302 = vmul.f32 %v3297, %v3301
    %s3303 = scalar_lea.vmem [#allocation4], 56
    %v3304 = vld [vmem:[%s3303] sm:$0xff]
    %v3305 = vadd.f32 %v3302, %v3304
    %s3306 = scalar_lea.vmem [#allocation5], 56
    %3307 = vst [vmem:[%s3306] sm:$0xff] %v3305
    %v3308 = vld [vmem:[#allocation5] sm:$0x1]
    %v3309 = vld [vmem:[#allocation5 + $0x8] sm:$0x1]
    %v3310 = vld [vmem:[#allocation5 + $0x10] sm:$0x1]
    %v3311 = vld [vmem:[#allocation5 + $0x18] sm:$0x1]
    %v3312 = vld [vmem:[#allocation5 + $0x20] sm:$0x1]
    %v3313 = vld [vmem:[#allocation5 + $0x28] sm:$0x1]
    %v3314 = vld [vmem:[#allocation5 + $0x30] sm:$0x1]
    %v3315 = vld [vmem:[#allocation5 + $0x38] sm:$0x1]
    %v3324 = vrot.slane %v3309, 7
    %vm3325 = vcmask 1041409
    %v3326 = vsel %vm3325, %v3324, %v3308
    %v3327 = vrot.slane %v3310, 6
    %vm3328 = vcmask 1042434
    %v3329 = vsel %vm3328, %v3327, %v3326
    %v3330 = vrot.slane %v3311, 5
    %vm3331 = vcmask 1043459
    %v3332 = vsel %vm3331, %v3330, %v3329
    %v3333 = vrot.slane %v3312, 4
    %vm3334 = vcmask 1044484
    %v3335 = vsel %vm3334, %v3333, %v3332
    %v3336 = vrot.slane %v3313, 3
    %vm3337 = vcmask 1045509
    %v3338 = vsel %vm3337, %v3336, %v3335
    %v3339 = vrot.slane %v3314, 2
    %vm3340 = vcmask 1046534
    %v3341 = vsel %vm3340, %v3339, %v3338
    %v3342 = vrot.slane %v3315, 1
    %vm3343 = vcmask 1047559
    %v3344 = vsel %vm3343, %v3342, %v3341
    %3346 = vst [vmem:[#allocation16] sm:$0xff] %v3344
    %v3347 = vld [vmem:[#allocation5 + $0x1] sm:$0x1]
    %v3348 = vld [vmem:[#allocation5 + $0x9] sm:$0x1]
    %v3349 = vld [vmem:[#allocation5 + $0x11] sm:$0x1]
    %v3350 = vld [vmem:[#allocation5 + $0x19] sm:$0x1]
    %v3351 = vld [vmem:[#allocation5 + $0x21] sm:$0x1]
    %v3352 = vld [vmem:[#allocation5 + $0x29] sm:$0x1]
    %v3353 = vld [vmem:[#allocation5 + $0x31] sm:$0x1]
    %v3354 = vld [vmem:[#allocation5 + $0x39] sm:$0x1]
    %v3363 = vrot.slane %v3348, 7
    %v3364 = vsel %vm3325, %v3363, %v3347
    %v3365 = vrot.slane %v3349, 6
    %v3366 = vsel %vm3328, %v3365, %v3364
    %v3367 = vrot.slane %v3350, 5
    %v3368 = vsel %vm3331, %v3367, %v3366
    %v3369 = vrot.slane %v3351, 4
    %v3370 = vsel %vm3334, %v3369, %v3368
    %v3371 = vrot.slane %v3352, 3
    %v3372 = vsel %vm3337, %v3371, %v3370
    %v3373 = vrot.slane %v3353, 2
    %v3374 = vsel %vm3340, %v3373, %v3372
    %v3375 = vrot.slane %v3354, 1
    %v3376 = vsel %vm3343, %v3375, %v3374
    %s3378 = scalar_lea.vmem [#allocation16], 8
    %3379 = vst [vmem:[%s3378] sm:$0xff] %v3376
    %v3380 = vld [vmem:[#allocation5 + $0x2] sm:$0x1]
    %v3381 = vld [vmem:[#allocation5 + $0xa] sm:$0x1]
    %v3382 = vld [vmem:[#allocation5 + $0x12] sm:$0x1]
    %v3383 = vld [vmem:[#allocation5 + $0x1a] sm:$0x1]
    %v3384 = vld [vmem:[#allocation5 + $0x22] sm:$0x1]
    %v3385 = vld [vmem:[#allocation5 + $0x2a] sm:$0x1]
    %v3386 = vld [vmem:[#allocation5 + $0x32] sm:$0x1]
    %v3387 = vld [vmem:[#allocation5 + $0x3a] sm:$0x1]
    %v3396 = vrot.slane %v3381, 7
    %v3397 = vsel %vm3325, %v3396, %v3380
    %v3398 = vrot.slane %v3382, 6
    %v3399 = vsel %vm3328, %v3398, %v3397
    %v3400 = vrot.slane %v3383, 5
    %v3401 = vsel %vm3331, %v3400, %v3399
    %v3402 = vrot.slane %v3384, 4
    %v3403 = vsel %vm3334, %v3402, %v3401
    %v3404 = vrot.slane %v3385, 3
    %v3405 = vsel %vm3337, %v3404, %v3403
    %v3406 = vrot.slane %v3386, 2
    %v3407 = vsel %vm3340, %v3406, %v3405
    %v3408 = vrot.slane %v3387, 1
    %v3409 = vsel %vm3343, %v3408, %v3407
    %s3411 = scalar_lea.vmem [#allocation16], 16
    %3412 = vst [vmem:[%s3411] sm:$0xff] %v3409
    %v3413 = vld [vmem:[#allocation5 + $0x3] sm:$0x1]
    %v3414 = vld [vmem:[#allocation5 + $0xb] sm:$0x1]
    %v3415 = vld [vmem:[#allocation5 + $0x13] sm:$0x1]
    %v3416 = vld [vmem:[#allocation5 + $0x1b] sm:$0x1]
    %v3417 = vld [vmem:[#allocation5 + $0x23] sm:$0x1]
    %v3418 = vld [vmem:[#allocation5 + $0x2b] sm:$0x1]
    %v3419 = vld [vmem:[#allocation5 + $0x33] sm:$0x1]
    %v3420 = vld [vmem:[#allocation5 + $0x3b] sm:$0x1]
    %v3429 = vrot.slane %v3414, 7
    %v3430 = vsel %vm3325, %v3429, %v3413
    %v3431 = vrot.slane %v3415, 6
    %v3432 = vsel %vm3328, %v3431, %v3430
    %v3433 = vrot.slane %v3416, 5
    %v3434 = vsel %vm3331, %v3433, %v3432
    %v3435 = vrot.slane %v3417, 4
    %v3436 = vsel %vm3334, %v3435, %v3434
    %v3437 = vrot.slane %v3418, 3
    %v3438 = vsel %vm3337, %v3437, %v3436
    %v3439 = vrot.slane %v3419, 2
    %v3440 = vsel %vm3340, %v3439, %v3438
    %v3441 = vrot.slane %v3420, 1
    %v3442 = vsel %vm3343, %v3441, %v3440
    %s3444 = scalar_lea.vmem [#allocation16], 24
    %3445 = vst [vmem:[%s3444] sm:$0xff] %v3442
    %v3446 = vld [vmem:[#allocation5 + $0x4] sm:$0x1]
    %v3447 = vld [vmem:[#allocation5 + $0xc] sm:$0x1]
    %v3448 = vld [vmem:[#allocation5 + $0x14] sm:$0x1]
    %v3449 = vld [vmem:[#allocation5 + $0x1c] sm:$0x1]
    %v3450 = vld [vmem:[#allocation5 + $0x24] sm:$0x1]
    %v3451 = vld [vmem:[#allocation5 + $0x2c] sm:$0x1]
    %v3452 = vld [vmem:[#allocation5 + $0x34] sm:$0x1]
    %v3453 = vld [vmem:[#allocation5 + $0x3c] sm:$0x1]
    %v3462 = vrot.slane %v3447, 7
    %v3463 = vsel %vm3325, %v3462, %v3446
    %v3464 = vrot.slane %v3448, 6
    %v3465 = vsel %vm3328, %v3464, %v3463
    %v3466 = vrot.slane %v3449, 5
    %v3467 = vsel %vm3331, %v3466, %v3465
    %v3468 = vrot.slane %v3450, 4
    %v3469 = vsel %vm3334, %v3468, %v3467
    %v3470 = vrot.slane %v3451, 3
    %v3471 = vsel %vm3337, %v3470, %v3469
    %v3472 = vrot.slane %v3452, 2
    %v3473 = vsel %vm3340, %v3472, %v3471
    %v3474 = vrot.slane %v3453, 1
    %v3475 = vsel %vm3343, %v3474, %v3473
    %s3477 = scalar_lea.vmem [#allocation16], 32
    %3478 = vst [vmem:[%s3477] sm:$0xff] %v3475
    %v3479 = vld [vmem:[#allocation5 + $0x5] sm:$0x1]
    %v3480 = vld [vmem:[#allocation5 + $0xd] sm:$0x1]
    %v3481 = vld [vmem:[#allocation5 + $0x15] sm:$0x1]
    %v3482 = vld [vmem:[#allocation5 + $0x1d] sm:$0x1]
    %v3483 = vld [vmem:[#allocation5 + $0x25] sm:$0x1]
    %v3484 = vld [vmem:[#allocation5 + $0x2d] sm:$0x1]
    %v3485 = vld [vmem:[#allocation5 + $0x35] sm:$0x1]
    %v3486 = vld [vmem:[#allocation5 + $0x3d] sm:$0x1]
    %v3495 = vrot.slane %v3480, 7
    %v3496 = vsel %vm3325, %v3495, %v3479
    %v3497 = vrot.slane %v3481, 6
    %v3498 = vsel %vm3328, %v3497, %v3496
    %v3499 = vrot.slane %v3482, 5
    %v3500 = vsel %vm3331, %v3499, %v3498
    %v3501 = vrot.slane %v3483, 4
    %v3502 = vsel %vm3334, %v3501, %v3500
    %v3503 = vrot.slane %v3484, 3
    %v3504 = vsel %vm3337, %v3503, %v3502
    %v3505 = vrot.slane %v3485, 2
    %v3506 = vsel %vm3340, %v3505, %v3504
    %v3507 = vrot.slane %v3486, 1
    %v3508 = vsel %vm3343, %v3507, %v3506
    %s3510 = scalar_lea.vmem [#allocation16], 40
    %3511 = vst [vmem:[%s3510] sm:$0xff] %v3508
    %v3512 = vld [vmem:[#allocation5 + $0x6] sm:$0x1]
    %v3513 = vld [vmem:[#allocation5 + $0xe] sm:$0x1]
    %v3514 = vld [vmem:[#allocation5 + $0x16] sm:$0x1]
    %v3515 = vld [vmem:[#allocation5 + $0x1e] sm:$0x1]
    %v3516 = vld [vmem:[#allocation5 + $0x26] sm:$0x1]
    %v3517 = vld [vmem:[#allocation5 + $0x2e] sm:$0x1]
    %v3518 = vld [vmem:[#allocation5 + $0x36] sm:$0x1]
    %v3519 = vld [vmem:[#allocation5 + $0x3e] sm:$0x1]
    %v3528 = vrot.slane %v3513, 7
    %v3529 = vsel %vm3325, %v3528, %v3512
    %v3530 = vrot.slane %v3514, 6
    %v3531 = vsel %vm3328, %v3530, %v3529
    %v3532 = vrot.slane %v3515, 5
    %v3533 = vsel %vm3331, %v3532, %v3531
    %v3534 = vrot.slane %v3516, 4
    %v3535 = vsel %vm3334, %v3534, %v3533
    %v3536 = vrot.slane %v3517, 3
    %v3537 = vsel %vm3337, %v3536, %v3535
    %v3538 = vrot.slane %v3518, 2
    %v3539 = vsel %vm3340, %v3538, %v3537
    %v3540 = vrot.slane %v3519, 1
    %v3541 = vsel %vm3343, %v3540, %v3539
    %s3543 = scalar_lea.vmem [#allocation16], 48
    %3544 = vst [vmem:[%s3543] sm:$0xff] %v3541
    %v3545 = vld [vmem:[#allocation5 + $0x7] sm:$0x1]
    %v3546 = vld [vmem:[#allocation5 + $0xf] sm:$0x1]
    %v3547 = vld [vmem:[#allocation5 + $0x17] sm:$0x1]
    %v3548 = vld [vmem:[#allocation5 + $0x1f] sm:$0x1]
    %v3549 = vld [vmem:[#allocation5 + $0x27] sm:$0x1]
    %v3550 = vld [vmem:[#allocation5 + $0x2f] sm:$0x1]
    %v3551 = vld [vmem:[#allocation5 + $0x37] sm:$0x1]
    %v3552 = vld [vmem:[#allocation5 + $0x3f] sm:$0x1]
    %v3561 = vrot.slane %v3546, 7
    %v3562 = vsel %vm3325, %v3561, %v3545
    %v3563 = vrot.slane %v3547, 6
    %v3564 = vsel %vm3328, %v3563, %v3562
    %v3565 = vrot.slane %v3548, 5
    %v3566 = vsel %vm3331, %v3565, %v3564
    %v3567 = vrot.slane %v3549, 4
    %v3568 = vsel %vm3334, %v3567, %v3566
    %v3569 = vrot.slane %v3550, 3
    %v3570 = vsel %vm3337, %v3569, %v3568
    %v3571 = vrot.slane %v3551, 2
    %v3572 = vsel %vm3340, %v3571, %v3570
    %v3573 = vrot.slane %v3552, 1
    %v3574 = vsel %vm3343, %v3573, %v3572
    %s3576 = scalar_lea.vmem [#allocation16], 56
    %3577 = vst [vmem:[%s3576] sm:$0xff] %v3574
    %v3578 = vld [vmem:[#allocation6] sm:$0xff]
    %3579 = vst [vmem:[#allocation17] sm:$0xff] %v3578
    %v3580 = vld [vmem:[#allocation7] sm:$0xff]
    %3581 = vst [vmem:[#allocation19] sm:$0xff] %v3580
    // Predicated region
    $region54: #{tpu_custom_call.1} parent=1 // pred_check
      _
    $region55: #{tpu_custom_call.1} parent=1 // pred_check_branch
      %3583 = sbr.rel (0) target = $region57
    $region56: #{tpu_custom_call.1} parent=1 // pred_region
      %s3585 = ssub.s32 1024, 1024
      %3586 = vsyncadd [#allocation10], %s3585
      %s3587 = sshll.u32 [#allocation16], 4
      %s3588 = int_to_ptr.vmem [resolvable:$true] %s3587
      %3593 = dma.vmem_to_hbm [thread:$0]  %s3588, 1024, %s8, [#allocation10], 128, 128, 8
    $region57: #{tpu_custom_call.1} parent=1 // pred_fallthru
      _
    // Predicated region
    $region58: #{tpu_custom_call.1} parent=1 // pred_check
      _
    $region59: #{tpu_custom_call.1} parent=1 // pred_check_branch
      %3595 = sbr.rel (0) target = $region61
    $region60: #{tpu_custom_call.1} parent=1 // pred_region
      %s3597 = ssub.s32 128, 128
      %3598 = vsyncadd [#allocation18], %s3597
      %s3600 = sshll.u32 [#allocation17], 4
      %s3601 = int_to_ptr.vmem [resolvable:$true] %s3600
      %3603 = dma.vmem_to_hbm [thread:$0]  %s3601, 128, %s9, [#allocation18]
    $region61: #{tpu_custom_call.1} parent=1 // pred_fallthru
      _
    // Predicated region
    $region62: #{tpu_custom_call.1} parent=1 // pred_check
      _
    $region63: #{tpu_custom_call.1} parent=1 // pred_check_branch
      %3605 = sbr.rel (0) target = $region65
    $region64: #{tpu_custom_call.1} parent=1 // pred_region
      %s3607 = ssub.s32 128, 128
      %3608 = vsyncadd [#allocation18], %s3607
      %s3610 = sshll.u32 [#allocation19], 4
      %s3611 = int_to_ptr.vmem [resolvable:$true] %s3610
      %3613 = dma.vmem_to_hbm [thread:$0]  %s3611, 128, %s10, [#allocation18]
    $region65: #{tpu_custom_call.1} parent=1 // pred_fallthru
      _
    // Predicated region
    $region66: #{tpu_custom_call.1} parent=1 // pred_check
      _
    $region67: #{tpu_custom_call.1} parent=1 // pred_check_branch
      %3615 = sbr.rel (0) target = $region69
    $region68: #{tpu_custom_call.1} parent=1 // pred_region
      %3616 = dma.done [#allocation10], 1024
    $region69: #{tpu_custom_call.1} parent=1 // pred_fallthru
      _
    // Predicated region
    $region70: #{tpu_custom_call.1} parent=1 // pred_check
      _
    $region71: #{tpu_custom_call.1} parent=1 // pred_check_branch
      %3618 = sbr.rel (0) target = $region73
    $region72: #{tpu_custom_call.1} parent=1 // pred_region
      %3619 = dma.done [#allocation18], 128
    $region73: #{tpu_custom_call.1} parent=1 // pred_fallthru
      _
    // Predicated region
    $region74: #{tpu_custom_call.1} parent=1 // pred_check
      _
    $region75: #{tpu_custom_call.1} parent=1 // pred_check_branch
      %3621 = sbr.rel (0) target = $region77
    $region76: #{tpu_custom_call.1} parent=1 // pred_region
      %3622 = dma.done [#allocation18], 128
    $region77: #{tpu_custom_call.1} parent=1 // pred_fallthru
      _
    %3623 = vsyncpa [#allocation9], 1
    %3624 = vsyncpa [#allocation12], 1
    %3625 = vsyncpa [#allocation15], 1
    %3626 = vsyncpa [#allocation10], 1
    %3627 = vsyncpa [#allocation18], 1

</llo_original>
